<compile_context>
chip_gen: v7x
topology: tpu7x:2x2x1
jax: 0.10.0
libtpu: 0.0.40
codegen_flags: <defaults>
</compile_context>

<pallas_src>
import functools

import jax
import jax.numpy as jnp
from jax.experimental import pallas as pl
from jax.experimental.pallas import tpu as pltpu


# --------------------------------------------------------------------------
# helpers
# --------------------------------------------------------------------------
def _round_up(x, m):
    return ((x + m - 1) // m) * m


def _pad2d(x, rows, cols):
    r, c = x.shape
    return jnp.pad(x, ((0, rows - r), (0, cols - c)))


# --------------------------------------------------------------------------
# Tiled matmul + bias (+ ReLU) kernel
# --------------------------------------------------------------------------
def _matmul_bias_kernel(a_ref, w_ref, b_ref, o_ref, acc_ref, *, apply_relu):
    @pl.when(pl.program_id(2) == 0)
    def _():
        acc_ref[...] = jnp.zeros_like(acc_ref)

    acc_ref[...] += jnp.dot(a_ref[...], w_ref[...],
                            preferred_element_type=jnp.float32)

    @pl.when(pl.program_id(2) == pl.num_programs(2) - 1)
    def _():
        out = acc_ref[...] + b_ref[...]
        if apply_relu:
            out = jnp.maximum(out, 0.0)
        o_ref[...] = out.astype(o_ref.dtype)


def matmul_bias(a, w_t, b_row, *, apply_relu=False, use_bf16=True,
                tm_max=256, tn_max=512, tk_max=512):
    """(M, K) @ (K, N) + (1, N) [-> ReLU] -> (M, N) f32.

    Tiled over (M, N, K); K innermost/arbitrary with an f32 VMEM accumulator,
    M/N parallel (megacore-shardable).  Inputs zero-padded to tile multiples
    and (optionally) cast to bf16 for the MXU with f32 accumulation.
    """
    M, K = a.shape
    Kw, N = w_t.shape
    assert K == Kw and b_row.shape == (1, N)

    tm = min(tm_max, _round_up(M, 8))
    tn = min(tn_max, _round_up(N, 128))
    tk = min(tk_max, _round_up(K, 128))
    Mp, Np, Kp = _round_up(M, tm), _round_up(N, tn), _round_up(K, tk)

    cdtype = jnp.bfloat16 if use_bf16 else jnp.float32
    elt = 2 if use_bf16 else 4
    a_p = _pad2d(a, Mp, Kp).astype(cdtype)
    w_p = _pad2d(w_t, Kp, Np).astype(cdtype)
    b_p = _pad2d(b_row, 1, Np).astype(jnp.float32)

    vmem_bytes = (2 * (tm * tk + tk * tn) * elt   # double-buffered A, W tiles
                  + 2 * tn * 4                    # bias tile
                  + 2 * tm * tn * 4               # double-buffered output tile
                  + tm * tn * 4)                  # accumulator scratch
    vmem_bytes = int(vmem_bytes * 1.2) + (1 << 20)
    vmem_bytes = min(max(vmem_bytes, 8 << 20), 48 << 20)

    out = pl.pallas_call(
        functools.partial(_matmul_bias_kernel, apply_relu=apply_relu),
        out_shape=jax.ShapeDtypeStruct((Mp, Np), jnp.float32),
        grid=(Mp // tm, Np // tn, Kp // tk),
        in_specs=[
            pl.BlockSpec((tm, tk), lambda i, j, k: (i, k)),
            pl.BlockSpec((tk, tn), lambda i, j, k: (k, j)),
            pl.BlockSpec((1, tn), lambda i, j, k: (0, j)),
        ],
        out_specs=pl.BlockSpec((tm, tn), lambda i, j, k: (i, j)),
        scratch_shapes=[pltpu.VMEM((tm, tn), jnp.float32)],
        compiler_params=pltpu.CompilerParams(
            dimension_semantics=("parallel", "parallel", "arbitrary"),
            vmem_limit_bytes=vmem_bytes),
    )(a_p, w_p, b_p)
    return out[:M, :N]


# --------------------------------------------------------------------------
# Fused conv(as im2col matmul) + bias + ReLU + global average pool
# --------------------------------------------------------------------------
def _conv_pool_kernel(p_ref, w_ref, b_ref, o_ref, acc_ref, *, valid_rows):
    j = pl.program_id(0)
    tp = p_ref.shape[1]

    @pl.when(j == 0)
    def _():
        acc_ref[...] = jnp.zeros_like(acc_ref)

    w = w_ref[...]
    bias = b_ref[...]
    # Mask spatial rows beyond the true OH*OW count (zero-padded patches would
    # otherwise contribute relu(bias) to the pooled sum).
    row = jax.lax.broadcasted_iota(jnp.int32, (tp, 1), 0) + j * tp
    mask = (row < valid_rows).astype(jnp.float32)              # (tp, 1)

    for b_idx in range(p_ref.shape[0]):                        # static batch unroll
        y = jnp.dot(p_ref[b_idx], w, preferred_element_type=jnp.float32) + bias
        y = jnp.maximum(y, 0.0) * mask                         # (tp, Cf)
        acc_ref[pl.ds(b_idx, 1), :] += jnp.sum(y, axis=0, keepdims=True)

    @pl.when(j == pl.num_programs(0) - 1)
    def _():
        o_ref[...] = (acc_ref[...] * (1.0 / valid_rows)).astype(o_ref.dtype)


def conv_relu_global_pool(patches, conv_w_flat, conv_b, *, use_bf16=True,
                          tp=128):
    """patches: (B, P, C*k*k); conv_w_flat: (Cf, C*k*k).

    Returns the pooled activations, padded: (round_up(B,8), round_up(Cf,128)).
    Padded channels are exactly zero; padded batch rows are discarded later.
    """
    B, P, CKK = patches.shape
    Cf = conv_w_flat.shape[0]
    Bp = _round_up(B, 8)
    Pp = _round_up(P, tp)
    CKKp = _round_up(CKK, 128)
    Cfp = _round_up(Cf, 128)

    cdtype = jnp.bfloat16 if use_bf16 else jnp.float32
    patches_p = jnp.pad(
        patches, ((0, Bp - B), (0, Pp - P), (0, CKKp - CKK))).astype(cdtype)
    w_p = _pad2d(conv_w_flat.T, CKKp, Cfp).astype(cdtype)       # (CKKp, Cfp)
    b_p = _pad2d(conv_b.reshape(1, -1), 1, Cfp).astype(jnp.float32)

    return pl.pallas_call(
        functools.partial(_conv_pool_kernel, valid_rows=P),
        out_shape=jax.ShapeDtypeStruct((Bp, Cfp), jnp.float32),
        grid=(Pp // tp,),
        in_specs=[
            pl.BlockSpec((Bp, tp, CKKp), lambda j: (0, j, 0)),
            pl.BlockSpec((CKKp, Cfp), lambda j: (0, 0)),
            pl.BlockSpec((1, Cfp), lambda j: (0, 0)),
        ],
        out_specs=pl.BlockSpec((Bp, Cfp), lambda j: (0, 0)),
        scratch_shapes=[pltpu.VMEM((Bp, Cfp), jnp.float32)],
        compiler_params=pltpu.CompilerParams(
            dimension_semantics=("arbitrary",)),
    )(patches_p, w_p, b_p)


# --------------------------------------------------------------------------
# LSTM recurrence (input-to-hidden matmul hoisted out; TT steps per grid step)
# --------------------------------------------------------------------------
def _lstm_kernel(gx_ref, whh_ref, o_ref, h_scr, c_scr, *, hp, tt):
    @pl.when(pl.program_id(0) == 0)
    def _():
        h_scr[...] = jnp.zeros_like(h_scr)
        c_scr[...] = jnp.zeros_like(c_scr)

    whh = whh_ref[...]                                   # (Hp, 4*Hp), f32

    def step(i, carry):
        h = h_scr[...]
        c = c_scr[...]
        # Precomputed x@W_ih + b for this step, plus the recurrent term.
        g = gx_ref[i] + jnp.dot(h, whh, preferred_element_type=jnp.float32)
        gi = jax.nn.sigmoid(g[:, 0 * hp:1 * hp])         # lane-aligned slices
        gf = jax.nn.sigmoid(g[:, 1 * hp:2 * hp])
        gg = jnp.tanh(g[:, 2 * hp:3 * hp])
        go = jax.nn.sigmoid(g[:, 3 * hp:4 * hp])
        c_new = gf * c + gi * gg
        h_new = go * jnp.tanh(c_new)
        h_scr[...] = h_new
        c_scr[...] = c_new
        o_ref[i] = h_new
        return carry

    jax.lax.fori_loop(0, tt, step, 0, unroll=True)


def lstm_layer(gx, whh_t, *, hp, tt):
    """gx: (Tp, Bp, 4*hp) precomputed gate inputs (PyTorch order i,f,g,o, each
    gate zero-padded to hp lanes).  Returns hidden states (Tp, Bp, hp), f32.
    Zero initial (h, c), matching nn.LSTM called without `states`.
    """
    Tp, Bp, G4 = gx.shape
    assert G4 == 4 * hp and Tp % tt == 0 and Bp % 8 == 0
    return pl.pallas_call(
        functools.partial(_lstm_kernel, hp=hp, tt=tt),
        out_shape=jax.ShapeDtypeStruct((Tp, Bp, hp), jnp.float32),
        grid=(Tp // tt,),
        in_specs=[
            pl.BlockSpec((tt, Bp, 4 * hp), lambda s: (s, 0, 0)),
            pl.BlockSpec((hp, 4 * hp), lambda s: (0, 0)),
        ],
        out_specs=pl.BlockSpec((tt, Bp, hp), lambda s: (s, 0, 0)),
        scratch_shapes=[pltpu.VMEM((Bp, hp), jnp.float32),    # h state
                        pltpu.VMEM((Bp, hp), jnp.float32)],   # c state
        compiler_params=pltpu.CompilerParams(
            dimension_semantics=("arbitrary",)),              # time is sequential
    )(gx, whh_t)


# --------------------------------------------------------------------------
# Glue: im2col, parameter init & padding, forward pass
# --------------------------------------------------------------------------
def im2col(x, k):
    """(B, C, H, W) NCHW -> (B, OH*OW, C*k*k) patches, valid conv, stride 1."""
    # TODO(synk): gather the k*k shifted reads inside the conv kernel instead of
    # materializing the k^2-amplified patch tensor (here it stays fused in-jit).
    B, C, H, W = x.shape
    OH, OW = H - k + 1, W - k + 1
    cols = []
    for di in range(k):
        for dj in range(k):
            cols.append(x[:, :, di:di + OH, dj:dj + OW])       # (B, C, OH, OW)
    p = jnp.stack(cols, axis=2)                                # (B, C, k*k, OH, OW)
    p = p.transpose(0, 3, 4, 1, 2).reshape(B, OH * OW, C * k * k)
    return p


def init_params(key, *, in_ch, conv_ch, k, embed_size, hidden_size,
                vocab_size, num_layers):
    ks = list(jax.random.split(key, 8 + 4 * num_layers))
    u = lambda kk, shape: jax.random.uniform(kk, shape, jnp.float32, -0.1, 0.1)
    p = {
        "conv_w": u(ks[0], (conv_ch, in_ch, k, k)),
        "conv_b": u(ks[1], (conv_ch,)),
        "fc_w": u(ks[2], (embed_size, conv_ch)),        # Inception fc replacement
        "fc_b": u(ks[3], (embed_size,)),
        "emb": u(ks[4], (vocab_size, embed_size)),      # nn.Embedding
        "lin_w": u(ks[5], (vocab_size, hidden_size)),   # decoder Linear
        "lin_b": u(ks[6], (vocab_size,)),
        "lstm": [],
    }
    for layer in range(num_layers):
        in_sz = embed_size if layer == 0 else hidden_size
        kk = jax.random.split(ks[7 + layer], 4)
        p["lstm"].append({
            "w_ih": u(kk[0], (4 * hidden_size, in_sz)),
            "w_hh": u(kk[1], (4 * hidden_size, hidden_size)),
            "b_ih": u(kk[2], (4 * hidden_size,)),
            "b_hh": u(kk[3], (4 * hidden_size,)),
        })
    return p


def prepare_padded_params(p, *, embed_size, hidden_size, vocab_size, conv_ch):
    """Pad all weights once so every lane dim is a multiple of 128 and each
    LSTM gate occupies its own aligned 128-lane slot (padding lanes stay zero,
    so the math is exactly the unpadded computation)."""
    Ep = _round_up(embed_size, 128)
    Hp = _round_up(hidden_size, 128)
    Vp = _round_up(vocab_size, 128)
    Cfp = _round_up(conv_ch, 128)
    H = hidden_size

    pp = {
        "conv_w_flat": p["conv_w"].reshape(conv_ch, -1),          # (Cf, C*k*k)
        "conv_b": p["conv_b"],
        "fc_w_t": _pad2d(p["fc_w"].T, Cfp, Ep),                   # (Cfp, Ep)
        "fc_b": _pad2d(p["fc_b"].reshape(1, -1), 1, Ep),
        "lin_w_t": _pad2d(p["lin_w"].T, Hp, Vp),                  # (Hp, Vp)
        "lin_b": _pad2d(p["lin_b"].reshape(1, -1), 1, Vp),
        "emb": jnp.pad(p["emb"], ((0, 0), (0, Ep - embed_size))), # (V, Ep)
        "lstm": [],
    }
    for layer, lp in enumerate(p["lstm"]):
        in_sz = embed_size if layer == 0 else hidden_size
        Ip = Ep if layer == 0 else Hp
        wih_t = jnp.zeros((Ip, 4 * Hp), jnp.float32)
        whh_t = jnp.zeros((Hp, 4 * Hp), jnp.float32)
        bias = jnp.zeros((1, 4 * Hp), jnp.float32)
        for g in range(4):                                        # gates i,f,g,o
            wih_t = wih_t.at[:in_sz, g * Hp:g * Hp + H].set(
                lp["w_ih"][g * H:(g + 1) * H, :].T)
            whh_t = whh_t.at[:H, g * Hp:g * Hp + H].set(
                lp["w_hh"][g * H:(g + 1) * H, :].T)
            bias = bias.at[0, g * Hp:g * Hp + H].set(
                lp["b_ih"][g * H:(g + 1) * H] + lp["b_hh"][g * H:(g + 1) * H])
        pp["lstm"].append({"w_ih_t": wih_t, "w_hh_t": whh_t, "bias": bias})
    dims = dict(Ep=Ep, Hp=Hp, Vp=Vp, Cfp=Cfp)
    return pp, dims


def cnn_to_rnn_forward(p, images, captions, *, dims, k, vocab_size, tt=4):
    """images: (B, C, H, W) float32 NCHW; captions: (T, B) int32.

    Returns logits of shape (T+1, B, vocab_size), matching the PyTorch module.
    """
    Ep, Hp, Vp = dims["Ep"], dims["Hp"], dims["Vp"]
    B = images.shape[0]
    Bp = _round_up(B, 8)
    T = captions.shape[0]
    T1 = T + 1
    T1p = _round_up(T1, tt)

    # ---------------- EncoderCNN (proxy backbone) ----------------
    patches = im2col(images, k)                                   # (B, P, C*k*k)
    pooled = conv_relu_global_pool(patches, p["conv_w_flat"], p["conv_b"])
    # pooled: (Bp, Cfp).  inception.fc -> Linear(feat, embed), then ReLU;
    # Dropout(0.5) is identity in eval mode.
    features = matmul_bias(pooled, p["fc_w_t"], p["fc_b"],
                           apply_relu=True)                       # (Bp, Ep)

    # ---------------- DecoderRNN ----------------
    # TODO(synk): embedding gather kept in plain JAX (no clean tiny Pallas win).
    emb = jnp.take(p["emb"], captions, axis=0)                    # (T, B, Ep)
    emb = jnp.pad(emb, ((0, 0), (0, Bp - B), (0, 0)))             # (T, Bp, Ep)
    # Dropout(0.5) on embeddings is identity in eval mode.
    x = jnp.concatenate([features[None], emb], axis=0)            # (T1, Bp, Ep)
    x = jnp.pad(x, ((0, T1p - T1), (0, 0), (0, 0)))               # (T1p, Bp, Ep)

    for lp in p["lstm"]:
        in_dim = x.shape[-1]
        # Hoisted input-to-hidden matmul for the whole sequence (one big MXU op).
        gx = matmul_bias(x.reshape(T1p * Bp, in_dim), lp["w_ih_t"], lp["bias"])
        gx = gx.reshape(T1p, Bp, 4 * Hp)
        x = lstm_layer(gx, lp["w_hh_t"], hp=Hp, tt=tt)            # (T1p, Bp, Hp)

    logits = matmul_bias(x.reshape(T1p * Bp, Hp), p["lin_w_t"], p["lin_b"])
    logits = logits.reshape(T1p, Bp, Vp)[:T1, :B, :vocab_size]
    return logits


# --------------------------------------------------------------------------
if __name__ == "__main__":
    embed_size, hidden_size, vocab_size, num_layers = 16, 32, 50, 2
    B, C, Himg, Wimg, T = 2, 3, 16, 16, 8
    conv_ch, k = 32, 3

    key = jax.random.PRNGKey(0)
    k_param, k_img, k_cap = jax.random.split(key, 3)

    raw = init_params(k_param, in_ch=C, conv_ch=conv_ch, k=k,
                      embed_size=embed_size, hidden_size=hidden_size,
                      vocab_size=vocab_size, num_layers=num_layers)
    params, dims = prepare_padded_params(
        raw, embed_size=embed_size, hidden_size=hidden_size,
        vocab_size=vocab_size, conv_ch=conv_ch)

    images = jax.random.normal(k_img, (B, C, Himg, Wimg), jnp.float32)
    captions = jax.random.randint(k_cap, (T, B), 0, vocab_size, jnp.int32)

    forward = jax.jit(functools.partial(
        cnn_to_rnn_forward, dims=dims, k=k, vocab_size=vocab_size, tt=4))
    outputs = jax.block_until_ready(forward(params, images, captions))

    assert outputs.shape == (T + 1, B, vocab_size), outputs.shape
    assert bool(jnp.all(jnp.isfinite(outputs)))
    print("KERNEL_OK")
</pallas_src>

<mosaic_0001>
module attributes {stable_mosaic.version = 11 : i64} {
  func.func @_conv_pool_kernel(%arg0: i32, %arg1: memref<8x128x128xbf16, #tpu.memory_space<vmem>>, %arg2: memref<128x128xbf16, #tpu.memory_space<vmem>>, %arg3: memref<1x128xf32, #tpu.memory_space<vmem>>, %arg4: memref<8x128xf32, #tpu.memory_space<vmem>>, %arg5: memref<8x128xf32, #tpu.memory_space<vmem>>) attributes {dimension_semantics = [#tpu.dimension_semantics<arbitrary>], iteration_bounds = array<i64: 2>, scalar_prefetch = 0 : i64, scratch_operands = 1 : i64, tpu.core_type = #tpu.core_type<tc>, window_params = [{transform_indices = @transform_0, window_bounds = array<i64: 8, 128, 128>}, {pipeline_mode = #tpu.pipeline_mode<synchronous>, transform_indices = @transform_1, window_bounds = array<i64: 128, 128>}, {pipeline_mode = #tpu.pipeline_mode<synchronous>, transform_indices = @transform_2, window_bounds = array<i64: 1, 128>}, {pipeline_mode = #tpu.pipeline_mode<synchronous>, transform_indices = @transform_3, window_bounds = array<i64: 8, 128>}]} {
    %c0_i32 = arith.constant 0 : i32
    %0 = arith.cmpi eq, %arg0, %c0_i32 : i32
    %1 = arith.extui %0 : i1 to i32
    %c0_i32_0 = arith.constant 0 : i32
    %2 = arith.cmpi ne, %1, %c0_i32_0 : i32
    scf.if %2 {
      %cst_77 = arith.constant 0.000000e+00 : f32
      %128 = vector.broadcast %cst_77 : f32 to vector<8x128xf32>
      %c0_78 = arith.constant 0 : index
      %c0_79 = arith.constant 0 : index
      %129 = vector.load %arg5[%c0_78, %c0_79] : memref<8x128xf32, #tpu.memory_space<vmem>>, vector<8x128xf32>
      tpu.vector_store %arg5[%c0_78, %c0_79], %128 {strides = array<i32>} : memref<8x128xf32, #tpu.memory_space<vmem>>, vector<8x128xf32>,
    } else {
    }
    %c0 = arith.constant 0 : index
    %c0_1 = arith.constant 0 : index
    %3 = vector.load %arg2[%c0, %c0_1] : memref<128x128xbf16, #tpu.memory_space<vmem>>, vector<128x128xbf16>
    %c0_2 = arith.constant 0 : index
    %c0_3 = arith.constant 0 : index
    %4 = vector.load %arg3[%c0_2, %c0_3] : memref<1x128xf32, #tpu.memory_space<vmem>>, vector<1x128xf32>
    %5 = tpu.iota {dimensions = array<i32: 0>} : vector<128x1xi32>
    %c128_i32 = arith.constant 128 : i32
    %6 = arith.muli %arg0, %c128_i32 : i32
    %7 = vector.broadcast %6 : i32 to vector<128x1xi32>
    %8 = arith.addi %5, %7 : vector<128x1xi32>
    %c196_i32 = arith.constant 196 : i32
    %9 = vector.broadcast %c196_i32 : i32 to vector<128x1xi32>
    %10 = arith.cmpi slt, %8, %9 : vector<128x1xi32>
    %11 = arith.extui %10 : vector<128x1xi1> to vector<128x1xi32>
    %12 = arith.sitofp %11 : vector<128x1xi32> to vector<128x1xf32>
    %c0_4 = arith.constant 0 : index
    %c0_5 = arith.constant 0 : index
    %c0_6 = arith.constant 0 : index
    %13 = vector.load %arg1[%c0_4, %c0_5, %c0_6] : memref<8x128x128xbf16, #tpu.memory_space<vmem>>, vector<1x128x128xbf16>
    %14 = vector.shape_cast %13 : vector<1x128x128xbf16> to vector<128x128xbf16>
    %cst = arith.constant dense<0.000000e+00> : vector<128x128xf32>
    %15 = tpu.matmul %14, %3, %cst {dimension_numbers = #tpu.dot_dimension_numbers<[1], [0], [0], [1], [0, 0, 1, 1], [], []>} : vector<128x128xbf16>, vector<128x128xbf16>, vector<128x128xf32> -> vector<128x128xf32>
    %16 = vector.broadcast %4 : vector<1x128xf32> to vector<128x128xf32>
    %17 = arith.addf %15, %16 : vector<128x128xf32>
    %cst_7 = arith.constant 0.000000e+00 : f32
    %18 = vector.broadcast %cst_7 : f32 to vector<128x128xf32>
    %19 = arith.maximumf %17, %18 : vector<128x128xf32>
    %20 = vector.broadcast %12 : vector<128x1xf32> to vector<128x128xf32>
    %21 = arith.mulf %19, %20 : vector<128x128xf32>
    %c0_8 = arith.constant 0 : index
    %c0_9 = arith.constant 0 : index
    %22 = vector.load %arg5[%c0_8, %c0_9] : memref<8x128xf32, #tpu.memory_space<vmem>>, vector<1x128xf32>
    %cst_10 = arith.constant dense<0.000000e+00> : vector<128xf32>
    %23 = vector.multi_reduction <add>, %21, %cst_10 [0] : vector<128x128xf32> to vector<128xf32>
    %24 = vector.shape_cast %23 : vector<128xf32> to vector<1x128xf32>
    %25 = arith.addf %22, %24 : vector<1x128xf32>
    %c0_11 = arith.constant 0 : index
    %c0_12 = arith.constant 0 : index
    %26 = vector.load %arg5[%c0_11, %c0_12] : memref<8x128xf32, #tpu.memory_space<vmem>>, vector<1x128xf32>
    tpu.vector_store %arg5[%c0_11, %c0_12], %25 {strides = array<i32>} : memref<8x128xf32, #tpu.memory_space<vmem>>, vector<1x128xf32>,
    %c1 = arith.constant 1 : index
    %c0_13 = arith.constant 0 : index
    %c0_14 = arith.constant 0 : index
    %27 = vector.load %arg1[%c1, %c0_13, %c0_14] : memref<8x128x128xbf16, #tpu.memory_space<vmem>>, vector<1x128x128xbf16>
    %28 = vector.shape_cast %27 : vector<1x128x128xbf16> to vector<128x128xbf16>
    %cst_15 = arith.constant dense<0.000000e+00> : vector<128x128xf32>
    %29 = tpu.matmul %28, %3, %cst_15 {dimension_numbers = #tpu.dot_dimension_numbers<[1], [0], [0], [1], [0, 0, 1, 1], [], []>} : vector<128x128xbf16>, vector<128x128xbf16>, vector<128x128xf32> -> vector<128x128xf32>
    %30 = vector.broadcast %4 : vector<1x128xf32> to vector<128x128xf32>
    %31 = arith.addf %29, %30 : vector<128x128xf32>
    %cst_16 = arith.constant 0.000000e+00 : f32
    %32 = vector.broadcast %cst_16 : f32 to vector<128x128xf32>
    %33 = arith.maximumf %31, %32 : vector<128x128xf32>
    %34 = vector.broadcast %12 : vector<128x1xf32> to vector<128x128xf32>
    %35 = arith.mulf %33, %34 : vector<128x128xf32>
    %c1_17 = arith.constant 1 : index
    %c0_18 = arith.constant 0 : index
    %36 = vector.load %arg5[%c1_17, %c0_18] : memref<8x128xf32, #tpu.memory_space<vmem>>, vector<1x128xf32>
    %cst_19 = arith.constant dense<0.000000e+00> : vector<128xf32>
    %37 = vector.multi_reduction <add>, %35, %cst_19 [0] : vector<128x128xf32> to vector<128xf32>
    %38 = vector.shape_cast %37 : vector<128xf32> to vector<1x128xf32>
    %39 = arith.addf %36, %38 : vector<1x128xf32>
    %c1_20 = arith.constant 1 : index
    %c0_21 = arith.constant 0 : index
    %40 = vector.load %arg5[%c1_20, %c0_21] : memref<8x128xf32, #tpu.memory_space<vmem>>, vector<1x128xf32>
    tpu.vector_store %arg5[%c1_20, %c0_21], %39 {strides = array<i32>} : memref<8x128xf32, #tpu.memory_space<vmem>>, vector<1x128xf32>,
    %c2 = arith.constant 2 : index
    %c0_22 = arith.constant 0 : index
    %c0_23 = arith.constant 0 : index
    %41 = vector.load %arg1[%c2, %c0_22, %c0_23] : memref<8x128x128xbf16, #tpu.memory_space<vmem>>, vector<1x128x128xbf16>
    %42 = vector.shape_cast %41 : vector<1x128x128xbf16> to vector<128x128xbf16>
    %cst_24 = arith.constant dense<0.000000e+00> : vector<128x128xf32>
    %43 = tpu.matmul %42, %3, %cst_24 {dimension_numbers = #tpu.dot_dimension_numbers<[1], [0], [0], [1], [0, 0, 1, 1], [], []>} : vector<128x128xbf16>, vector<128x128xbf16>, vector<128x128xf32> -> vector<128x128xf32>
    %44 = vector.broadcast %4 : vector<1x128xf32> to vector<128x128xf32>
    %45 = arith.addf %43, %44 : vector<128x128xf32>
    %cst_25 = arith.constant 0.000000e+00 : f32
    %46 = vector.broadcast %cst_25 : f32 to vector<128x128xf32>
    %47 = arith.maximumf %45, %46 : vector<128x128xf32>
    %48 = vector.broadcast %12 : vector<128x1xf32> to vector<128x128xf32>
    %49 = arith.mulf %47, %48 : vector<128x128xf32>
    %c2_26 = arith.constant 2 : index
    %c0_27 = arith.constant 0 : index
    %50 = vector.load %arg5[%c2_26, %c0_27] : memref<8x128xf32, #tpu.memory_space<vmem>>, vector<1x128xf32>
    %cst_28 = arith.constant dense<0.000000e+00> : vector<128xf32>
    %51 = vector.multi_reduction <add>, %49, %cst_28 [0] : vector<128x128xf32> to vector<128xf32>
    %52 = vector.shape_cast %51 : vector<128xf32> to vector<1x128xf32>
    %53 = arith.addf %50, %52 : vector<1x128xf32>
    %c2_29 = arith.constant 2 : index
    %c0_30 = arith.constant 0 : index
    %54 = vector.load %arg5[%c2_29, %c0_30] : memref<8x128xf32, #tpu.memory_space<vmem>>, vector<1x128xf32>
    tpu.vector_store %arg5[%c2_29, %c0_30], %53 {strides = array<i32>} : memref<8x128xf32, #tpu.memory_space<vmem>>, vector<1x128xf32>,
    %c3 = arith.constant 3 : index
    %c0_31 = arith.constant 0 : index
    %c0_32 = arith.constant 0 : index
    %55 = vector.load %arg1[%c3, %c0_31, %c0_32] : memref<8x128x128xbf16, #tpu.memory_space<vmem>>, vector<1x128x128xbf16>
    %56 = vector.shape_cast %55 : vector<1x128x128xbf16> to vector<128x128xbf16>
    %cst_33 = arith.constant dense<0.000000e+00> : vector<128x128xf32>
    %57 = tpu.matmul %56, %3, %cst_33 {dimension_numbers = #tpu.dot_dimension_numbers<[1], [0], [0], [1], [0, 0, 1, 1], [], []>} : vector<128x128xbf16>, vector<128x128xbf16>, vector<128x128xf32> -> vector<128x128xf32>
    %58 = vector.broadcast %4 : vector<1x128xf32> to vector<128x128xf32>
    %59 = arith.addf %57, %58 : vector<128x128xf32>
    %cst_34 = arith.constant 0.000000e+00 : f32
    %60 = vector.broadcast %cst_34 : f32 to vector<128x128xf32>
    %61 = arith.maximumf %59, %60 : vector<128x128xf32>
    %62 = vector.broadcast %12 : vector<128x1xf32> to vector<128x128xf32>
    %63 = arith.mulf %61, %62 : vector<128x128xf32>
    %c3_35 = arith.constant 3 : index
    %c0_36 = arith.constant 0 : index
    %64 = vector.load %arg5[%c3_35, %c0_36] : memref<8x128xf32, #tpu.memory_space<vmem>>, vector<1x128xf32>
    %cst_37 = arith.constant dense<0.000000e+00> : vector<128xf32>
    %65 = vector.multi_reduction <add>, %63, %cst_37 [0] : vector<128x128xf32> to vector<128xf32>
    %66 = vector.shape_cast %65 : vector<128xf32> to vector<1x128xf32>
    %67 = arith.addf %64, %66 : vector<1x128xf32>
    %c3_38 = arith.constant 3 : index
    %c0_39 = arith.constant 0 : index
    %68 = vector.load %arg5[%c3_38, %c0_39] : memref<8x128xf32, #tpu.memory_space<vmem>>, vector<1x128xf32>
    tpu.vector_store %arg5[%c3_38, %c0_39], %67 {strides = array<i32>} : memref<8x128xf32, #tpu.memory_space<vmem>>, vector<1x128xf32>,
    %c4 = arith.constant 4 : index
    %c0_40 = arith.constant 0 : index
    %c0_41 = arith.constant 0 : index
    %69 = vector.load %arg1[%c4, %c0_40, %c0_41] : memref<8x128x128xbf16, #tpu.memory_space<vmem>>, vector<1x128x128xbf16>
    %70 = vector.shape_cast %69 : vector<1x128x128xbf16> to vector<128x128xbf16>
    %cst_42 = arith.constant dense<0.000000e+00> : vector<128x128xf32>
    %71 = tpu.matmul %70, %3, %cst_42 {dimension_numbers = #tpu.dot_dimension_numbers<[1], [0], [0], [1], [0, 0, 1, 1], [], []>} : vector<128x128xbf16>, vector<128x128xbf16>, vector<128x128xf32> -> vector<128x128xf32>
    %72 = vector.broadcast %4 : vector<1x128xf32> to vector<128x128xf32>
    %73 = arith.addf %71, %72 : vector<128x128xf32>
    %cst_43 = arith.constant 0.000000e+00 : f32
    %74 = vector.broadcast %cst_43 : f32 to vector<128x128xf32>
    %75 = arith.maximumf %73, %74 : vector<128x128xf32>
    %76 = vector.broadcast %12 : vector<128x1xf32> to vector<128x128xf32>
    %77 = arith.mulf %75, %76 : vector<128x128xf32>
    %c4_44 = arith.constant 4 : index
    %c0_45 = arith.constant 0 : index
    %78 = vector.load %arg5[%c4_44, %c0_45] : memref<8x128xf32, #tpu.memory_space<vmem>>, vector<1x128xf32>
    %cst_46 = arith.constant dense<0.000000e+00> : vector<128xf32>
    %79 = vector.multi_reduction <add>, %77, %cst_46 [0] : vector<128x128xf32> to vector<128xf32>
    %80 = vector.shape_cast %79 : vector<128xf32> to vector<1x128xf32>
    %81 = arith.addf %78, %80 : vector<1x128xf32>
    %c4_47 = arith.constant 4 : index
    %c0_48 = arith.constant 0 : index
    %82 = vector.load %arg5[%c4_47, %c0_48] : memref<8x128xf32, #tpu.memory_space<vmem>>, vector<1x128xf32>
    tpu.vector_store %arg5[%c4_47, %c0_48], %81 {strides = array<i32>} : memref<8x128xf32, #tpu.memory_space<vmem>>, vector<1x128xf32>,
    %c5 = arith.constant 5 : index
    %c0_49 = arith.constant 0 : index
    %c0_50 = arith.constant 0 : index
    %83 = vector.load %arg1[%c5, %c0_49, %c0_50] : memref<8x128x128xbf16, #tpu.memory_space<vmem>>, vector<1x128x128xbf16>
    %84 = vector.shape_cast %83 : vector<1x128x128xbf16> to vector<128x128xbf16>
    %cst_51 = arith.constant dense<0.000000e+00> : vector<128x128xf32>
    %85 = tpu.matmul %84, %3, %cst_51 {dimension_numbers = #tpu.dot_dimension_numbers<[1], [0], [0], [1], [0, 0, 1, 1], [], []>} : vector<128x128xbf16>, vector<128x128xbf16>, vector<128x128xf32> -> vector<128x128xf32>
    %86 = vector.broadcast %4 : vector<1x128xf32> to vector<128x128xf32>
    %87 = arith.addf %85, %86 : vector<128x128xf32>
    %cst_52 = arith.constant 0.000000e+00 : f32
    %88 = vector.broadcast %cst_52 : f32 to vector<128x128xf32>
    %89 = arith.maximumf %87, %88 : vector<128x128xf32>
    %90 = vector.broadcast %12 : vector<128x1xf32> to vector<128x128xf32>
    %91 = arith.mulf %89, %90 : vector<128x128xf32>
    %c5_53 = arith.constant 5 : index
    %c0_54 = arith.constant 0 : index
    %92 = vector.load %arg5[%c5_53, %c0_54] : memref<8x128xf32, #tpu.memory_space<vmem>>, vector<1x128xf32>
    %cst_55 = arith.constant dense<0.000000e+00> : vector<128xf32>
    %93 = vector.multi_reduction <add>, %91, %cst_55 [0] : vector<128x128xf32> to vector<128xf32>
    %94 = vector.shape_cast %93 : vector<128xf32> to vector<1x128xf32>
    %95 = arith.addf %92, %94 : vector<1x128xf32>
    %c5_56 = arith.constant 5 : index
    %c0_57 = arith.constant 0 : index
    %96 = vector.load %arg5[%c5_56, %c0_57] : memref<8x128xf32, #tpu.memory_space<vmem>>, vector<1x128xf32>
    tpu.vector_store %arg5[%c5_56, %c0_57], %95 {strides = array<i32>} : memref<8x128xf32, #tpu.memory_space<vmem>>, vector<1x128xf32>,
    %c6 = arith.constant 6 : index
    %c0_58 = arith.constant 0 : index
    %c0_59 = arith.constant 0 : index
    %97 = vector.load %arg1[%c6, %c0_58, %c0_59] : memref<8x128x128xbf16, #tpu.memory_space<vmem>>, vector<1x128x128xbf16>
    %98 = vector.shape_cast %97 : vector<1x128x128xbf16> to vector<128x128xbf16>
    %cst_60 = arith.constant dense<0.000000e+00> : vector<128x128xf32>
    %99 = tpu.matmul %98, %3, %cst_60 {dimension_numbers = #tpu.dot_dimension_numbers<[1], [0], [0], [1], [0, 0, 1, 1], [], []>} : vector<128x128xbf16>, vector<128x128xbf16>, vector<128x128xf32> -> vector<128x128xf32>
    %100 = vector.broadcast %4 : vector<1x128xf32> to vector<128x128xf32>
    %101 = arith.addf %99, %100 : vector<128x128xf32>
    %cst_61 = arith.constant 0.000000e+00 : f32
    %102 = vector.broadcast %cst_61 : f32 to vector<128x128xf32>
    %103 = arith.maximumf %101, %102 : vector<128x128xf32>
    %104 = vector.broadcast %12 : vector<128x1xf32> to vector<128x128xf32>
    %105 = arith.mulf %103, %104 : vector<128x128xf32>
    %c6_62 = arith.constant 6 : index
    %c0_63 = arith.constant 0 : index
    %106 = vector.load %arg5[%c6_62, %c0_63] : memref<8x128xf32, #tpu.memory_space<vmem>>, vector<1x128xf32>
    %cst_64 = arith.constant dense<0.000000e+00> : vector<128xf32>
    %107 = vector.multi_reduction <add>, %105, %cst_64 [0] : vector<128x128xf32> to vector<128xf32>
    %108 = vector.shape_cast %107 : vector<128xf32> to vector<1x128xf32>
    %109 = arith.addf %106, %108 : vector<1x128xf32>
    %c6_65 = arith.constant 6 : index
    %c0_66 = arith.constant 0 : index
    %110 = vector.load %arg5[%c6_65, %c0_66] : memref<8x128xf32, #tpu.memory_space<vmem>>, vector<1x128xf32>
    tpu.vector_store %arg5[%c6_65, %c0_66], %109 {strides = array<i32>} : memref<8x128xf32, #tpu.memory_space<vmem>>, vector<1x128xf32>,
    %c7 = arith.constant 7 : index
    %c0_67 = arith.constant 0 : index
    %c0_68 = arith.constant 0 : index
    %111 = vector.load %arg1[%c7, %c0_67, %c0_68] : memref<8x128x128xbf16, #tpu.memory_space<vmem>>, vector<1x128x128xbf16>
    %112 = vector.shape_cast %111 : vector<1x128x128xbf16> to vector<128x128xbf16>
    %cst_69 = arith.constant dense<0.000000e+00> : vector<128x128xf32>
    %113 = tpu.matmul %112, %3, %cst_69 {dimension_numbers = #tpu.dot_dimension_numbers<[1], [0], [0], [1], [0, 0, 1, 1], [], []>} : vector<128x128xbf16>, vector<128x128xbf16>, vector<128x128xf32> -> vector<128x128xf32>
    %114 = vector.broadcast %4 : vector<1x128xf32> to vector<128x128xf32>
    %115 = arith.addf %113, %114 : vector<128x128xf32>
    %cst_70 = arith.constant 0.000000e+00 : f32
    %116 = vector.broadcast %cst_70 : f32 to vector<128x128xf32>
    %117 = arith.maximumf %115, %116 : vector<128x128xf32>
    %118 = vector.broadcast %12 : vector<128x1xf32> to vector<128x128xf32>
    %119 = arith.mulf %117, %118 : vector<128x128xf32>
    %c7_71 = arith.constant 7 : index
    %c0_72 = arith.constant 0 : index
    %120 = vector.load %arg5[%c7_71, %c0_72] : memref<8x128xf32, #tpu.memory_space<vmem>>, vector<1x128xf32>
    %cst_73 = arith.constant dense<0.000000e+00> : vector<128xf32>
    %121 = vector.multi_reduction <add>, %119, %cst_73 [0] : vector<128x128xf32> to vector<128xf32>
    %122 = vector.shape_cast %121 : vector<128xf32> to vector<1x128xf32>
    %123 = arith.addf %120, %122 : vector<1x128xf32>
    %c7_74 = arith.constant 7 : index
    %c0_75 = arith.constant 0 : index
    %124 = vector.load %arg5[%c7_74, %c0_75] : memref<8x128xf32, #tpu.memory_space<vmem>>, vector<1x128xf32>
    tpu.vector_store %arg5[%c7_74, %c0_75], %123 {strides = array<i32>} : memref<8x128xf32, #tpu.memory_space<vmem>>, vector<1x128xf32>,
    %c1_i32 = arith.constant 1 : i32
    %125 = arith.cmpi eq, %arg0, %c1_i32 : i32
    %126 = arith.extui %125 : i1 to i32
    %c0_i32_76 = arith.constant 0 : i32
    %127 = arith.cmpi ne, %126, %c0_i32_76 : i32
    scf.if %127 {
      %c0_77 = arith.constant 0 : index
      %c0_78 = arith.constant 0 : index
      %128 = vector.load %arg5[%c0_77, %c0_78] : memref<8x128xf32, #tpu.memory_space<vmem>>, vector<8x128xf32>
      %cst_79 = arith.constant 0.00510204071 : f32
      %129 = vector.broadcast %cst_79 : f32 to vector<8x128xf32>
      %130 = arith.mulf %128, %129 : vector<8x128xf32>
      %c0_80 = arith.constant 0 : index
      %c0_81 = arith.constant 0 : index
      %131 = vector.load %arg4[%c0_80, %c0_81] : memref<8x128xf32, #tpu.memory_space<vmem>>, vector<8x128xf32>
      tpu.vector_store %arg4[%c0_80, %c0_81], %130 {strides = array<i32>} : memref<8x128xf32, #tpu.memory_space<vmem>>, vector<8x128xf32>,
    } else {
    }
    return
  }
  func.func @transform_0(%arg0: i32) -> (i32, i32, i32) {
    %c0_i32 = arith.constant 0 : i32
    %c0_i32_0 = arith.constant 0 : i32
    %c0_i32_1 = arith.constant 0 : i32
    return %c0_i32, %arg0, %c0_i32_0 : i32, i32, i32
  }
  func.func @transform_1(%arg0: i32) -> (i32, i32) {
    %c0_i32 = arith.constant 0 : i32
    %c0_i32_0 = arith.constant 0 : i32
    %c0_i32_1 = arith.constant 0 : i32
    return %c0_i32, %c0_i32_0 : i32, i32
  }
  func.func @transform_2(%arg0: i32) -> (i32, i32) {
    %c0_i32 = arith.constant 0 : i32
    %c0_i32_0 = arith.constant 0 : i32
    %c0_i32_1 = arith.constant 0 : i32
    return %c0_i32, %c0_i32_0 : i32, i32
  }
  func.func @transform_3(%arg0: i32) -> (i32, i32) {
    %c0_i32 = arith.constant 0 : i32
    %c0_i32_0 = arith.constant 0 : i32
    %c0_i32_1 = arith.constant 0 : i32
    return %c0_i32, %c0_i32_0 : i32, i32
  }
}

module attributes {stable_mosaic.version = 11 : i64} {
  func.func @_matmul_bias_kernel(%arg0: i32, %arg1: i32, %arg2: i32, %arg3: memref<8x128xbf16, #tpu.memory_space<vmem>>, %arg4: memref<128x128xbf16, #tpu.memory_space<vmem>>, %arg5: memref<1x128xf32, #tpu.memory_space<vmem>>, %arg6: memref<8x128xf32, #tpu.memory_space<vmem>>, %arg7: memref<8x128xf32, #tpu.memory_space<vmem>>) attributes {dimension_semantics = [#tpu.dimension_semantics<parallel>, #tpu.dimension_semantics<parallel>, #tpu.dimension_semantics<arbitrary>], iteration_bounds = array<i64: 1, 1, 1>, scalar_prefetch = 0 : i64, scratch_operands = 1 : i64, tpu.core_type = #tpu.core_type<tc>, window_params = [{transform_indices = @transform_0, window_bounds = array<i64: 8, 128>}, {transform_indices = @transform_1, window_bounds = array<i64: 128, 128>}, {transform_indices = @transform_2, window_bounds = array<i64: 1, 128>}, {transform_indices = @transform_3, window_bounds = array<i64: 8, 128>}]} {
    %c0_i32 = arith.constant 0 : i32
    %0 = arith.cmpi eq, %arg2, %c0_i32 : i32
    %1 = arith.extui %0 : i1 to i32
    %c0_i32_0 = arith.constant 0 : i32
    %2 = arith.cmpi ne, %1, %c0_i32_0 : i32
    scf.if %2 {
      %cst_10 = arith.constant 0.000000e+00 : f32
      %12 = vector.broadcast %cst_10 : f32 to vector<8x128xf32>
      %c0_11 = arith.constant 0 : index
      %c0_12 = arith.constant 0 : index
      %13 = vector.load %arg7[%c0_11, %c0_12] : memref<8x128xf32, #tpu.memory_space<vmem>>, vector<8x128xf32>
      tpu.vector_store %arg7[%c0_11, %c0_12], %12 {strides = array<i32>} : memref<8x128xf32, #tpu.memory_space<vmem>>, vector<8x128xf32>,
    } else {
    }
    %c0 = arith.constant 0 : index
    %c0_1 = arith.constant 0 : index
    %3 = vector.load %arg7[%c0, %c0_1] : memref<8x128xf32, #tpu.memory_space<vmem>>, vector<8x128xf32>
    %c0_2 = arith.constant 0 : index
    %c0_3 = arith.constant 0 : index
    %4 = vector.load %arg3[%c0_2, %c0_3] : memref<8x128xbf16, #tpu.memory_space<vmem>>, vector<8x128xbf16>
    %c0_4 = arith.constant 0 : index
    %c0_5 = arith.constant 0 : index
    %5 = vector.load %arg4[%c0_4, %c0_5] : memref<128x128xbf16, #tpu.memory_space<vmem>>, vector<128x128xbf16>
    %cst = arith.constant dense<0.000000e+00> : vector<8x128xf32>
    %6 = tpu.matmul %4, %5, %cst {dimension_numbers = #tpu.dot_dimension_numbers<[1], [0], [0], [1], [0, 0, 1, 1], [], []>} : vector<8x128xbf16>, vector<128x128xbf16>, vector<8x128xf32> -> vector<8x128xf32>
    %7 = arith.addf %3, %6 : vector<8x128xf32>
    %c0_6 = arith.constant 0 : index
    %c0_7 = arith.constant 0 : index
    %8 = vector.load %arg7[%c0_6, %c0_7] : memref<8x128xf32, #tpu.memory_space<vmem>>, vector<8x128xf32>
    tpu.vector_store %arg7[%c0_6, %c0_7], %7 {strides = array<i32>} : memref<8x128xf32, #tpu.memory_space<vmem>>, vector<8x128xf32>,
    %c0_i32_8 = arith.constant 0 : i32
    %9 = arith.cmpi eq, %arg2, %c0_i32_8 : i32
    %10 = arith.extui %9 : i1 to i32
    %c0_i32_9 = arith.constant 0 : i32
    %11 = arith.cmpi ne, %10, %c0_i32_9 : i32
    scf.if %11 {
      %c0_10 = arith.constant 0 : index
      %c0_11 = arith.constant 0 : index
      %12 = vector.load %arg7[%c0_10, %c0_11] : memref<8x128xf32, #tpu.memory_space<vmem>>, vector<8x128xf32>
      %c0_12 = arith.constant 0 : index
      %c0_13 = arith.constant 0 : index
      %13 = vector.load %arg5[%c0_12, %c0_13] : memref<1x128xf32, #tpu.memory_space<vmem>>, vector<1x128xf32>
      %14 = vector.broadcast %13 : vector<1x128xf32> to vector<8x128xf32>
      %15 = arith.addf %12, %14 : vector<8x128xf32>
      %cst_14 = arith.constant 0.000000e+00 : f32
      %16 = vector.broadcast %cst_14 : f32 to vector<8x128xf32>
      %17 = arith.maximumf %15, %16 : vector<8x128xf32>
      %c0_15 = arith.constant 0 : index
      %c0_16 = arith.constant 0 : index
      %18 = vector.load %arg6[%c0_15, %c0_16] : memref<8x128xf32, #tpu.memory_space<vmem>>, vector<8x128xf32>
      tpu.vector_store %arg6[%c0_15, %c0_16], %17 {strides = array<i32>} : memref<8x128xf32, #tpu.memory_space<vmem>>, vector<8x128xf32>,
    } else {
    }
    return
  }
  func.func @transform_0(%arg0: i32, %arg1: i32, %arg2: i32) -> (i32, i32) {
    %c0_i32 = arith.constant 0 : i32
    return %arg0, %arg2 : i32, i32
  }
  func.func @transform_1(%arg0: i32, %arg1: i32, %arg2: i32) -> (i32, i32) {
    %c0_i32 = arith.constant 0 : i32
    return %arg2, %arg1 : i32, i32
  }
  func.func @transform_2(%arg0: i32, %arg1: i32, %arg2: i32) -> (i32, i32) {
    %c0_i32 = arith.constant 0 : i32
    %c0_i32_0 = arith.constant 0 : i32
    return %c0_i32, %arg1 : i32, i32
  }
  func.func @transform_3(%arg0: i32, %arg1: i32, %arg2: i32) -> (i32, i32) {
    %c0_i32 = arith.constant 0 : i32
    return %arg0, %arg1 : i32, i32
  }
}

module attributes {stable_mosaic.version = 11 : i64} {
  func.func @_matmul_bias_kernel(%arg0: i32, %arg1: i32, %arg2: i32, %arg3: memref<96x128xbf16, #tpu.memory_space<vmem>>, %arg4: memref<128x512xbf16, #tpu.memory_space<vmem>>, %arg5: memref<1x512xf32, #tpu.memory_space<vmem>>, %arg6: memref<96x512xf32, #tpu.memory_space<vmem>>, %arg7: memref<96x512xf32, #tpu.memory_space<vmem>>) attributes {dimension_semantics = [#tpu.dimension_semantics<parallel>, #tpu.dimension_semantics<parallel>, #tpu.dimension_semantics<arbitrary>], iteration_bounds = array<i64: 1, 1, 1>, scalar_prefetch = 0 : i64, scratch_operands = 1 : i64, tpu.core_type = #tpu.core_type<tc>, window_params = [{transform_indices = @transform_0, window_bounds = array<i64: 96, 128>}, {transform_indices = @transform_1, window_bounds = array<i64: 128, 512>}, {transform_indices = @transform_2, window_bounds = array<i64: 1, 512>}, {transform_indices = @transform_3, window_bounds = array<i64: 96, 512>}]} {
    %c0_i32 = arith.constant 0 : i32
    %0 = arith.cmpi eq, %arg2, %c0_i32 : i32
    %1 = arith.extui %0 : i1 to i32
    %c0_i32_0 = arith.constant 0 : i32
    %2 = arith.cmpi ne, %1, %c0_i32_0 : i32
    scf.if %2 {
      %cst_10 = arith.constant 0.000000e+00 : f32
      %12 = vector.broadcast %cst_10 : f32 to vector<96x512xf32>
      %c0_11 = arith.constant 0 : index
      %c0_12 = arith.constant 0 : index
      %13 = vector.load %arg7[%c0_11, %c0_12] : memref<96x512xf32, #tpu.memory_space<vmem>>, vector<96x512xf32>
      tpu.vector_store %arg7[%c0_11, %c0_12], %12 {strides = array<i32>} : memref<96x512xf32, #tpu.memory_space<vmem>>, vector<96x512xf32>,
    } else {
    }
    %c0 = arith.constant 0 : index
    %c0_1 = arith.constant 0 : index
    %3 = vector.load %arg7[%c0, %c0_1] : memref<96x512xf32, #tpu.memory_space<vmem>>, vector<96x512xf32>
    %c0_2 = arith.constant 0 : index
    %c0_3 = arith.constant 0 : index
    %4 = vector.load %arg3[%c0_2, %c0_3] : memref<96x128xbf16, #tpu.memory_space<vmem>>, vector<96x128xbf16>
    %c0_4 = arith.constant 0 : index
    %c0_5 = arith.constant 0 : index
    %5 = vector.load %arg4[%c0_4, %c0_5] : memref<128x512xbf16, #tpu.memory_space<vmem>>, vector<128x512xbf16>
    %cst = arith.constant dense<0.000000e+00> : vector<96x512xf32>
    %6 = tpu.matmul %4, %5, %cst {dimension_numbers = #tpu.dot_dimension_numbers<[1], [0], [0], [1], [0, 0, 1, 1], [], []>} : vector<96x128xbf16>, vector<128x512xbf16>, vector<96x512xf32> -> vector<96x512xf32>
    %7 = arith.addf %3, %6 : vector<96x512xf32>
    %c0_6 = arith.constant 0 : index
    %c0_7 = arith.constant 0 : index
    %8 = vector.load %arg7[%c0_6, %c0_7] : memref<96x512xf32, #tpu.memory_space<vmem>>, vector<96x512xf32>
    tpu.vector_store %arg7[%c0_6, %c0_7], %7 {strides = array<i32>} : memref<96x512xf32, #tpu.memory_space<vmem>>, vector<96x512xf32>,
    %c0_i32_8 = arith.constant 0 : i32
    %9 = arith.cmpi eq, %arg2, %c0_i32_8 : i32
    %10 = arith.extui %9 : i1 to i32
    %c0_i32_9 = arith.constant 0 : i32
    %11 = arith.cmpi ne, %10, %c0_i32_9 : i32
    scf.if %11 {
      %c0_10 = arith.constant 0 : index
      %c0_11 = arith.constant 0 : index
      %12 = vector.load %arg7[%c0_10, %c0_11] : memref<96x512xf32, #tpu.memory_space<vmem>>, vector<96x512xf32>
      %c0_12 = arith.constant 0 : index
      %c0_13 = arith.constant 0 : index
      %13 = vector.load %arg5[%c0_12, %c0_13] : memref<1x512xf32, #tpu.memory_space<vmem>>, vector<1x512xf32>
      %14 = vector.broadcast %13 : vector<1x512xf32> to vector<96x512xf32>
      %15 = arith.addf %12, %14 : vector<96x512xf32>
      %c0_14 = arith.constant 0 : index
      %c0_15 = arith.constant 0 : index
      %16 = vector.load %arg6[%c0_14, %c0_15] : memref<96x512xf32, #tpu.memory_space<vmem>>, vector<96x512xf32>
      tpu.vector_store %arg6[%c0_14, %c0_15], %15 {strides = array<i32>} : memref<96x512xf32, #tpu.memory_space<vmem>>, vector<96x512xf32>,
    } else {
    }
    return
  }
  func.func @transform_0(%arg0: i32, %arg1: i32, %arg2: i32) -> (i32, i32) {
    %c0_i32 = arith.constant 0 : i32
    return %arg0, %arg2 : i32, i32
  }
  func.func @transform_1(%arg0: i32, %arg1: i32, %arg2: i32) -> (i32, i32) {
    %c0_i32 = arith.constant 0 : i32
    return %arg2, %arg1 : i32, i32
  }
  func.func @transform_2(%arg0: i32, %arg1: i32, %arg2: i32) -> (i32, i32) {
    %c0_i32 = arith.constant 0 : i32
    %c0_i32_0 = arith.constant 0 : i32
    return %c0_i32, %arg1 : i32, i32
  }
  func.func @transform_3(%arg0: i32, %arg1: i32, %arg2: i32) -> (i32, i32) {
    %c0_i32 = arith.constant 0 : i32
    return %arg0, %arg1 : i32, i32
  }
}

module attributes {stable_mosaic.version = 11 : i64} {
  func.func @_lstm_kernel(%arg0: i32, %arg1: memref<4x8x512xf32, #tpu.memory_space<vmem>>, %arg2: memref<128x512xf32, #tpu.memory_space<vmem>>, %arg3: memref<4x8x128xf32, #tpu.memory_space<vmem>>, %arg4: memref<8x128xf32, #tpu.memory_space<vmem>>, %arg5: memref<8x128xf32, #tpu.memory_space<vmem>>) attributes {dimension_semantics = [#tpu.dimension_semantics<arbitrary>], iteration_bounds = array<i64: 3>, scalar_prefetch = 0 : i64, scratch_operands = 2 : i64, tpu.core_type = #tpu.core_type<tc>, window_params = [{transform_indices = @transform_0, window_bounds = array<i64: 4, 8, 512>}, {pipeline_mode = #tpu.pipeline_mode<synchronous>, transform_indices = @transform_1, window_bounds = array<i64: 128, 512>}, {transform_indices = @transform_2, window_bounds = array<i64: 4, 8, 128>}]} {
    %c0_i32 = arith.constant 0 : i32
    %0 = arith.cmpi eq, %arg0, %c0_i32 : i32
    %1 = arith.extui %0 : i1 to i32
    %c0_i32_0 = arith.constant 0 : i32
    %2 = arith.cmpi ne, %1, %c0_i32_0 : i32
    scf.if %2 {
      %cst_66 = arith.constant 0.000000e+00 : f32
      %156 = vector.broadcast %cst_66 : f32 to vector<8x128xf32>
      %c0_67 = arith.constant 0 : index
      %c0_68 = arith.constant 0 : index
      %157 = vector.load %arg4[%c0_67, %c0_68] : memref<8x128xf32, #tpu.memory_space<vmem>>, vector<8x128xf32>
      tpu.vector_store %arg4[%c0_67, %c0_68], %156 {strides = array<i32>} : memref<8x128xf32, #tpu.memory_space<vmem>>, vector<8x128xf32>,
      %cst_69 = arith.constant 0.000000e+00 : f32
      %158 = vector.broadcast %cst_69 : f32 to vector<8x128xf32>
      %c0_70 = arith.constant 0 : index
      %c0_71 = arith.constant 0 : index
      %159 = vector.load %arg5[%c0_70, %c0_71] : memref<8x128xf32, #tpu.memory_space<vmem>>, vector<8x128xf32>
      tpu.vector_store %arg5[%c0_70, %c0_71], %158 {strides = array<i32>} : memref<8x128xf32, #tpu.memory_space<vmem>>, vector<8x128xf32>,
    } else {
    }
    %c0 = arith.constant 0 : index
    %c0_1 = arith.constant 0 : index
    %3 = vector.load %arg2[%c0, %c0_1] : memref<128x512xf32, #tpu.memory_space<vmem>>, vector<128x512xf32>
    %c0_i32_2 = arith.constant 0 : i32
    %c0_3 = arith.constant 0 : index
    %c0_4 = arith.constant 0 : index
    %4 = vector.load %arg4[%c0_3, %c0_4] : memref<8x128xf32, #tpu.memory_space<vmem>>, vector<8x128xf32>
    %c0_5 = arith.constant 0 : index
    %c0_6 = arith.constant 0 : index
    %5 = vector.load %arg5[%c0_5, %c0_6] : memref<8x128xf32, #tpu.memory_space<vmem>>, vector<8x128xf32>
    %6 = arith.index_cast %c0_i32_2 : i32 to index
    %c0_7 = arith.constant 0 : index
    %c0_8 = arith.constant 0 : index
    %7 = vector.load %arg1[%6, %c0_7, %c0_8] : memref<4x8x512xf32, #tpu.memory_space<vmem>>, vector<1x8x512xf32>
    %8 = vector.shape_cast %7 : vector<1x8x512xf32> to vector<8x512xf32>
    %cst = arith.constant dense<0.000000e+00> : vector<8x512xf32>
    %9 = tpu.matmul %4, %3, %cst {dimension_numbers = #tpu.dot_dimension_numbers<[1], [0], [0], [1], [0, 0, 1, 1], [], []>} : vector<8x128xf32>, vector<128x512xf32>, vector<8x512xf32> -> vector<8x512xf32>
    %10 = arith.addf %8, %9 : vector<8x512xf32>
    %11 = vector.extract_strided_slice %10 {offsets = [0, 0], sizes = [8, 128], strides = [1, 1]} : vector<8x512xf32> to vector<8x128xf32>
    %12 = arith.negf %11 : vector<8x128xf32>
    %13 = math.exp %12 : vector<8x128xf32>
    %cst_9 = arith.constant 1.000000e+00 : f32
    %14 = vector.broadcast %cst_9 : f32 to vector<8x128xf32>
    %15 = arith.addf %14, %13 : vector<8x128xf32>
    %16 = arith.divf %14, %15 : vector<8x128xf32>
    %17 = vector.extract_strided_slice %10 {offsets = [0, 128], sizes = [8, 128], strides = [1, 1]} : vector<8x512xf32> to vector<8x128xf32>
    %18 = arith.negf %17 : vector<8x128xf32>
    %19 = math.exp %18 : vector<8x128xf32>
    %cst_10 = arith.constant 1.000000e+00 : f32
    %20 = vector.broadcast %cst_10 : f32 to vector<8x128xf32>
    %21 = arith.addf %20, %19 : vector<8x128xf32>
    %22 = arith.divf %20, %21 : vector<8x128xf32>
    %23 = vector.extract_strided_slice %10 {offsets = [0, 256], sizes = [8, 128], strides = [1, 1]} : vector<8x512xf32> to vector<8x128xf32>
    %24 = math.tanh %23 : vector<8x128xf32>
    %25 = vector.extract_strided_slice %10 {offsets = [0, 384], sizes = [8, 128], strides = [1, 1]} : vector<8x512xf32> to vector<8x128xf32>
    %26 = arith.negf %25 : vector<8x128xf32>
    %27 = math.exp %26 : vector<8x128xf32>
    %cst_11 = arith.constant 1.000000e+00 : f32
    %28 = vector.broadcast %cst_11 : f32 to vector<8x128xf32>
    %29 = arith.addf %28, %27 : vector<8x128xf32>
    %30 = arith.divf %28, %29 : vector<8x128xf32>
    %31 = arith.mulf %22, %5 : vector<8x128xf32>
    %32 = arith.mulf %16, %24 : vector<8x128xf32>
    %33 = arith.addf %31, %32 : vector<8x128xf32>
    %34 = math.tanh %33 : vector<8x128xf32>
    %35 = arith.mulf %30, %34 : vector<8x128xf32>
    %c0_12 = arith.constant 0 : index
    %c0_13 = arith.constant 0 : index
    %36 = vector.load %arg4[%c0_12, %c0_13] : memref<8x128xf32, #tpu.memory_space<vmem>>, vector<8x128xf32>
    tpu.vector_store %arg4[%c0_12, %c0_13], %35 {strides = array<i32>} : memref<8x128xf32, #tpu.memory_space<vmem>>, vector<8x128xf32>,
    %c0_14 = arith.constant 0 : index
    %c0_15 = arith.constant 0 : index
    %37 = vector.load %arg5[%c0_14, %c0_15] : memref<8x128xf32, #tpu.memory_space<vmem>>, vector<8x128xf32>
    tpu.vector_store %arg5[%c0_14, %c0_15], %33 {strides = array<i32>} : memref<8x128xf32, #tpu.memory_space<vmem>>, vector<8x128xf32>,
    %38 = arith.index_cast %c0_i32_2 : i32 to index
    %c0_16 = arith.constant 0 : index
    %c0_17 = arith.constant 0 : index
    %39 = vector.load %arg3[%38, %c0_16, %c0_17] : memref<4x8x128xf32, #tpu.memory_space<vmem>>, vector<1x8x128xf32>
    %40 = vector.shape_cast %39 : vector<1x8x128xf32> to vector<8x128xf32>
    %41 = vector.shape_cast %35 : vector<8x128xf32> to vector<1x8x128xf32>
    tpu.vector_store %arg3[%38, %c0_16, %c0_17], %41 {strides = array<i32>} : memref<4x8x128xf32, #tpu.memory_space<vmem>>, vector<1x8x128xf32>,
    %c1_i32 = arith.constant 1 : i32
    %c0_18 = arith.constant 0 : index
    %c0_19 = arith.constant 0 : index
    %42 = vector.load %arg4[%c0_18, %c0_19] : memref<8x128xf32, #tpu.memory_space<vmem>>, vector<8x128xf32>
    %c0_20 = arith.constant 0 : index
    %c0_21 = arith.constant 0 : index
    %43 = vector.load %arg5[%c0_20, %c0_21] : memref<8x128xf32, #tpu.memory_space<vmem>>, vector<8x128xf32>
    %44 = arith.index_cast %c1_i32 : i32 to index
    %c0_22 = arith.constant 0 : index
    %c0_23 = arith.constant 0 : index
    %45 = vector.load %arg1[%44, %c0_22, %c0_23] : memref<4x8x512xf32, #tpu.memory_space<vmem>>, vector<1x8x512xf32>
    %46 = vector.shape_cast %45 : vector<1x8x512xf32> to vector<8x512xf32>
    %cst_24 = arith.constant dense<0.000000e+00> : vector<8x512xf32>
    %47 = tpu.matmul %42, %3, %cst_24 {dimension_numbers = #tpu.dot_dimension_numbers<[1], [0], [0], [1], [0, 0, 1, 1], [], []>} : vector<8x128xf32>, vector<128x512xf32>, vector<8x512xf32> -> vector<8x512xf32>
    %48 = arith.addf %46, %47 : vector<8x512xf32>
    %49 = vector.extract_strided_slice %48 {offsets = [0, 0], sizes = [8, 128], strides = [1, 1]} : vector<8x512xf32> to vector<8x128xf32>
    %50 = arith.negf %49 : vector<8x128xf32>
    %51 = math.exp %50 : vector<8x128xf32>
    %cst_25 = arith.constant 1.000000e+00 : f32
    %52 = vector.broadcast %cst_25 : f32 to vector<8x128xf32>
    %53 = arith.addf %52, %51 : vector<8x128xf32>
    %54 = arith.divf %52, %53 : vector<8x128xf32>
    %55 = vector.extract_strided_slice %48 {offsets = [0, 128], sizes = [8, 128], strides = [1, 1]} : vector<8x512xf32> to vector<8x128xf32>
    %56 = arith.negf %55 : vector<8x128xf32>
    %57 = math.exp %56 : vector<8x128xf32>
    %cst_26 = arith.constant 1.000000e+00 : f32
    %58 = vector.broadcast %cst_26 : f32 to vector<8x128xf32>
    %59 = arith.addf %58, %57 : vector<8x128xf32>
    %60 = arith.divf %58, %59 : vector<8x128xf32>
    %61 = vector.extract_strided_slice %48 {offsets = [0, 256], sizes = [8, 128], strides = [1, 1]} : vector<8x512xf32> to vector<8x128xf32>
    %62 = math.tanh %61 : vector<8x128xf32>
    %63 = vector.extract_strided_slice %48 {offsets = [0, 384], sizes = [8, 128], strides = [1, 1]} : vector<8x512xf32> to vector<8x128xf32>
    %64 = arith.negf %63 : vector<8x128xf32>
    %65 = math.exp %64 : vector<8x128xf32>
    %cst_27 = arith.constant 1.000000e+00 : f32
    %66 = vector.broadcast %cst_27 : f32 to vector<8x128xf32>
    %67 = arith.addf %66, %65 : vector<8x128xf32>
    %68 = arith.divf %66, %67 : vector<8x128xf32>
    %69 = arith.mulf %60, %43 : vector<8x128xf32>
    %70 = arith.mulf %54, %62 : vector<8x128xf32>
    %71 = arith.addf %69, %70 : vector<8x128xf32>
    %72 = math.tanh %71 : vector<8x128xf32>
    %73 = arith.mulf %68, %72 : vector<8x128xf32>
    %c0_28 = arith.constant 0 : index
    %c0_29 = arith.constant 0 : index
    %74 = vector.load %arg4[%c0_28, %c0_29] : memref<8x128xf32, #tpu.memory_space<vmem>>, vector<8x128xf32>
    tpu.vector_store %arg4[%c0_28, %c0_29], %73 {strides = array<i32>} : memref<8x128xf32, #tpu.memory_space<vmem>>, vector<8x128xf32>,
    %c0_30 = arith.constant 0 : index
    %c0_31 = arith.constant 0 : index
    %75 = vector.load %arg5[%c0_30, %c0_31] : memref<8x128xf32, #tpu.memory_space<vmem>>, vector<8x128xf32>
    tpu.vector_store %arg5[%c0_30, %c0_31], %71 {strides = array<i32>} : memref<8x128xf32, #tpu.memory_space<vmem>>, vector<8x128xf32>,
    %76 = arith.index_cast %c1_i32 : i32 to index
    %c0_32 = arith.constant 0 : index
    %c0_33 = arith.constant 0 : index
    %77 = vector.load %arg3[%76, %c0_32, %c0_33] : memref<4x8x128xf32, #tpu.memory_space<vmem>>, vector<1x8x128xf32>
    %78 = vector.shape_cast %77 : vector<1x8x128xf32> to vector<8x128xf32>
    %79 = vector.shape_cast %73 : vector<8x128xf32> to vector<1x8x128xf32>
    tpu.vector_store %arg3[%76, %c0_32, %c0_33], %79 {strides = array<i32>} : memref<4x8x128xf32, #tpu.memory_space<vmem>>, vector<1x8x128xf32>,
    %c2_i32 = arith.constant 2 : i32
    %c0_34 = arith.constant 0 : index
    %c0_35 = arith.constant 0 : index
    %80 = vector.load %arg4[%c0_34, %c0_35] : memref<8x128xf32, #tpu.memory_space<vmem>>, vector<8x128xf32>
    %c0_36 = arith.constant 0 : index
    %c0_37 = arith.constant 0 : index
    %81 = vector.load %arg5[%c0_36, %c0_37] : memref<8x128xf32, #tpu.memory_space<vmem>>, vector<8x128xf32>
    %82 = arith.index_cast %c2_i32 : i32 to index
    %c0_38 = arith.constant 0 : index
    %c0_39 = arith.constant 0 : index
    %83 = vector.load %arg1[%82, %c0_38, %c0_39] : memref<4x8x512xf32, #tpu.memory_space<vmem>>, vector<1x8x512xf32>
    %84 = vector.shape_cast %83 : vector<1x8x512xf32> to vector<8x512xf32>
    %cst_40 = arith.constant dense<0.000000e+00> : vector<8x512xf32>
    %85 = tpu.matmul %80, %3, %cst_40 {dimension_numbers = #tpu.dot_dimension_numbers<[1], [0], [0], [1], [0, 0, 1, 1], [], []>} : vector<8x128xf32>, vector<128x512xf32>, vector<8x512xf32> -> vector<8x512xf32>
    %86 = arith.addf %84, %85 : vector<8x512xf32>
    %87 = vector.extract_strided_slice %86 {offsets = [0, 0], sizes = [8, 128], strides = [1, 1]} : vector<8x512xf32> to vector<8x128xf32>
    %88 = arith.negf %87 : vector<8x128xf32>
    %89 = math.exp %88 : vector<8x128xf32>
    %cst_41 = arith.constant 1.000000e+00 : f32
    %90 = vector.broadcast %cst_41 : f32 to vector<8x128xf32>
    %91 = arith.addf %90, %89 : vector<8x128xf32>
    %92 = arith.divf %90, %91 : vector<8x128xf32>
    %93 = vector.extract_strided_slice %86 {offsets = [0, 128], sizes = [8, 128], strides = [1, 1]} : vector<8x512xf32> to vector<8x128xf32>
    %94 = arith.negf %93 : vector<8x128xf32>
    %95 = math.exp %94 : vector<8x128xf32>
    %cst_42 = arith.constant 1.000000e+00 : f32
    %96 = vector.broadcast %cst_42 : f32 to vector<8x128xf32>
    %97 = arith.addf %96, %95 : vector<8x128xf32>
    %98 = arith.divf %96, %97 : vector<8x128xf32>
    %99 = vector.extract_strided_slice %86 {offsets = [0, 256], sizes = [8, 128], strides = [1, 1]} : vector<8x512xf32> to vector<8x128xf32>
    %100 = math.tanh %99 : vector<8x128xf32>
    %101 = vector.extract_strided_slice %86 {offsets = [0, 384], sizes = [8, 128], strides = [1, 1]} : vector<8x512xf32> to vector<8x128xf32>
    %102 = arith.negf %101 : vector<8x128xf32>
    %103 = math.exp %102 : vector<8x128xf32>
    %cst_43 = arith.constant 1.000000e+00 : f32
    %104 = vector.broadcast %cst_43 : f32 to vector<8x128xf32>
    %105 = arith.addf %104, %103 : vector<8x128xf32>
    %106 = arith.divf %104, %105 : vector<8x128xf32>
    %107 = arith.mulf %98, %81 : vector<8x128xf32>
    %108 = arith.mulf %92, %100 : vector<8x128xf32>
    %109 = arith.addf %107, %108 : vector<8x128xf32>
    %110 = math.tanh %109 : vector<8x128xf32>
    %111 = arith.mulf %106, %110 : vector<8x128xf32>
    %c0_44 = arith.constant 0 : index
    %c0_45 = arith.constant 0 : index
    %112 = vector.load %arg4[%c0_44, %c0_45] : memref<8x128xf32, #tpu.memory_space<vmem>>, vector<8x128xf32>
    tpu.vector_store %arg4[%c0_44, %c0_45], %111 {strides = array<i32>} : memref<8x128xf32, #tpu.memory_space<vmem>>, vector<8x128xf32>,
    %c0_46 = arith.constant 0 : index
    %c0_47 = arith.constant 0 : index
    %113 = vector.load %arg5[%c0_46, %c0_47] : memref<8x128xf32, #tpu.memory_space<vmem>>, vector<8x128xf32>
    tpu.vector_store %arg5[%c0_46, %c0_47], %109 {strides = array<i32>} : memref<8x128xf32, #tpu.memory_space<vmem>>, vector<8x128xf32>,
    %114 = arith.index_cast %c2_i32 : i32 to index
    %c0_48 = arith.constant 0 : index
    %c0_49 = arith.constant 0 : index
    %115 = vector.load %arg3[%114, %c0_48, %c0_49] : memref<4x8x128xf32, #tpu.memory_space<vmem>>, vector<1x8x128xf32>
    %116 = vector.shape_cast %115 : vector<1x8x128xf32> to vector<8x128xf32>
    %117 = vector.shape_cast %111 : vector<8x128xf32> to vector<1x8x128xf32>
    tpu.vector_store %arg3[%114, %c0_48, %c0_49], %117 {strides = array<i32>} : memref<4x8x128xf32, #tpu.memory_space<vmem>>, vector<1x8x128xf32>,
    %c3_i32 = arith.constant 3 : i32
    %c0_50 = arith.constant 0 : index
    %c0_51 = arith.constant 0 : index
    %118 = vector.load %arg4[%c0_50, %c0_51] : memref<8x128xf32, #tpu.memory_space<vmem>>, vector<8x128xf32>
    %c0_52 = arith.constant 0 : index
    %c0_53 = arith.constant 0 : index
    %119 = vector.load %arg5[%c0_52, %c0_53] : memref<8x128xf32, #tpu.memory_space<vmem>>, vector<8x128xf32>
    %120 = arith.index_cast %c3_i32 : i32 to index
    %c0_54 = arith.constant 0 : index
    %c0_55 = arith.constant 0 : index
    %121 = vector.load %arg1[%120, %c0_54, %c0_55] : memref<4x8x512xf32, #tpu.memory_space<vmem>>, vector<1x8x512xf32>
    %122 = vector.shape_cast %121 : vector<1x8x512xf32> to vector<8x512xf32>
    %cst_56 = arith.constant dense<0.000000e+00> : vector<8x512xf32>
    %123 = tpu.matmul %118, %3, %cst_56 {dimension_numbers = #tpu.dot_dimension_numbers<[1], [0], [0], [1], [0, 0, 1, 1], [], []>} : vector<8x128xf32>, vector<128x512xf32>, vector<8x512xf32> -> vector<8x512xf32>
    %124 = arith.addf %122, %123 : vector<8x512xf32>
    %125 = vector.extract_strided_slice %124 {offsets = [0, 0], sizes = [8, 128], strides = [1, 1]} : vector<8x512xf32> to vector<8x128xf32>
    %126 = arith.negf %125 : vector<8x128xf32>
    %127 = math.exp %126 : vector<8x128xf32>
    %cst_57 = arith.constant 1.000000e+00 : f32
    %128 = vector.broadcast %cst_57 : f32 to vector<8x128xf32>
    %129 = arith.addf %128, %127 : vector<8x128xf32>
    %130 = arith.divf %128, %129 : vector<8x128xf32>
    %131 = vector.extract_strided_slice %124 {offsets = [0, 128], sizes = [8, 128], strides = [1, 1]} : vector<8x512xf32> to vector<8x128xf32>
    %132 = arith.negf %131 : vector<8x128xf32>
    %133 = math.exp %132 : vector<8x128xf32>
    %cst_58 = arith.constant 1.000000e+00 : f32
    %134 = vector.broadcast %cst_58 : f32 to vector<8x128xf32>
    %135 = arith.addf %134, %133 : vector<8x128xf32>
    %136 = arith.divf %134, %135 : vector<8x128xf32>
    %137 = vector.extract_strided_slice %124 {offsets = [0, 256], sizes = [8, 128], strides = [1, 1]} : vector<8x512xf32> to vector<8x128xf32>
    %138 = math.tanh %137 : vector<8x128xf32>
    %139 = vector.extract_strided_slice %124 {offsets = [0, 384], sizes = [8, 128], strides = [1, 1]} : vector<8x512xf32> to vector<8x128xf32>
    %140 = arith.negf %139 : vector<8x128xf32>
    %141 = math.exp %140 : vector<8x128xf32>
    %cst_59 = arith.constant 1.000000e+00 : f32
    %142 = vector.broadcast %cst_59 : f32 to vector<8x128xf32>
    %143 = arith.addf %142, %141 : vector<8x128xf32>
    %144 = arith.divf %142, %143 : vector<8x128xf32>
    %145 = arith.mulf %136, %119 : vector<8x128xf32>
    %146 = arith.mulf %130, %138 : vector<8x128xf32>
    %147 = arith.addf %145, %146 : vector<8x128xf32>
    %148 = math.tanh %147 : vector<8x128xf32>
    %149 = arith.mulf %144, %148 : vector<8x128xf32>
    %c0_60 = arith.constant 0 : index
    %c0_61 = arith.constant 0 : index
    %150 = vector.load %arg4[%c0_60, %c0_61] : memref<8x128xf32, #tpu.memory_space<vmem>>, vector<8x128xf32>
    tpu.vector_store %arg4[%c0_60, %c0_61], %149 {strides = array<i32>} : memref<8x128xf32, #tpu.memory_space<vmem>>, vector<8x128xf32>,
    %c0_62 = arith.constant 0 : index
    %c0_63 = arith.constant 0 : index
    %151 = vector.load %arg5[%c0_62, %c0_63] : memref<8x128xf32, #tpu.memory_space<vmem>>, vector<8x128xf32>
    tpu.vector_store %arg5[%c0_62, %c0_63], %147 {strides = array<i32>} : memref<8x128xf32, #tpu.memory_space<vmem>>, vector<8x128xf32>,
    %152 = arith.index_cast %c3_i32 : i32 to index
    %c0_64 = arith.constant 0 : index
    %c0_65 = arith.constant 0 : index
    %153 = vector.load %arg3[%152, %c0_64, %c0_65] : memref<4x8x128xf32, #tpu.memory_space<vmem>>, vector<1x8x128xf32>
    %154 = vector.shape_cast %153 : vector<1x8x128xf32> to vector<8x128xf32>
    %155 = vector.shape_cast %149 : vector<8x128xf32> to vector<1x8x128xf32>
    tpu.vector_store %arg3[%152, %c0_64, %c0_65], %155 {strides = array<i32>} : memref<4x8x128xf32, #tpu.memory_space<vmem>>, vector<1x8x128xf32>,
    %c4_i32 = arith.constant 4 : i32
    return
  }
  func.func @transform_0(%arg0: i32) -> (i32, i32, i32) {
    %c0_i32 = arith.constant 0 : i32
    %c0_i32_0 = arith.constant 0 : i32
    %c0_i32_1 = arith.constant 0 : i32
    return %arg0, %c0_i32, %c0_i32_0 : i32, i32, i32
  }
  func.func @transform_1(%arg0: i32) -> (i32, i32) {
    %c0_i32 = arith.constant 0 : i32
    %c0_i32_0 = arith.constant 0 : i32
    %c0_i32_1 = arith.constant 0 : i32
    return %c0_i32, %c0_i32_0 : i32, i32
  }
  func.func @transform_2(%arg0: i32) -> (i32, i32, i32) {
    %c0_i32 = arith.constant 0 : i32
    %c0_i32_0 = arith.constant 0 : i32
    %c0_i32_1 = arith.constant 0 : i32
    return %arg0, %c0_i32, %c0_i32_0 : i32, i32, i32
  }
}

module attributes {stable_mosaic.version = 11 : i64} {
  func.func @_matmul_bias_kernel(%arg0: i32, %arg1: i32, %arg2: i32, %arg3: memref<96x128xbf16, #tpu.memory_space<vmem>>, %arg4: memref<128x128xbf16, #tpu.memory_space<vmem>>, %arg5: memref<1x128xf32, #tpu.memory_space<vmem>>, %arg6: memref<96x128xf32, #tpu.memory_space<vmem>>, %arg7: memref<96x128xf32, #tpu.memory_space<vmem>>) attributes {dimension_semantics = [#tpu.dimension_semantics<parallel>, #tpu.dimension_semantics<parallel>, #tpu.dimension_semantics<arbitrary>], iteration_bounds = array<i64: 1, 1, 1>, scalar_prefetch = 0 : i64, scratch_operands = 1 : i64, tpu.core_type = #tpu.core_type<tc>, window_params = [{transform_indices = @transform_0, window_bounds = array<i64: 96, 128>}, {transform_indices = @transform_1, window_bounds = array<i64: 128, 128>}, {transform_indices = @transform_2, window_bounds = array<i64: 1, 128>}, {transform_indices = @transform_3, window_bounds = array<i64: 96, 128>}]} {
    %c0_i32 = arith.constant 0 : i32
    %0 = arith.cmpi eq, %arg2, %c0_i32 : i32
    %1 = arith.extui %0 : i1 to i32
    %c0_i32_0 = arith.constant 0 : i32
    %2 = arith.cmpi ne, %1, %c0_i32_0 : i32
    scf.if %2 {
      %cst_10 = arith.constant 0.000000e+00 : f32
      %12 = vector.broadcast %cst_10 : f32 to vector<96x128xf32>
      %c0_11 = arith.constant 0 : index
      %c0_12 = arith.constant 0 : index
      %13 = vector.load %arg7[%c0_11, %c0_12] : memref<96x128xf32, #tpu.memory_space<vmem>>, vector<96x128xf32>
      tpu.vector_store %arg7[%c0_11, %c0_12], %12 {strides = array<i32>} : memref<96x128xf32, #tpu.memory_space<vmem>>, vector<96x128xf32>,
    } else {
    }
    %c0 = arith.constant 0 : index
    %c0_1 = arith.constant 0 : index
    %3 = vector.load %arg7[%c0, %c0_1] : memref<96x128xf32, #tpu.memory_space<vmem>>, vector<96x128xf32>
    %c0_2 = arith.constant 0 : index
    %c0_3 = arith.constant 0 : index
    %4 = vector.load %arg3[%c0_2, %c0_3] : memref<96x128xbf16, #tpu.memory_space<vmem>>, vector<96x128xbf16>
    %c0_4 = arith.constant 0 : index
    %c0_5 = arith.constant 0 : index
    %5 = vector.load %arg4[%c0_4, %c0_5] : memref<128x128xbf16, #tpu.memory_space<vmem>>, vector<128x128xbf16>
    %cst = arith.constant dense<0.000000e+00> : vector<96x128xf32>
    %6 = tpu.matmul %4, %5, %cst {dimension_numbers = #tpu.dot_dimension_numbers<[1], [0], [0], [1], [0, 0, 1, 1], [], []>} : vector<96x128xbf16>, vector<128x128xbf16>, vector<96x128xf32> -> vector<96x128xf32>
    %7 = arith.addf %3, %6 : vector<96x128xf32>
    %c0_6 = arith.constant 0 : index
    %c0_7 = arith.constant 0 : index
    %8 = vector.load %arg7[%c0_6, %c0_7] : memref<96x128xf32, #tpu.memory_space<vmem>>, vector<96x128xf32>
    tpu.vector_store %arg7[%c0_6, %c0_7], %7 {strides = array<i32>} : memref<96x128xf32, #tpu.memory_space<vmem>>, vector<96x128xf32>,
    %c0_i32_8 = arith.constant 0 : i32
    %9 = arith.cmpi eq, %arg2, %c0_i32_8 : i32
    %10 = arith.extui %9 : i1 to i32
    %c0_i32_9 = arith.constant 0 : i32
    %11 = arith.cmpi ne, %10, %c0_i32_9 : i32
    scf.if %11 {
      %c0_10 = arith.constant 0 : index
      %c0_11 = arith.constant 0 : index
      %12 = vector.load %arg7[%c0_10, %c0_11] : memref<96x128xf32, #tpu.memory_space<vmem>>, vector<96x128xf32>
      %c0_12 = arith.constant 0 : index
      %c0_13 = arith.constant 0 : index
      %13 = vector.load %arg5[%c0_12, %c0_13] : memref<1x128xf32, #tpu.memory_space<vmem>>, vector<1x128xf32>
      %14 = vector.broadcast %13 : vector<1x128xf32> to vector<96x128xf32>
      %15 = arith.addf %12, %14 : vector<96x128xf32>
      %c0_14 = arith.constant 0 : index
      %c0_15 = arith.constant 0 : index
      %16 = vector.load %arg6[%c0_14, %c0_15] : memref<96x128xf32, #tpu.memory_space<vmem>>, vector<96x128xf32>
      tpu.vector_store %arg6[%c0_14, %c0_15], %15 {strides = array<i32>} : memref<96x128xf32, #tpu.memory_space<vmem>>, vector<96x128xf32>,
    } else {
    }
    return
  }
  func.func @transform_0(%arg0: i32, %arg1: i32, %arg2: i32) -> (i32, i32) {
    %c0_i32 = arith.constant 0 : i32
    return %arg0, %arg2 : i32, i32
  }
  func.func @transform_1(%arg0: i32, %arg1: i32, %arg2: i32) -> (i32, i32) {
    %c0_i32 = arith.constant 0 : i32
    return %arg2, %arg1 : i32, i32
  }
  func.func @transform_2(%arg0: i32, %arg1: i32, %arg2: i32) -> (i32, i32) {
    %c0_i32 = arith.constant 0 : i32
    %c0_i32_0 = arith.constant 0 : i32
    return %c0_i32, %arg1 : i32, i32
  }
  func.func @transform_3(%arg0: i32, %arg1: i32, %arg2: i32) -> (i32, i32) {
    %c0_i32 = arith.constant 0 : i32
    return %arg0, %arg1 : i32, i32
  }
}

</mosaic_0001>

<llo_original>
// kernel: cnn_to_rnn_forward.8
$region0: #{cnn_to_rnn_forward.8}
  #allocation0 [shape = 'u32[]', space=smem, size = 0x4, offset = 0x4, fixed_abs, tag = 'smem constant byte address 0x4 - core index']
  #allocation1 [shape = 'u32[144,128]{1,0:T(1,128)}', space=vmem, size = 0x12000, scoped, tag = 'internal scratch']
  #allocation2 [shape = 'f32[8,128]{1,0:T(8,128)}', space=vmem, size = 0x1000, scoped, tag = 'scratch operand']
  %s0 = inlined_call_operand.vmem [shape: bf16[8,128], index: 0, kind: input, shape index: {}]
  %s1 = inlined_call_operand.vmem [shape: bf16[128,128], index: 1, kind: input, shape index: {}]
  %s2 = inlined_call_operand.vmem [shape: f32[1,128], index: 2, kind: input, shape index: {}]
  %s3 = inlined_call_operand.vmem [shape: f32[8,128], index: 3, kind: output, shape index: {}]
  %s4 = sld [smem:[#allocation0]]
  $region30: #{cnn_to_rnn_forward.8} parent=0
    _
  %s6 = ssub.s32 1, %s4
  %s7 = scalar_select 0, %s6, %s4
  // Predicated region
  $region2: #{cnn_to_rnn_forward.8} parent=0 // pred_check
    _
  $region3: #{cnn_to_rnn_forward.8} parent=0 // pred_check_branch
    %9 = sbr.rel (0) target = $region5
  $region4: #{cnn_to_rnn_forward.8} parent=0 // pred_region
    _
  $region5: #{cnn_to_rnn_forward.8} parent=0 // pred_fallthru
    _
  // Predicated region
  $region6: #{cnn_to_rnn_forward.8} parent=0 // pred_check
    _
  $region7: #{cnn_to_rnn_forward.8} parent=0 // pred_check_branch
    %11 = sbr.rel (0) target = $region9
  $region8: #{cnn_to_rnn_forward.8} parent=0 // pred_region
    _
  $region9: #{cnn_to_rnn_forward.8} parent=0 // pred_fallthru
    _
  // Predicated region
  $region10: #{cnn_to_rnn_forward.8} parent=0 // pred_check
    _
  $region11: #{cnn_to_rnn_forward.8} parent=0 // pred_check_branch
    %13 = sbr.rel (0) target = $region13
  $region12: #{cnn_to_rnn_forward.8} parent=0 // pred_region
    _
  $region13: #{cnn_to_rnn_forward.8} parent=0 // pred_fallthru
    _
  %p15 = scmp.eq.s32.totalorder 0, 0
  // Predicated region
  $region14: #{cnn_to_rnn_forward.8} parent=0 // pred_check
    %p16 = pneg %p15
  $region15: #{cnn_to_rnn_forward.8} parent=0 // pred_check_branch
    %18 = sbr.rel (%p16) target = $region17
  $region16: #{cnn_to_rnn_forward.8} parent=0 // pred_region
    %19 = vst [vmem:[#allocation2] sm:$0xff] 0.0
  $region17: #{cnn_to_rnn_forward.8} parent=0 // pred_fallthru
    _
  %v20 = vld [vmem:[#allocation2] sm:$0xff]
  %v21 = vld [vmem:[%s0] sm:$0xf]
  %v22 = vld [vmem:[%s1] sm:$0xf]
  %v23 = vld [vmem:[%s1 + $0x4] sm:$0xf]
  %v24 = vld [vmem:[%s1 + $0x8] sm:$0xf]
  %v25 = vld [vmem:[%s1 + $0xc] sm:$0xf]
  %v26 = vld [vmem:[%s1 + $0x10] sm:$0xf]
  %v27 = vld [vmem:[%s1 + $0x14] sm:$0xf]
  %v28 = vld [vmem:[%s1 + $0x18] sm:$0xf]
  %v29 = vld [vmem:[%s1 + $0x1c] sm:$0xf]
  %v30 = vld [vmem:[%s1 + $0x20] sm:$0xf]
  %v31 = vld [vmem:[%s1 + $0x24] sm:$0xf]
  %v32 = vld [vmem:[%s1 + $0x28] sm:$0xf]
  %v33 = vld [vmem:[%s1 + $0x2c] sm:$0xf]
  %v34 = vld [vmem:[%s1 + $0x30] sm:$0xf]
  %v35 = vld [vmem:[%s1 + $0x34] sm:$0xf]
  %v36 = vld [vmem:[%s1 + $0x38] sm:$0xf]
  %v37 = vld [vmem:[%s1 + $0x3c] sm:$0xf]
  %v54 = vunpack.c.l.b16 %v22
  %v55 = vunpack.c.l.b16 %v23
  %v56 = vunpack.c.l.b16 %v24
  %v57 = vunpack.c.l.b16 %v25
  %v58 = vunpack.c.l.b16 %v26
  %v59 = vunpack.c.l.b16 %v27
  %v60 = vunpack.c.l.b16 %v28
  %v61 = vunpack.c.l.b16 %v29
  %v62 = vunpack.c.l.b16 %v30
  %v63 = vunpack.c.l.b16 %v31
  %v64 = vunpack.c.l.b16 %v32
  %v65 = vunpack.c.l.b16 %v33
  %v66 = vunpack.c.l.b16 %v34
  %v67 = vunpack.c.l.b16 %v35
  %v68 = vunpack.c.l.b16 %v36
  %v69 = vunpack.c.l.b16 %v37
  %v70 = vpack.c.b16 %v55, %v54
  %v71 = vpack.c.b16 %v57, %v56
  %v72 = vpack.c.b16 %v59, %v58
  %v73 = vpack.c.b16 %v61, %v60
  %v74 = vpack.c.b16 %v63, %v62
  %v75 = vpack.c.b16 %v65, %v64
  %v76 = vpack.c.b16 %v67, %v66
  %v77 = vpack.c.b16 %v69, %v68
  %86 = vmatprep.subr.bf16.mxu0 0
  %87 = vmatpush1.bf16.msra.mxu0 %v70
  %88 = vmatprep.subr.bf16.mxu0 0
  %89 = vmatpush1.bf16.msra.mxu0 %v71
  %90 = vmatprep.subr.bf16.mxu0 0
  %91 = vmatpush1.bf16.msra.mxu0 %v72
  %92 = vmatprep.subr.bf16.mxu0 0
  %93 = vmatpush1.bf16.msra.mxu0 %v73
  %94 = vmatprep.subr.bf16.mxu0 0
  %95 = vmatpush1.bf16.msra.mxu0 %v74
  %96 = vmatprep.subr.bf16.mxu0 0
  %97 = vmatpush1.bf16.msra.mxu0 %v75
  %98 = vmatprep.subr.bf16.mxu0 0
  %99 = vmatpush1.bf16.msra.mxu0 %v76
  %100 = vmatprep.subr.bf16.mxu0 0
  %101 = vmatpush1.bf16.msra.mxu0 %v77
  %102 = vmatprep.subr.bf16.mxu0 0
  %103 = vmatpush1.bf16.msra.mxu0 0
  %104 = vmatprep.subr.bf16.mxu0 0
  %105 = vmatpush1.bf16.msra.mxu0 0
  %106 = vmatprep.subr.bf16.mxu0 0
  %107 = vmatpush1.bf16.msra.mxu0 0
  %108 = vmatprep.subr.bf16.mxu0 0
  %109 = vmatpush1.bf16.msra.mxu0 0
  %110 = vmatprep.subr.bf16.mxu0 0
  %111 = vmatpush1.bf16.msra.mxu0 0
  %112 = vmatprep.subr.bf16.mxu0 0
  %113 = vmatpush1.bf16.msra.mxu0 0
  %114 = vmatprep.subr.bf16.mxu0 0
  %115 = vmatpush1.bf16.msra.mxu0 0
  %116 = vmatprep.subr.bf16.mxu0 0
  %117 = vmatpush1.bf16.msra.mxu0 0
  %118 = vmatprep.mubr.bf16.mxu0 0
  %119 = vmatmul.mubr.bf16.gmra.mrb[0].mxu0 %v21
  %v120 = vpop.f32.mrb[0].mxu0
  %v121 = vadd.f32 0.0, %v120
  %v122 = vpop.f32.mrb[0].mxu0
  %v123 = vpop.f32.mrb[0].mxu0
  %v124 = vpop.f32.mrb[0].mxu0
  %125 = vdwg.mxu0
  %v126 = vadd.f32 %v20, %v121
  %127 = vst [vmem:[#allocation2] sm:$0xff] %v126
  // Predicated region
  $region18: #{cnn_to_rnn_forward.8} parent=0 // pred_check
    %p128 = pneg %p15
  $region19: #{cnn_to_rnn_forward.8} parent=0 // pred_check_branch
    %130 = sbr.rel (%p128) target = $region21
  $region20: #{cnn_to_rnn_forward.8} parent=0 // pred_region
    %v131 = vld [vmem:[#allocation2] sm:$0xff]
    %v132 = vld [vmem:[%s2] sm:$0x1]
    %v134 = vlaneseq
    %v135 = vshrl.u32 %v134, 7
    %v136 = vsub.s32 0, %v135
    %v137 = vrot.slane %v132, %v136
    %v139 = vadd.f32 %v131, %v137
    %v140 = vmax.f32 %v139, 0.0
    %141 = vst [vmem:[%s3] sm:$0xff] %v140
  $region21: #{cnn_to_rnn_forward.8} parent=0 // pred_fallthru
    _
  // Predicated region
  $region22: #{cnn_to_rnn_forward.8} parent=0 // pred_check
    _
  $region23: #{cnn_to_rnn_forward.8} parent=0 // pred_check_branch
    %143 = sbr.rel (0) target = $region25
  $region24: #{cnn_to_rnn_forward.8} parent=0 // pred_region
    _
  $region25: #{cnn_to_rnn_forward.8} parent=0 // pred_fallthru
    _
  // Predicated region
  $region26: #{cnn_to_rnn_forward.8} parent=0 // pred_check
    _
  $region27: #{cnn_to_rnn_forward.8} parent=0 // pred_check_branch
    %145 = sbr.rel (0) target = $region29
  $region28: #{cnn_to_rnn_forward.8} parent=0 // pred_region
    _
  $region29: #{cnn_to_rnn_forward.8} parent=0 // pred_fallthru
    _

// kernel: cnn_to_rnn_forward.7
$region0: #{cnn_to_rnn_forward.7}
  #allocation0 [shape = 'u32[]', space=smem, size = 0x4, offset = 0x4, fixed_abs, tag = 'smem constant byte address 0x4 - core index']
  #allocation1 [shape = 'u32[144,128]{1,0:T(1,128)}', space=vmem, size = 0x12000, scoped, tag = 'internal scratch']
  #allocation2 [shape = 'f32[8,128]{1,0:T(8,128)}', space=vmem, size = 0x1000, scoped, tag = 'scratch operand']
  %s0 = inlined_call_operand.vmem [shape: bf16[8,256,128], index: 0, kind: input, shape index: {}]
  %s1 = inlined_call_operand.vmem [shape: bf16[128,128], index: 1, kind: input, shape index: {}]
  %s2 = inlined_call_operand.vmem [shape: f32[1,128], index: 2, kind: input, shape index: {}]
  %s3 = inlined_call_operand.vmem [shape: f32[8,128], index: 3, kind: output, shape index: {}]
  %s4 = sld [smem:[#allocation0]]
  $region94: #{cnn_to_rnn_forward.7} parent=0
    _
  %s6 = ssub.s32 1, %s4
  %s7 = scalar_select 0, %s6, %s4
  $region1: #{cnn_to_rnn_forward.7} parent=0
    #allocation3 [shape = 'u8[524288]{0}', space=vmem, size = 0x80000, scoped, tag = 'input window, operand 0']
    loop: start=0, step=1, limit=4
    $region2: #{cnn_to_rnn_forward.7} parent=1 // loop_pre_header
      _
    $region3: #{cnn_to_rnn_forward.7} parent=1 // loop_header
      %s9 = sphi 0, %s13
      %p10 = scmp.ge.s32.totalorder %s9, 4
      %s19 = sphi 0, %s21
      %s22 = sphi 0, %s19
      %s23 = sphi 0, %s22
      %s39 = sphi 0, %s23
      %s43 = sphi 0, %s43
      %s45 = sphi 0, %s43
      %s46 = sphi 0, %s45
      %s60 = sphi 0, %s46
      %s64 = sphi 0, %s64
      %s66 = sphi 0, %s64
      %s67 = sphi 0, %s66
      %s81 = sphi 0, %s67
      %s85 = sphi 0, %s85
      %s87 = sphi 0, %s85
      %s88 = sphi 0, %s87
      %s102 = sphi 0, %s88
    $region4: #{cnn_to_rnn_forward.7} parent=1 // loop_header_branch
      %12 = sbr.rel (%p10) target = $region8
    $region5: #{cnn_to_rnn_forward.7} parent=1 // loop_body
      %s14 = ssub.s32 %s9, 1
      %s15 = ssub.s32 %s9, 2
      %s16 = sadd.s32 %s9, 1
      %s17 = ssub.s32 %s9, %s16
      %p18 = scmp.eq.s32.totalorder %s17, 0
      %s20 = sadd.s32 %s19, 1
      %s21 = scalar_select %p18, %s19, %s20
      %p24 = pneg %p18
      %p25 = scmp.eq.s32.totalorder %s9, 1
      %p26 = por %p24, %p25
      %p27 = scmp.ne.s32.totalorder %s19, %s22
      %p28 = scmp.eq.s32.totalorder %s9, 0
      %p29 = por %p27, %p28
      %p30 = scmp.ne.s32.totalorder %s19, %s22
      %p31 = scmp.eq.s32.totalorder %s14, 1
      %p32 = por %p30, %p31
      %p33 = scmp.ne.s32.totalorder %s22, %s23
      %p34 = scmp.eq.s32.totalorder %s14, 0
      %p35 = por %p33, %p34
      %p36 = scmp.ne.s32.totalorder %s22, %s23
      %p37 = scmp.eq.s32.totalorder %s15, 1
      %p38 = por %p36, %p37
      %p40 = scmp.ne.s32.totalorder %s23, %s39
      %p41 = scmp.eq.s32.totalorder %s15, 0
      %p42 = por %p40, %p41
      %s44 = sadd.s32 %s43, 1
      %p47 = scmp.eq.s32.totalorder %s9, 1
      %p48 = scmp.ne.s32.totalorder %s43, %s45
      %p49 = scmp.eq.s32.totalorder %s9, 0
      %p50 = por %p48, %p49
      %p51 = scmp.ne.s32.totalorder %s43, %s45
      %p52 = scmp.eq.s32.totalorder %s14, 1
      %p53 = por %p51, %p52
      %p54 = scmp.ne.s32.totalorder %s45, %s46
      %p55 = scmp.eq.s32.totalorder %s14, 0
      %p56 = por %p54, %p55
      %p57 = scmp.ne.s32.totalorder %s45, %s46
      %p58 = scmp.eq.s32.totalorder %s15, 1
      %p59 = por %p57, %p58
      %p61 = scmp.ne.s32.totalorder %s46, %s60
      %p62 = scmp.eq.s32.totalorder %s15, 0
      %p63 = por %p61, %p62
      %s65 = sadd.s32 %s64, 1
      %p68 = scmp.eq.s32.totalorder %s9, 1
      %p69 = scmp.ne.s32.totalorder %s64, %s66
      %p70 = scmp.eq.s32.totalorder %s9, 0
      %p71 = por %p69, %p70
      %p72 = scmp.ne.s32.totalorder %s64, %s66
      %p73 = scmp.eq.s32.totalorder %s14, 1
      %p74 = por %p72, %p73
      %p75 = scmp.ne.s32.totalorder %s66, %s67
      %p76 = scmp.eq.s32.totalorder %s14, 0
      %p77 = por %p75, %p76
      %p78 = scmp.ne.s32.totalorder %s66, %s67
      %p79 = scmp.eq.s32.totalorder %s15, 1
      %p80 = por %p78, %p79
      %p82 = scmp.ne.s32.totalorder %s67, %s81
      %p83 = scmp.eq.s32.totalorder %s15, 0
      %p84 = por %p82, %p83
      %s86 = sadd.s32 %s85, 1
      %p89 = scmp.eq.s32.totalorder %s9, 1
      %p90 = scmp.ne.s32.totalorder %s85, %s87
      %p91 = scmp.eq.s32.totalorder %s9, 0
      %p92 = por %p90, %p91
      %p93 = scmp.ne.s32.totalorder %s85, %s87
      %p94 = scmp.eq.s32.totalorder %s14, 1
      %p95 = por %p93, %p94
      %p96 = scmp.ne.s32.totalorder %s87, %s88
      %p97 = scmp.eq.s32.totalorder %s14, 0
      %p98 = por %p96, %p97
      %p99 = scmp.ne.s32.totalorder %s87, %s88
      %p100 = scmp.eq.s32.totalorder %s15, 1
      %p101 = por %p99, %p100
      %p103 = scmp.ne.s32.totalorder %s88, %s102
      %p104 = scmp.eq.s32.totalorder %s15, 0
      %p105 = por %p103, %p104
      %p106 = scmp.le.s32.totalorder 1, %s9
      %p107 = scmp.lt.s32.totalorder %s9, 3
      %p108 = pnand %p106, %p107
      %p109 = pneg %p108
      // Predicated region
      $region9: #{cnn_to_rnn_forward.7} parent=5 // pred_check
        _
      $region10: #{cnn_to_rnn_forward.7} parent=5 // pred_check_branch
        %111 = sbr.rel (%p108) target = $region12
      $region11: #{cnn_to_rnn_forward.7} parent=5 // pred_region
        %s112 = ssub.s32 %s9, 1
        // Predicated region
        $region13: #{cnn_to_rnn_forward.7} parent=11 // pred_check
          %p113 = pneg %p56
        $region14: #{cnn_to_rnn_forward.7} parent=11 // pred_check_branch
          %115 = sbr.rel (%p113) target = $region16
        $region15: #{cnn_to_rnn_forward.7} parent=11 // pred_region
          _
        $region16: #{cnn_to_rnn_forward.7} parent=11 // pred_fallthru
          _
        // Predicated region
        $region17: #{cnn_to_rnn_forward.7} parent=11 // pred_check
          %p116 = pneg %p77
        $region18: #{cnn_to_rnn_forward.7} parent=11 // pred_check_branch
          %118 = sbr.rel (%p116) target = $region20
        $region19: #{cnn_to_rnn_forward.7} parent=11 // pred_region
          _
        $region20: #{cnn_to_rnn_forward.7} parent=11 // pred_fallthru
          _
      $region12: #{cnn_to_rnn_forward.7} parent=5 // pred_fallthru
        _
      %p119 = scmp.lt.s32.totalorder %s9, 2
      // Predicated region
      $region21: #{cnn_to_rnn_forward.7} parent=5 // pred_check
        %p120 = pneg %p119
      $region22: #{cnn_to_rnn_forward.7} parent=5 // pred_check_branch
        %122 = sbr.rel (%p120) target = $region24
      $region23: #{cnn_to_rnn_forward.7} parent=5 // pred_region
        // Predicated region
        $region25: #{cnn_to_rnn_forward.7} parent=23 // pred_check
          %p123 = pneg %p29
        $region26: #{cnn_to_rnn_forward.7} parent=23 // pred_check_branch
          %125 = sbr.rel (%p123) target = $region28
        $region27: #{cnn_to_rnn_forward.7} parent=23 // pred_region
          %s126 = sand.u32 %s19, 1
          %s127 = sand.u32 %s19, 1
          %s128 = smul.addr %s127, 512
          %s129 = scalar_lea.vmem [#allocation3], %s128
          %s130 = smul.u32 16, %s9
          %s131 = smul.addr %s130, 4
          %s132 = scalar_lea.vmem %s0, %s131
          // Predicated region
          $region29: #{cnn_to_rnn_forward.7} parent=27 // pred_check
            _
          $region30: #{cnn_to_rnn_forward.7} parent=27 // pred_check_branch
            %134 = sbr.rel (0) target = $region32
          $region31: #{cnn_to_rnn_forward.7} parent=27 // pred_region
            // Predicated region
            $region33: #{cnn_to_rnn_forward.7} parent=31 // pred_check
              _
            $region34: #{cnn_to_rnn_forward.7} parent=31 // pred_check_branch
              %136 = sbr.rel target = $region36
            $region35: #{cnn_to_rnn_forward.7} parent=31 // pred_region
              // Predicated region
              $region48: #{cnn_to_rnn_forward.7} parent=35 // pred_check
                _
              $region49: #{cnn_to_rnn_forward.7} parent=35 // pred_check_branch
                %405 = sbr.rel (0) target = $region51
              $region50: #{cnn_to_rnn_forward.7} parent=35 // pred_region
                loop: start=0, step=1, limit=1
                $region52: #{cnn_to_rnn_forward.7} parent=50 // loop_pre_header
                  _
                $region53: #{cnn_to_rnn_forward.7} parent=50 // loop_header
                  %s407 = sphi 0, %s411
                  %p408 = scmp.ge.s32.totalorder %s407, 1
                  %s412 = sphi %s132, %s132
                  %s413 = sphi %s129, %s129
                $region54: #{cnn_to_rnn_forward.7} parent=50 // loop_header_branch
                  %410 = sbr.rel (%p408) target = $region58
                $region55: #{cnn_to_rnn_forward.7} parent=50 // loop_body
                  _
                $region56: #{cnn_to_rnn_forward.7} parent=50 // loop_footer
                  %s411 = sadd.s32 1, %s407
                $region57: #{cnn_to_rnn_forward.7} parent=50 // loop_footer_branch
                  %406 = sbr.rel target = $region53
                $region58: #{cnn_to_rnn_forward.7} parent=50 // loop_exit
                  _
                loop: start=0, step=1, limit=1
                $region59: #{cnn_to_rnn_forward.7} parent=50 // loop_pre_header
                  _
                $region60: #{cnn_to_rnn_forward.7} parent=50 // loop_header
                  %s416 = sphi 0, %s420
                  %p417 = scmp.ge.s32.totalorder %s416, 1
                  %s421 = sphi %s132, %s132
                  %s422 = sphi %s129, %s129
                $region61: #{cnn_to_rnn_forward.7} parent=50 // loop_header_branch
                  %419 = sbr.rel (%p417) target = $region65
                $region62: #{cnn_to_rnn_forward.7} parent=50 // loop_body
                  %v423 = vld [vmem:[%s421] sm:$0xf]
                  %424 = vst [vmem:[%s422] sm:$0xf] %v423
                  %v425 = vld [vmem:[%s421 + $0x4] sm:$0xf]
                  %426 = vst [vmem:[%s422 + $0x4] sm:$0xf] %v425
                  %v427 = vld [vmem:[%s421 + $0x8] sm:$0xf]
                  %428 = vst [vmem:[%s422 + $0x8] sm:$0xf] %v427
                  %v429 = vld [vmem:[%s421 + $0xc] sm:$0xf]
                  %430 = vst [vmem:[%s422 + $0xc] sm:$0xf] %v429
                  %v431 = vld [vmem:[%s421 + $0x10] sm:$0xf]
                  %432 = vst [vmem:[%s422 + $0x10] sm:$0xf] %v431
                  %v433 = vld [vmem:[%s421 + $0x14] sm:$0xf]
                  %434 = vst [vmem:[%s422 + $0x14] sm:$0xf] %v433
                  %v435 = vld [vmem:[%s421 + $0x18] sm:$0xf]
                  %436 = vst [vmem:[%s422 + $0x18] sm:$0xf] %v435
                  %v437 = vld [vmem:[%s421 + $0x1c] sm:$0xf]
                  %438 = vst [vmem:[%s422 + $0x1c] sm:$0xf] %v437
                  %v439 = vld [vmem:[%s421 + $0x20] sm:$0xf]
                  %440 = vst [vmem:[%s422 + $0x20] sm:$0xf] %v439
                  %v441 = vld [vmem:[%s421 + $0x24] sm:$0xf]
                  %442 = vst [vmem:[%s422 + $0x24] sm:$0xf] %v441
                  %v443 = vld [vmem:[%s421 + $0x28] sm:$0xf]
                  %444 = vst [vmem:[%s422 + $0x28] sm:$0xf] %v443
                  %v445 = vld [vmem:[%s421 + $0x2c] sm:$0xf]
                  %446 = vst [vmem:[%s422 + $0x2c] sm:$0xf] %v445
                  %v447 = vld [vmem:[%s421 + $0x30] sm:$0xf]
                  %448 = vst [vmem:[%s422 + $0x30] sm:$0xf] %v447
                  %v449 = vld [vmem:[%s421 + $0x34] sm:$0xf]
                  %450 = vst [vmem:[%s422 + $0x34] sm:$0xf] %v449
                  %v451 = vld [vmem:[%s421 + $0x38] sm:$0xf]
                  %452 = vst [vmem:[%s422 + $0x38] sm:$0xf] %v451
                  %v453 = vld [vmem:[%s421 + $0x3c] sm:$0xf]
                  %454 = vst [vmem:[%s422 + $0x3c] sm:$0xf] %v453
                  %v455 = vld [vmem:[%s421 + $0x80] sm:$0xf]
                  %456 = vst [vmem:[%s422 + $0x40] sm:$0xf] %v455
                  %v457 = vld [vmem:[%s421 + $0x84] sm:$0xf]
                  %458 = vst [vmem:[%s422 + $0x44] sm:$0xf] %v457
                  %v459 = vld [vmem:[%s421 + $0x88] sm:$0xf]
                  %460 = vst [vmem:[%s422 + $0x48] sm:$0xf] %v459
                  %v461 = vld [vmem:[%s421 + $0x8c] sm:$0xf]
                  %462 = vst [vmem:[%s422 + $0x4c] sm:$0xf] %v461
                  %v463 = vld [vmem:[%s421 + $0x90] sm:$0xf]
                  %464 = vst [vmem:[%s422 + $0x50] sm:$0xf] %v463
                  %v465 = vld [vmem:[%s421 + $0x94] sm:$0xf]
                  %466 = vst [vmem:[%s422 + $0x54] sm:$0xf] %v465
                  %v467 = vld [vmem:[%s421 + $0x98] sm:$0xf]
                  %468 = vst [vmem:[%s422 + $0x58] sm:$0xf] %v467
                  %v469 = vld [vmem:[%s421 + $0x9c] sm:$0xf]
                  %470 = vst [vmem:[%s422 + $0x5c] sm:$0xf] %v469
                  %v471 = vld [vmem:[%s421 + $0xa0] sm:$0xf]
                  %472 = vst [vmem:[%s422 + $0x60] sm:$0xf] %v471
                  %v473 = vld [vmem:[%s421 + $0xa4] sm:$0xf]
                  %474 = vst [vmem:[%s422 + $0x64] sm:$0xf] %v473
                  %v475 = vld [vmem:[%s421 + $0xa8] sm:$0xf]
                  %476 = vst [vmem:[%s422 + $0x68] sm:$0xf] %v475
                  %v477 = vld [vmem:[%s421 + $0xac] sm:$0xf]
                  %478 = vst [vmem:[%s422 + $0x6c] sm:$0xf] %v477
                  %v479 = vld [vmem:[%s421 + $0xb0] sm:$0xf]
                  %480 = vst [vmem:[%s422 + $0x70] sm:$0xf] %v479
                  %v481 = vld [vmem:[%s421 + $0xb4] sm:$0xf]
                  %482 = vst [vmem:[%s422 + $0x74] sm:$0xf] %v481
                  %v483 = vld [vmem:[%s421 + $0xb8] sm:$0xf]
                  %484 = vst [vmem:[%s422 + $0x78] sm:$0xf] %v483
                  %v485 = vld [vmem:[%s421 + $0xbc] sm:$0xf]
                  %486 = vst [vmem:[%s422 + $0x7c] sm:$0xf] %v485
                  %v487 = vld [vmem:[%s421 + $0x100] sm:$0xf]
                  %488 = vst [vmem:[%s422 + $0x80] sm:$0xf] %v487
                  %v489 = vld [vmem:[%s421 + $0x104] sm:$0xf]
                  %490 = vst [vmem:[%s422 + $0x84] sm:$0xf] %v489
                  %v491 = vld [vmem:[%s421 + $0x108] sm:$0xf]
                  %492 = vst [vmem:[%s422 + $0x88] sm:$0xf] %v491
                  %v493 = vld [vmem:[%s421 + $0x10c] sm:$0xf]
                  %494 = vst [vmem:[%s422 + $0x8c] sm:$0xf] %v493
                  %v495 = vld [vmem:[%s421 + $0x110] sm:$0xf]
                  %496 = vst [vmem:[%s422 + $0x90] sm:$0xf] %v495
                  %v497 = vld [vmem:[%s421 + $0x114] sm:$0xf]
                  %498 = vst [vmem:[%s422 + $0x94] sm:$0xf] %v497
                  %v499 = vld [vmem:[%s421 + $0x118] sm:$0xf]
                  %500 = vst [vmem:[%s422 + $0x98] sm:$0xf] %v499
                  %v501 = vld [vmem:[%s421 + $0x11c] sm:$0xf]
                  %502 = vst [vmem:[%s422 + $0x9c] sm:$0xf] %v501
                  %v503 = vld [vmem:[%s421 + $0x120] sm:$0xf]
                  %504 = vst [vmem:[%s422 + $0xa0] sm:$0xf] %v503
                  %v505 = vld [vmem:[%s421 + $0x124] sm:$0xf]
                  %506 = vst [vmem:[%s422 + $0xa4] sm:$0xf] %v505
                  %v507 = vld [vmem:[%s421 + $0x128] sm:$0xf]
                  %508 = vst [vmem:[%s422 + $0xa8] sm:$0xf] %v507
                  %v509 = vld [vmem:[%s421 + $0x12c] sm:$0xf]
                  %510 = vst [vmem:[%s422 + $0xac] sm:$0xf] %v509
                  %v511 = vld [vmem:[%s421 + $0x130] sm:$0xf]
                  %512 = vst [vmem:[%s422 + $0xb0] sm:$0xf] %v511
                  %v513 = vld [vmem:[%s421 + $0x134] sm:$0xf]
                  %514 = vst [vmem:[%s422 + $0xb4] sm:$0xf] %v513
                  %v515 = vld [vmem:[%s421 + $0x138] sm:$0xf]
                  %516 = vst [vmem:[%s422 + $0xb8] sm:$0xf] %v515
                  %v517 = vld [vmem:[%s421 + $0x13c] sm:$0xf]
                  %518 = vst [vmem:[%s422 + $0xbc] sm:$0xf] %v517
                  %v519 = vld [vmem:[%s421 + $0x180] sm:$0xf]
                  %520 = vst [vmem:[%s422 + $0xc0] sm:$0xf] %v519
                  %v521 = vld [vmem:[%s421 + $0x184] sm:$0xf]
                  %522 = vst [vmem:[%s422 + $0xc4] sm:$0xf] %v521
                  %v523 = vld [vmem:[%s421 + $0x188] sm:$0xf]
                  %524 = vst [vmem:[%s422 + $0xc8] sm:$0xf] %v523
                  %v525 = vld [vmem:[%s421 + $0x18c] sm:$0xf]
                  %526 = vst [vmem:[%s422 + $0xcc] sm:$0xf] %v525
                  %v527 = vld [vmem:[%s421 + $0x190] sm:$0xf]
                  %528 = vst [vmem:[%s422 + $0xd0] sm:$0xf] %v527
                  %v529 = vld [vmem:[%s421 + $0x194] sm:$0xf]
                  %530 = vst [vmem:[%s422 + $0xd4] sm:$0xf] %v529
                  %v531 = vld [vmem:[%s421 + $0x198] sm:$0xf]
                  %532 = vst [vmem:[%s422 + $0xd8] sm:$0xf] %v531
                  %v533 = vld [vmem:[%s421 + $0x19c] sm:$0xf]
                  %534 = vst [vmem:[%s422 + $0xdc] sm:$0xf] %v533
                  %v535 = vld [vmem:[%s421 + $0x1a0] sm:$0xf]
                  %536 = vst [vmem:[%s422 + $0xe0] sm:$0xf] %v535
                  %v537 = vld [vmem:[%s421 + $0x1a4] sm:$0xf]
                  %538 = vst [vmem:[%s422 + $0xe4] sm:$0xf] %v537
                  %v539 = vld [vmem:[%s421 + $0x1a8] sm:$0xf]
                  %540 = vst [vmem:[%s422 + $0xe8] sm:$0xf] %v539
                  %v541 = vld [vmem:[%s421 + $0x1ac] sm:$0xf]
                  %542 = vst [vmem:[%s422 + $0xec] sm:$0xf] %v541
                  %v543 = vld [vmem:[%s421 + $0x1b0] sm:$0xf]
                  %544 = vst [vmem:[%s422 + $0xf0] sm:$0xf] %v543
                  %v545 = vld [vmem:[%s421 + $0x1b4] sm:$0xf]
                  %546 = vst [vmem:[%s422 + $0xf4] sm:$0xf] %v545
                  %v547 = vld [vmem:[%s421 + $0x1b8] sm:$0xf]
                  %548 = vst [vmem:[%s422 + $0xf8] sm:$0xf] %v547
                  %v549 = vld [vmem:[%s421 + $0x1bc] sm:$0xf]
                  %550 = vst [vmem:[%s422 + $0xfc] sm:$0xf] %v549
                  %v551 = vld [vmem:[%s421 + $0x200] sm:$0xf]
                  %552 = vst [vmem:[%s422 + $0x100] sm:$0xf] %v551
                  %v553 = vld [vmem:[%s421 + $0x204] sm:$0xf]
                  %554 = vst [vmem:[%s422 + $0x104] sm:$0xf] %v553
                  %v555 = vld [vmem:[%s421 + $0x208] sm:$0xf]
                  %556 = vst [vmem:[%s422 + $0x108] sm:$0xf] %v555
                  %v557 = vld [vmem:[%s421 + $0x20c] sm:$0xf]
                  %558 = vst [vmem:[%s422 + $0x10c] sm:$0xf] %v557
                  %v559 = vld [vmem:[%s421 + $0x210] sm:$0xf]
                  %560 = vst [vmem:[%s422 + $0x110] sm:$0xf] %v559
                  %v561 = vld [vmem:[%s421 + $0x214] sm:$0xf]
                  %562 = vst [vmem:[%s422 + $0x114] sm:$0xf] %v561
                  %v563 = vld [vmem:[%s421 + $0x218] sm:$0xf]
                  %564 = vst [vmem:[%s422 + $0x118] sm:$0xf] %v563
                  %v565 = vld [vmem:[%s421 + $0x21c] sm:$0xf]
                  %566 = vst [vmem:[%s422 + $0x11c] sm:$0xf] %v565
                  %v567 = vld [vmem:[%s421 + $0x220] sm:$0xf]
                  %568 = vst [vmem:[%s422 + $0x120] sm:$0xf] %v567
                  %v569 = vld [vmem:[%s421 + $0x224] sm:$0xf]
                  %570 = vst [vmem:[%s422 + $0x124] sm:$0xf] %v569
                  %v571 = vld [vmem:[%s421 + $0x228] sm:$0xf]
                  %572 = vst [vmem:[%s422 + $0x128] sm:$0xf] %v571
                  %v573 = vld [vmem:[%s421 + $0x22c] sm:$0xf]
                  %574 = vst [vmem:[%s422 + $0x12c] sm:$0xf] %v573
                  %v575 = vld [vmem:[%s421 + $0x230] sm:$0xf]
                  %576 = vst [vmem:[%s422 + $0x130] sm:$0xf] %v575
                  %v577 = vld [vmem:[%s421 + $0x234] sm:$0xf]
                  %578 = vst [vmem:[%s422 + $0x134] sm:$0xf] %v577
                  %v579 = vld [vmem:[%s421 + $0x238] sm:$0xf]
                  %580 = vst [vmem:[%s422 + $0x138] sm:$0xf] %v579
                  %v581 = vld [vmem:[%s421 + $0x23c] sm:$0xf]
                  %582 = vst [vmem:[%s422 + $0x13c] sm:$0xf] %v581
                  %v583 = vld [vmem:[%s421 + $0x280] sm:$0xf]
                  %584 = vst [vmem:[%s422 + $0x140] sm:$0xf] %v583
                  %v585 = vld [vmem:[%s421 + $0x284] sm:$0xf]
                  %586 = vst [vmem:[%s422 + $0x144] sm:$0xf] %v585
                  %v587 = vld [vmem:[%s421 + $0x288] sm:$0xf]
                  %588 = vst [vmem:[%s422 + $0x148] sm:$0xf] %v587
                  %v589 = vld [vmem:[%s421 + $0x28c] sm:$0xf]
                  %590 = vst [vmem:[%s422 + $0x14c] sm:$0xf] %v589
                  %v591 = vld [vmem:[%s421 + $0x290] sm:$0xf]
                  %592 = vst [vmem:[%s422 + $0x150] sm:$0xf] %v591
                  %v593 = vld [vmem:[%s421 + $0x294] sm:$0xf]
                  %594 = vst [vmem:[%s422 + $0x154] sm:$0xf] %v593
                  %v595 = vld [vmem:[%s421 + $0x298] sm:$0xf]
                  %596 = vst [vmem:[%s422 + $0x158] sm:$0xf] %v595
                  %v597 = vld [vmem:[%s421 + $0x29c] sm:$0xf]
                  %598 = vst [vmem:[%s422 + $0x15c] sm:$0xf] %v597
                  %v599 = vld [vmem:[%s421 + $0x2a0] sm:$0xf]
                  %600 = vst [vmem:[%s422 + $0x160] sm:$0xf] %v599
                  %v601 = vld [vmem:[%s421 + $0x2a4] sm:$0xf]
                  %602 = vst [vmem:[%s422 + $0x164] sm:$0xf] %v601
                  %v603 = vld [vmem:[%s421 + $0x2a8] sm:$0xf]
                  %604 = vst [vmem:[%s422 + $0x168] sm:$0xf] %v603
                  %v605 = vld [vmem:[%s421 + $0x2ac] sm:$0xf]
                  %606 = vst [vmem:[%s422 + $0x16c] sm:$0xf] %v605
                  %v607 = vld [vmem:[%s421 + $0x2b0] sm:$0xf]
                  %608 = vst [vmem:[%s422 + $0x170] sm:$0xf] %v607
                  %v609 = vld [vmem:[%s421 + $0x2b4] sm:$0xf]
                  %610 = vst [vmem:[%s422 + $0x174] sm:$0xf] %v609
                  %v611 = vld [vmem:[%s421 + $0x2b8] sm:$0xf]
                  %612 = vst [vmem:[%s422 + $0x178] sm:$0xf] %v611
                  %v613 = vld [vmem:[%s421 + $0x2bc] sm:$0xf]
                  %614 = vst [vmem:[%s422 + $0x17c] sm:$0xf] %v613
                  %v615 = vld [vmem:[%s421 + $0x300] sm:$0xf]
                  %616 = vst [vmem:[%s422 + $0x180] sm:$0xf] %v615
                  %v617 = vld [vmem:[%s421 + $0x304] sm:$0xf]
                  %618 = vst [vmem:[%s422 + $0x184] sm:$0xf] %v617
                  %v619 = vld [vmem:[%s421 + $0x308] sm:$0xf]
                  %620 = vst [vmem:[%s422 + $0x188] sm:$0xf] %v619
                  %v621 = vld [vmem:[%s421 + $0x30c] sm:$0xf]
                  %622 = vst [vmem:[%s422 + $0x18c] sm:$0xf] %v621
                  %v623 = vld [vmem:[%s421 + $0x310] sm:$0xf]
                  %624 = vst [vmem:[%s422 + $0x190] sm:$0xf] %v623
                  %v625 = vld [vmem:[%s421 + $0x314] sm:$0xf]
                  %626 = vst [vmem:[%s422 + $0x194] sm:$0xf] %v625
                  %v627 = vld [vmem:[%s421 + $0x318] sm:$0xf]
                  %628 = vst [vmem:[%s422 + $0x198] sm:$0xf] %v627
                  %v629 = vld [vmem:[%s421 + $0x31c] sm:$0xf]
                  %630 = vst [vmem:[%s422 + $0x19c] sm:$0xf] %v629
                  %v631 = vld [vmem:[%s421 + $0x320] sm:$0xf]
                  %632 = vst [vmem:[%s422 + $0x1a0] sm:$0xf] %v631
                  %v633 = vld [vmem:[%s421 + $0x324] sm:$0xf]
                  %634 = vst [vmem:[%s422 + $0x1a4] sm:$0xf] %v633
                  %v635 = vld [vmem:[%s421 + $0x328] sm:$0xf]
                  %636 = vst [vmem:[%s422 + $0x1a8] sm:$0xf] %v635
                  %v637 = vld [vmem:[%s421 + $0x32c] sm:$0xf]
                  %638 = vst [vmem:[%s422 + $0x1ac] sm:$0xf] %v637
                  %v639 = vld [vmem:[%s421 + $0x330] sm:$0xf]
                  %640 = vst [vmem:[%s422 + $0x1b0] sm:$0xf] %v639
                  %v641 = vld [vmem:[%s421 + $0x334] sm:$0xf]
                  %642 = vst [vmem:[%s422 + $0x1b4] sm:$0xf] %v641
                  %v643 = vld [vmem:[%s421 + $0x338] sm:$0xf]
                  %644 = vst [vmem:[%s422 + $0x1b8] sm:$0xf] %v643
                  %v645 = vld [vmem:[%s421 + $0x33c] sm:$0xf]
                  %646 = vst [vmem:[%s422 + $0x1bc] sm:$0xf] %v645
                  %v647 = vld [vmem:[%s421 + $0x380] sm:$0xf]
                  %648 = vst [vmem:[%s422 + $0x1c0] sm:$0xf] %v647
                  %v649 = vld [vmem:[%s421 + $0x384] sm:$0xf]
                  %650 = vst [vmem:[%s422 + $0x1c4] sm:$0xf] %v649
                  %v651 = vld [vmem:[%s421 + $0x388] sm:$0xf]
                  %652 = vst [vmem:[%s422 + $0x1c8] sm:$0xf] %v651
                  %v653 = vld [vmem:[%s421 + $0x38c] sm:$0xf]
                  %654 = vst [vmem:[%s422 + $0x1cc] sm:$0xf] %v653
                  %v655 = vld [vmem:[%s421 + $0x390] sm:$0xf]
                  %656 = vst [vmem:[%s422 + $0x1d0] sm:$0xf] %v655
                  %v657 = vld [vmem:[%s421 + $0x394] sm:$0xf]
                  %658 = vst [vmem:[%s422 + $0x1d4] sm:$0xf] %v657
                  %v659 = vld [vmem:[%s421 + $0x398] sm:$0xf]
                  %660 = vst [vmem:[%s422 + $0x1d8] sm:$0xf] %v659
                  %v661 = vld [vmem:[%s421 + $0x39c] sm:$0xf]
                  %662 = vst [vmem:[%s422 + $0x1dc] sm:$0xf] %v661
                  %v663 = vld [vmem:[%s421 + $0x3a0] sm:$0xf]
                  %664 = vst [vmem:[%s422 + $0x1e0] sm:$0xf] %v663
                  %v665 = vld [vmem:[%s421 + $0x3a4] sm:$0xf]
                  %666 = vst [vmem:[%s422 + $0x1e4] sm:$0xf] %v665
                  %v667 = vld [vmem:[%s421 + $0x3a8] sm:$0xf]
                  %668 = vst [vmem:[%s422 + $0x1e8] sm:$0xf] %v667
                  %v669 = vld [vmem:[%s421 + $0x3ac] sm:$0xf]
                  %670 = vst [vmem:[%s422 + $0x1ec] sm:$0xf] %v669
                  %v671 = vld [vmem:[%s421 + $0x3b0] sm:$0xf]
                  %672 = vst [vmem:[%s422 + $0x1f0] sm:$0xf] %v671
                  %v673 = vld [vmem:[%s421 + $0x3b4] sm:$0xf]
                  %674 = vst [vmem:[%s422 + $0x1f4] sm:$0xf] %v673
                  %v675 = vld [vmem:[%s421 + $0x3b8] sm:$0xf]
                  %676 = vst [vmem:[%s422 + $0x1f8] sm:$0xf] %v675
                  %v677 = vld [vmem:[%s421 + $0x3bc] sm:$0xf]
                  %678 = vst [vmem:[%s422 + $0x1fc] sm:$0xf] %v677
                $region63: #{cnn_to_rnn_forward.7} parent=50 // loop_footer
                  %s420 = sadd.s32 1, %s416
                $region64: #{cnn_to_rnn_forward.7} parent=50 // loop_footer_branch
                  %415 = sbr.rel target = $region60
                $region65: #{cnn_to_rnn_forward.7} parent=50 // loop_exit
                  _
              $region51: #{cnn_to_rnn_forward.7} parent=35 // pred_fallthru
                _
            $region36: #{cnn_to_rnn_forward.7} parent=31 // pred_fallthru
              _
            // Predicated region
            $region37: #{cnn_to_rnn_forward.7} parent=31 // pred_check
              _
            $region38: #{cnn_to_rnn_forward.7} parent=31 // pred_check_branch
              %138 = sbr.rel (0) target = $region40
            $region39: #{cnn_to_rnn_forward.7} parent=31 // pred_region
              loop: start=0, step=1, limit=1
              $region41: #{cnn_to_rnn_forward.7} parent=39 // loop_pre_header
                _
              $region42: #{cnn_to_rnn_forward.7} parent=39 // loop_header
                %s141 = sphi 0, %s145
                %p142 = scmp.ge.s32.totalorder %s141, 1
                %s146 = sphi %s132, %s132
                %s147 = sphi %s129, %s129
              $region43: #{cnn_to_rnn_forward.7} parent=39 // loop_header_branch
                %144 = sbr.rel (%p142) target = $region47
              $region44: #{cnn_to_rnn_forward.7} parent=39 // loop_body
                %v148 = vld [vmem:[%s146] sm:$0xf]
                %149 = vst [vmem:[%s147] sm:$0xf] %v148
                %v150 = vld [vmem:[%s146 + $0x4] sm:$0xf]
                %151 = vst [vmem:[%s147 + $0x4] sm:$0xf] %v150
                %v152 = vld [vmem:[%s146 + $0x8] sm:$0xf]
                %153 = vst [vmem:[%s147 + $0x8] sm:$0xf] %v152
                %v154 = vld [vmem:[%s146 + $0xc] sm:$0xf]
                %155 = vst [vmem:[%s147 + $0xc] sm:$0xf] %v154
                %v156 = vld [vmem:[%s146 + $0x10] sm:$0xf]
                %157 = vst [vmem:[%s147 + $0x10] sm:$0xf] %v156
                %v158 = vld [vmem:[%s146 + $0x14] sm:$0xf]
                %159 = vst [vmem:[%s147 + $0x14] sm:$0xf] %v158
                %v160 = vld [vmem:[%s146 + $0x18] sm:$0xf]
                %161 = vst [vmem:[%s147 + $0x18] sm:$0xf] %v160
                %v162 = vld [vmem:[%s146 + $0x1c] sm:$0xf]
                %163 = vst [vmem:[%s147 + $0x1c] sm:$0xf] %v162
                %v164 = vld [vmem:[%s146 + $0x20] sm:$0xf]
                %165 = vst [vmem:[%s147 + $0x20] sm:$0xf] %v164
                %v166 = vld [vmem:[%s146 + $0x24] sm:$0xf]
                %167 = vst [vmem:[%s147 + $0x24] sm:$0xf] %v166
                %v168 = vld [vmem:[%s146 + $0x28] sm:$0xf]
                %169 = vst [vmem:[%s147 + $0x28] sm:$0xf] %v168
                %v170 = vld [vmem:[%s146 + $0x2c] sm:$0xf]
                %171 = vst [vmem:[%s147 + $0x2c] sm:$0xf] %v170
                %v172 = vld [vmem:[%s146 + $0x30] sm:$0xf]
                %173 = vst [vmem:[%s147 + $0x30] sm:$0xf] %v172
                %v174 = vld [vmem:[%s146 + $0x34] sm:$0xf]
                %175 = vst [vmem:[%s147 + $0x34] sm:$0xf] %v174
                %v176 = vld [vmem:[%s146 + $0x38] sm:$0xf]
                %177 = vst [vmem:[%s147 + $0x38] sm:$0xf] %v176
                %v178 = vld [vmem:[%s146 + $0x3c] sm:$0xf]
                %179 = vst [vmem:[%s147 + $0x3c] sm:$0xf] %v178
                %v180 = vld [vmem:[%s146 + $0x80] sm:$0xf]
                %181 = vst [vmem:[%s147 + $0x40] sm:$0xf] %v180
                %v182 = vld [vmem:[%s146 + $0x84] sm:$0xf]
                %183 = vst [vmem:[%s147 + $0x44] sm:$0xf] %v182
                %v184 = vld [vmem:[%s146 + $0x88] sm:$0xf]
                %185 = vst [vmem:[%s147 + $0x48] sm:$0xf] %v184
                %v186 = vld [vmem:[%s146 + $0x8c] sm:$0xf]
                %187 = vst [vmem:[%s147 + $0x4c] sm:$0xf] %v186
                %v188 = vld [vmem:[%s146 + $0x90] sm:$0xf]
                %189 = vst [vmem:[%s147 + $0x50] sm:$0xf] %v188
                %v190 = vld [vmem:[%s146 + $0x94] sm:$0xf]
                %191 = vst [vmem:[%s147 + $0x54] sm:$0xf] %v190
                %v192 = vld [vmem:[%s146 + $0x98] sm:$0xf]
                %193 = vst [vmem:[%s147 + $0x58] sm:$0xf] %v192
                %v194 = vld [vmem:[%s146 + $0x9c] sm:$0xf]
                %195 = vst [vmem:[%s147 + $0x5c] sm:$0xf] %v194
                %v196 = vld [vmem:[%s146 + $0xa0] sm:$0xf]
                %197 = vst [vmem:[%s147 + $0x60] sm:$0xf] %v196
                %v198 = vld [vmem:[%s146 + $0xa4] sm:$0xf]
                %199 = vst [vmem:[%s147 + $0x64] sm:$0xf] %v198
                %v200 = vld [vmem:[%s146 + $0xa8] sm:$0xf]
                %201 = vst [vmem:[%s147 + $0x68] sm:$0xf] %v200
                %v202 = vld [vmem:[%s146 + $0xac] sm:$0xf]
                %203 = vst [vmem:[%s147 + $0x6c] sm:$0xf] %v202
                %v204 = vld [vmem:[%s146 + $0xb0] sm:$0xf]
                %205 = vst [vmem:[%s147 + $0x70] sm:$0xf] %v204
                %v206 = vld [vmem:[%s146 + $0xb4] sm:$0xf]
                %207 = vst [vmem:[%s147 + $0x74] sm:$0xf] %v206
                %v208 = vld [vmem:[%s146 + $0xb8] sm:$0xf]
                %209 = vst [vmem:[%s147 + $0x78] sm:$0xf] %v208
                %v210 = vld [vmem:[%s146 + $0xbc] sm:$0xf]
                %211 = vst [vmem:[%s147 + $0x7c] sm:$0xf] %v210
                %v212 = vld [vmem:[%s146 + $0x100] sm:$0xf]
                %213 = vst [vmem:[%s147 + $0x80] sm:$0xf] %v212
                %v214 = vld [vmem:[%s146 + $0x104] sm:$0xf]
                %215 = vst [vmem:[%s147 + $0x84] sm:$0xf] %v214
                %v216 = vld [vmem:[%s146 + $0x108] sm:$0xf]
                %217 = vst [vmem:[%s147 + $0x88] sm:$0xf] %v216
                %v218 = vld [vmem:[%s146 + $0x10c] sm:$0xf]
                %219 = vst [vmem:[%s147 + $0x8c] sm:$0xf] %v218
                %v220 = vld [vmem:[%s146 + $0x110] sm:$0xf]
                %221 = vst [vmem:[%s147 + $0x90] sm:$0xf] %v220
                %v222 = vld [vmem:[%s146 + $0x114] sm:$0xf]
                %223 = vst [vmem:[%s147 + $0x94] sm:$0xf] %v222
                %v224 = vld [vmem:[%s146 + $0x118] sm:$0xf]
                %225 = vst [vmem:[%s147 + $0x98] sm:$0xf] %v224
                %v226 = vld [vmem:[%s146 + $0x11c] sm:$0xf]
                %227 = vst [vmem:[%s147 + $0x9c] sm:$0xf] %v226
                %v228 = vld [vmem:[%s146 + $0x120] sm:$0xf]
                %229 = vst [vmem:[%s147 + $0xa0] sm:$0xf] %v228
                %v230 = vld [vmem:[%s146 + $0x124] sm:$0xf]
                %231 = vst [vmem:[%s147 + $0xa4] sm:$0xf] %v230
                %v232 = vld [vmem:[%s146 + $0x128] sm:$0xf]
                %233 = vst [vmem:[%s147 + $0xa8] sm:$0xf] %v232
                %v234 = vld [vmem:[%s146 + $0x12c] sm:$0xf]
                %235 = vst [vmem:[%s147 + $0xac] sm:$0xf] %v234
                %v236 = vld [vmem:[%s146 + $0x130] sm:$0xf]
                %237 = vst [vmem:[%s147 + $0xb0] sm:$0xf] %v236
                %v238 = vld [vmem:[%s146 + $0x134] sm:$0xf]
                %239 = vst [vmem:[%s147 + $0xb4] sm:$0xf] %v238
                %v240 = vld [vmem:[%s146 + $0x138] sm:$0xf]
                %241 = vst [vmem:[%s147 + $0xb8] sm:$0xf] %v240
                %v242 = vld [vmem:[%s146 + $0x13c] sm:$0xf]
                %243 = vst [vmem:[%s147 + $0xbc] sm:$0xf] %v242
                %v244 = vld [vmem:[%s146 + $0x180] sm:$0xf]
                %245 = vst [vmem:[%s147 + $0xc0] sm:$0xf] %v244
                %v246 = vld [vmem:[%s146 + $0x184] sm:$0xf]
                %247 = vst [vmem:[%s147 + $0xc4] sm:$0xf] %v246
                %v248 = vld [vmem:[%s146 + $0x188] sm:$0xf]
                %249 = vst [vmem:[%s147 + $0xc8] sm:$0xf] %v248
                %v250 = vld [vmem:[%s146 + $0x18c] sm:$0xf]
                %251 = vst [vmem:[%s147 + $0xcc] sm:$0xf] %v250
                %v252 = vld [vmem:[%s146 + $0x190] sm:$0xf]
                %253 = vst [vmem:[%s147 + $0xd0] sm:$0xf] %v252
                %v254 = vld [vmem:[%s146 + $0x194] sm:$0xf]
                %255 = vst [vmem:[%s147 + $0xd4] sm:$0xf] %v254
                %v256 = vld [vmem:[%s146 + $0x198] sm:$0xf]
                %257 = vst [vmem:[%s147 + $0xd8] sm:$0xf] %v256
                %v258 = vld [vmem:[%s146 + $0x19c] sm:$0xf]
                %259 = vst [vmem:[%s147 + $0xdc] sm:$0xf] %v258
                %v260 = vld [vmem:[%s146 + $0x1a0] sm:$0xf]
                %261 = vst [vmem:[%s147 + $0xe0] sm:$0xf] %v260
                %v262 = vld [vmem:[%s146 + $0x1a4] sm:$0xf]
                %263 = vst [vmem:[%s147 + $0xe4] sm:$0xf] %v262
                %v264 = vld [vmem:[%s146 + $0x1a8] sm:$0xf]
                %265 = vst [vmem:[%s147 + $0xe8] sm:$0xf] %v264
                %v266 = vld [vmem:[%s146 + $0x1ac] sm:$0xf]
                %267 = vst [vmem:[%s147 + $0xec] sm:$0xf] %v266
                %v268 = vld [vmem:[%s146 + $0x1b0] sm:$0xf]
                %269 = vst [vmem:[%s147 + $0xf0] sm:$0xf] %v268
                %v270 = vld [vmem:[%s146 + $0x1b4] sm:$0xf]
                %271 = vst [vmem:[%s147 + $0xf4] sm:$0xf] %v270
                %v272 = vld [vmem:[%s146 + $0x1b8] sm:$0xf]
                %273 = vst [vmem:[%s147 + $0xf8] sm:$0xf] %v272
                %v274 = vld [vmem:[%s146 + $0x1bc] sm:$0xf]
                %275 = vst [vmem:[%s147 + $0xfc] sm:$0xf] %v274
                %v276 = vld [vmem:[%s146 + $0x200] sm:$0xf]
                %277 = vst [vmem:[%s147 + $0x100] sm:$0xf] %v276
                %v278 = vld [vmem:[%s146 + $0x204] sm:$0xf]
                %279 = vst [vmem:[%s147 + $0x104] sm:$0xf] %v278
                %v280 = vld [vmem:[%s146 + $0x208] sm:$0xf]
                %281 = vst [vmem:[%s147 + $0x108] sm:$0xf] %v280
                %v282 = vld [vmem:[%s146 + $0x20c] sm:$0xf]
                %283 = vst [vmem:[%s147 + $0x10c] sm:$0xf] %v282
                %v284 = vld [vmem:[%s146 + $0x210] sm:$0xf]
                %285 = vst [vmem:[%s147 + $0x110] sm:$0xf] %v284
                %v286 = vld [vmem:[%s146 + $0x214] sm:$0xf]
                %287 = vst [vmem:[%s147 + $0x114] sm:$0xf] %v286
                %v288 = vld [vmem:[%s146 + $0x218] sm:$0xf]
                %289 = vst [vmem:[%s147 + $0x118] sm:$0xf] %v288
                %v290 = vld [vmem:[%s146 + $0x21c] sm:$0xf]
                %291 = vst [vmem:[%s147 + $0x11c] sm:$0xf] %v290
                %v292 = vld [vmem:[%s146 + $0x220] sm:$0xf]
                %293 = vst [vmem:[%s147 + $0x120] sm:$0xf] %v292
                %v294 = vld [vmem:[%s146 + $0x224] sm:$0xf]
                %295 = vst [vmem:[%s147 + $0x124] sm:$0xf] %v294
                %v296 = vld [vmem:[%s146 + $0x228] sm:$0xf]
                %297 = vst [vmem:[%s147 + $0x128] sm:$0xf] %v296
                %v298 = vld [vmem:[%s146 + $0x22c] sm:$0xf]
                %299 = vst [vmem:[%s147 + $0x12c] sm:$0xf] %v298
                %v300 = vld [vmem:[%s146 + $0x230] sm:$0xf]
                %301 = vst [vmem:[%s147 + $0x130] sm:$0xf] %v300
                %v302 = vld [vmem:[%s146 + $0x234] sm:$0xf]
                %303 = vst [vmem:[%s147 + $0x134] sm:$0xf] %v302
                %v304 = vld [vmem:[%s146 + $0x238] sm:$0xf]
                %305 = vst [vmem:[%s147 + $0x138] sm:$0xf] %v304
                %v306 = vld [vmem:[%s146 + $0x23c] sm:$0xf]
                %307 = vst [vmem:[%s147 + $0x13c] sm:$0xf] %v306
                %v308 = vld [vmem:[%s146 + $0x280] sm:$0xf]
                %309 = vst [vmem:[%s147 + $0x140] sm:$0xf] %v308
                %v310 = vld [vmem:[%s146 + $0x284] sm:$0xf]
                %311 = vst [vmem:[%s147 + $0x144] sm:$0xf] %v310
                %v312 = vld [vmem:[%s146 + $0x288] sm:$0xf]
                %313 = vst [vmem:[%s147 + $0x148] sm:$0xf] %v312
                %v314 = vld [vmem:[%s146 + $0x28c] sm:$0xf]
                %315 = vst [vmem:[%s147 + $0x14c] sm:$0xf] %v314
                %v316 = vld [vmem:[%s146 + $0x290] sm:$0xf]
                %317 = vst [vmem:[%s147 + $0x150] sm:$0xf] %v316
                %v318 = vld [vmem:[%s146 + $0x294] sm:$0xf]
                %319 = vst [vmem:[%s147 + $0x154] sm:$0xf] %v318
                %v320 = vld [vmem:[%s146 + $0x298] sm:$0xf]
                %321 = vst [vmem:[%s147 + $0x158] sm:$0xf] %v320
                %v322 = vld [vmem:[%s146 + $0x29c] sm:$0xf]
                %323 = vst [vmem:[%s147 + $0x15c] sm:$0xf] %v322
                %v324 = vld [vmem:[%s146 + $0x2a0] sm:$0xf]
                %325 = vst [vmem:[%s147 + $0x160] sm:$0xf] %v324
                %v326 = vld [vmem:[%s146 + $0x2a4] sm:$0xf]
                %327 = vst [vmem:[%s147 + $0x164] sm:$0xf] %v326
                %v328 = vld [vmem:[%s146 + $0x2a8] sm:$0xf]
                %329 = vst [vmem:[%s147 + $0x168] sm:$0xf] %v328
                %v330 = vld [vmem:[%s146 + $0x2ac] sm:$0xf]
                %331 = vst [vmem:[%s147 + $0x16c] sm:$0xf] %v330
                %v332 = vld [vmem:[%s146 + $0x2b0] sm:$0xf]
                %333 = vst [vmem:[%s147 + $0x170] sm:$0xf] %v332
                %v334 = vld [vmem:[%s146 + $0x2b4] sm:$0xf]
                %335 = vst [vmem:[%s147 + $0x174] sm:$0xf] %v334
                %v336 = vld [vmem:[%s146 + $0x2b8] sm:$0xf]
                %337 = vst [vmem:[%s147 + $0x178] sm:$0xf] %v336
                %v338 = vld [vmem:[%s146 + $0x2bc] sm:$0xf]
                %339 = vst [vmem:[%s147 + $0x17c] sm:$0xf] %v338
                %v340 = vld [vmem:[%s146 + $0x300] sm:$0xf]
                %341 = vst [vmem:[%s147 + $0x180] sm:$0xf] %v340
                %v342 = vld [vmem:[%s146 + $0x304] sm:$0xf]
                %343 = vst [vmem:[%s147 + $0x184] sm:$0xf] %v342
                %v344 = vld [vmem:[%s146 + $0x308] sm:$0xf]
                %345 = vst [vmem:[%s147 + $0x188] sm:$0xf] %v344
                %v346 = vld [vmem:[%s146 + $0x30c] sm:$0xf]
                %347 = vst [vmem:[%s147 + $0x18c] sm:$0xf] %v346
                %v348 = vld [vmem:[%s146 + $0x310] sm:$0xf]
                %349 = vst [vmem:[%s147 + $0x190] sm:$0xf] %v348
                %v350 = vld [vmem:[%s146 + $0x314] sm:$0xf]
                %351 = vst [vmem:[%s147 + $0x194] sm:$0xf] %v350
                %v352 = vld [vmem:[%s146 + $0x318] sm:$0xf]
                %353 = vst [vmem:[%s147 + $0x198] sm:$0xf] %v352
                %v354 = vld [vmem:[%s146 + $0x31c] sm:$0xf]
                %355 = vst [vmem:[%s147 + $0x19c] sm:$0xf] %v354
                %v356 = vld [vmem:[%s146 + $0x320] sm:$0xf]
                %357 = vst [vmem:[%s147 + $0x1a0] sm:$0xf] %v356
                %v358 = vld [vmem:[%s146 + $0x324] sm:$0xf]
                %359 = vst [vmem:[%s147 + $0x1a4] sm:$0xf] %v358
                %v360 = vld [vmem:[%s146 + $0x328] sm:$0xf]
                %361 = vst [vmem:[%s147 + $0x1a8] sm:$0xf] %v360
                %v362 = vld [vmem:[%s146 + $0x32c] sm:$0xf]
                %363 = vst [vmem:[%s147 + $0x1ac] sm:$0xf] %v362
                %v364 = vld [vmem:[%s146 + $0x330] sm:$0xf]
                %365 = vst [vmem:[%s147 + $0x1b0] sm:$0xf] %v364
                %v366 = vld [vmem:[%s146 + $0x334] sm:$0xf]
                %367 = vst [vmem:[%s147 + $0x1b4] sm:$0xf] %v366
                %v368 = vld [vmem:[%s146 + $0x338] sm:$0xf]
                %369 = vst [vmem:[%s147 + $0x1b8] sm:$0xf] %v368
                %v370 = vld [vmem:[%s146 + $0x33c] sm:$0xf]
                %371 = vst [vmem:[%s147 + $0x1bc] sm:$0xf] %v370
                %v372 = vld [vmem:[%s146 + $0x380] sm:$0xf]
                %373 = vst [vmem:[%s147 + $0x1c0] sm:$0xf] %v372
                %v374 = vld [vmem:[%s146 + $0x384] sm:$0xf]
                %375 = vst [vmem:[%s147 + $0x1c4] sm:$0xf] %v374
                %v376 = vld [vmem:[%s146 + $0x388] sm:$0xf]
                %377 = vst [vmem:[%s147 + $0x1c8] sm:$0xf] %v376
                %v378 = vld [vmem:[%s146 + $0x38c] sm:$0xf]
                %379 = vst [vmem:[%s147 + $0x1cc] sm:$0xf] %v378
                %v380 = vld [vmem:[%s146 + $0x390] sm:$0xf]
                %381 = vst [vmem:[%s147 + $0x1d0] sm:$0xf] %v380
                %v382 = vld [vmem:[%s146 + $0x394] sm:$0xf]
                %383 = vst [vmem:[%s147 + $0x1d4] sm:$0xf] %v382
                %v384 = vld [vmem:[%s146 + $0x398] sm:$0xf]
                %385 = vst [vmem:[%s147 + $0x1d8] sm:$0xf] %v384
                %v386 = vld [vmem:[%s146 + $0x39c] sm:$0xf]
                %387 = vst [vmem:[%s147 + $0x1dc] sm:$0xf] %v386
                %v388 = vld [vmem:[%s146 + $0x3a0] sm:$0xf]
                %389 = vst [vmem:[%s147 + $0x1e0] sm:$0xf] %v388
                %v390 = vld [vmem:[%s146 + $0x3a4] sm:$0xf]
                %391 = vst [vmem:[%s147 + $0x1e4] sm:$0xf] %v390
                %v392 = vld [vmem:[%s146 + $0x3a8] sm:$0xf]
                %393 = vst [vmem:[%s147 + $0x1e8] sm:$0xf] %v392
                %v394 = vld [vmem:[%s146 + $0x3ac] sm:$0xf]
                %395 = vst [vmem:[%s147 + $0x1ec] sm:$0xf] %v394
                %v396 = vld [vmem:[%s146 + $0x3b0] sm:$0xf]
                %397 = vst [vmem:[%s147 + $0x1f0] sm:$0xf] %v396
                %v398 = vld [vmem:[%s146 + $0x3b4] sm:$0xf]
                %399 = vst [vmem:[%s147 + $0x1f4] sm:$0xf] %v398
                %v400 = vld [vmem:[%s146 + $0x3b8] sm:$0xf]
                %401 = vst [vmem:[%s147 + $0x1f8] sm:$0xf] %v400
                %v402 = vld [vmem:[%s146 + $0x3bc] sm:$0xf]
                %403 = vst [vmem:[%s147 + $0x1fc] sm:$0xf] %v402
              $region45: #{cnn_to_rnn_forward.7} parent=39 // loop_footer
                %s145 = sadd.s32 1, %s141
              $region46: #{cnn_to_rnn_forward.7} parent=39 // loop_footer_branch
                %140 = sbr.rel target = $region42
              $region47: #{cnn_to_rnn_forward.7} parent=39 // loop_exit
                _
            $region40: #{cnn_to_rnn_forward.7} parent=31 // pred_fallthru
              _
          $region32: #{cnn_to_rnn_forward.7} parent=27 // pred_fallthru
            _
          %679 = vnop
        $region28: #{cnn_to_rnn_forward.7} parent=23 // pred_fallthru
          _
      $region24: #{cnn_to_rnn_forward.7} parent=5 // pred_fallthru
        _
      %p680 = scmp.le.s32.totalorder 1, %s9
      %p681 = scmp.lt.s32.totalorder %s9, 3
      %p682 = pnand %p680, %p681
      %p683 = pneg %p682
      // Predicated region
      $region66: #{cnn_to_rnn_forward.7} parent=5 // pred_check
        _
      $region67: #{cnn_to_rnn_forward.7} parent=5 // pred_check_branch
        %685 = sbr.rel (%p682) target = $region69
      $region68: #{cnn_to_rnn_forward.7} parent=5 // pred_region
        %s686 = ssub.s32 %s9, 1
        %s687 = sand.u32 %s22, 1
        %s688 = sand.u32 %s22, 1
        %s689 = smul.addr %s688, 512
        %s690 = scalar_lea.vmem [#allocation3], %s689
        // Predicated region
        $region70: #{cnn_to_rnn_forward.7} parent=68 // pred_check
          %p691 = pneg %p35
        $region71: #{cnn_to_rnn_forward.7} parent=68 // pred_check_branch
          %693 = sbr.rel (%p691) target = $region73
        $region72: #{cnn_to_rnn_forward.7} parent=68 // pred_region
          _
        $region73: #{cnn_to_rnn_forward.7} parent=68 // pred_fallthru
          _
        %s694 = sand.u32 %s22, 1
        %s695 = sand.u32 %s22, 1
        %s696 = smul.addr %s695, 512
        %s697 = scalar_lea.vmem [#allocation3], %s696
        %p698 = pneg %p35
        %p699 = pneg %p32
        %p700 = pneg %p56
        %p701 = pneg %p53
        %p702 = pneg %p77
        %p703 = pneg %p74
        %p704 = pneg %p98
        %p705 = pneg %p95
        %s706 = smul.u32 16, %s14
        %p708 = scmp.eq.s32.totalorder %s14, 0
        // Predicated region
        $region74: #{cnn_to_rnn_forward.7} parent=68 // pred_check
          %p709 = pneg %p708
        $region75: #{cnn_to_rnn_forward.7} parent=68 // pred_check_branch
          %711 = sbr.rel (%p709) target = $region77
        $region76: #{cnn_to_rnn_forward.7} parent=68 // pred_region
          %712 = vst [vmem:[#allocation2] sm:$0xff] 0.0
        $region77: #{cnn_to_rnn_forward.7} parent=68 // pred_fallthru
          _
        %v713 = vld [vmem:[%s1] sm:$0xf]
        %v714 = vld [vmem:[%s1 + $0x4] sm:$0xf]
        %v715 = vld [vmem:[%s1 + $0x8] sm:$0xf]
        %v716 = vld [vmem:[%s1 + $0xc] sm:$0xf]
        %v717 = vld [vmem:[%s1 + $0x10] sm:$0xf]
        %v718 = vld [vmem:[%s1 + $0x14] sm:$0xf]
        %v719 = vld [vmem:[%s1 + $0x18] sm:$0xf]
        %v720 = vld [vmem:[%s1 + $0x1c] sm:$0xf]
        %v721 = vld [vmem:[%s1 + $0x20] sm:$0xf]
        %v722 = vld [vmem:[%s1 + $0x24] sm:$0xf]
        %v723 = vld [vmem:[%s1 + $0x28] sm:$0xf]
        %v724 = vld [vmem:[%s1 + $0x2c] sm:$0xf]
        %v725 = vld [vmem:[%s1 + $0x30] sm:$0xf]
        %v726 = vld [vmem:[%s1 + $0x34] sm:$0xf]
        %v727 = vld [vmem:[%s1 + $0x38] sm:$0xf]
        %v728 = vld [vmem:[%s1 + $0x3c] sm:$0xf]
        %v729 = vld [vmem:[%s2] sm:$0x1]
        %v730 = vlaneseq
        %v731 = vshrl.u32 %v730, 7
        %v732 = vadd.s32 %v731, 8
        %v733 = vadd.s32 %v731, 16
        %v734 = vadd.s32 %v731, 24
        %v735 = vadd.s32 %v731, 32
        %v736 = vadd.s32 %v731, 40
        %v737 = vadd.s32 %v731, 48
        %v738 = vadd.s32 %v731, 56
        %v739 = vadd.s32 %v731, 64
        %v740 = vadd.s32 %v731, 72
        %v741 = vadd.s32 %v731, 80
        %v742 = vadd.s32 %v731, 88
        %v743 = vadd.s32 %v731, 96
        %v744 = vadd.s32 %v731, 104
        %v745 = vadd.s32 %v731, 112
        %v746 = vadd.s32 %v731, 120
        %s747 = smul.u32 %s14, 128
        %v748 = vstv %s747
        %v749 = vadd.s32 %v731, %v748
        %v750 = vadd.s32 %v732, %v748
        %v751 = vadd.s32 %v733, %v748
        %v752 = vadd.s32 %v734, %v748
        %v753 = vadd.s32 %v735, %v748
        %v754 = vadd.s32 %v736, %v748
        %v755 = vadd.s32 %v737, %v748
        %v756 = vadd.s32 %v738, %v748
        %v757 = vadd.s32 %v739, %v748
        %v758 = vadd.s32 %v740, %v748
        %v759 = vadd.s32 %v741, %v748
        %v760 = vadd.s32 %v742, %v748
        %v761 = vadd.s32 %v743, %v748
        %v762 = vadd.s32 %v744, %v748
        %v763 = vadd.s32 %v745, %v748
        %v764 = vadd.s32 %v746, %v748
        %vm765 = vcmp.lt.s32.totalorder %v749, 196
        %vm766 = vcmp.lt.s32.totalorder %v750, 196
        %vm767 = vcmp.lt.s32.totalorder %v751, 196
        %vm768 = vcmp.lt.s32.totalorder %v752, 196
        %vm769 = vcmp.lt.s32.totalorder %v753, 196
        %vm770 = vcmp.lt.s32.totalorder %v754, 196
        %vm771 = vcmp.lt.s32.totalorder %v755, 196
        %vm772 = vcmp.lt.s32.totalorder %v756, 196
        %vm773 = vcmp.lt.s32.totalorder %v757, 196
        %vm774 = vcmp.lt.s32.totalorder %v758, 196
        %vm775 = vcmp.lt.s32.totalorder %v759, 196
        %vm776 = vcmp.lt.s32.totalorder %v760, 196
        %vm777 = vcmp.lt.s32.totalorder %v761, 196
        %vm778 = vcmp.lt.s32.totalorder %v762, 196
        %vm779 = vcmp.lt.s32.totalorder %v763, 196
        %vm780 = vcmp.lt.s32.totalorder %v764, 196
        %v781 = vsel %vm765, 1, 0
        %v782 = vsel %vm766, 1, 0
        %v783 = vsel %vm767, 1, 0
        %v784 = vsel %vm768, 1, 0
        %v785 = vsel %vm769, 1, 0
        %v786 = vsel %vm770, 1, 0
        %v787 = vsel %vm771, 1, 0
        %v788 = vsel %vm772, 1, 0
        %v789 = vsel %vm773, 1, 0
        %v790 = vsel %vm774, 1, 0
        %v791 = vsel %vm775, 1, 0
        %v792 = vsel %vm776, 1, 0
        %v793 = vsel %vm777, 1, 0
        %v794 = vsel %vm778, 1, 0
        %v795 = vsel %vm779, 1, 0
        %v796 = vsel %vm780, 1, 0
        %v797 = vcvt.s32.f32 %v781
        %v798 = vcvt.s32.f32 %v782
        %v799 = vcvt.s32.f32 %v783
        %v800 = vcvt.s32.f32 %v784
        %v801 = vcvt.s32.f32 %v785
        %v802 = vcvt.s32.f32 %v786
        %v803 = vcvt.s32.f32 %v787
        %v804 = vcvt.s32.f32 %v788
        %v805 = vcvt.s32.f32 %v789
        %v806 = vcvt.s32.f32 %v790
        %v807 = vcvt.s32.f32 %v791
        %v808 = vcvt.s32.f32 %v792
        %v809 = vcvt.s32.f32 %v793
        %v810 = vcvt.s32.f32 %v794
        %v811 = vcvt.s32.f32 %v795
        %v812 = vcvt.s32.f32 %v796
        %v813 = vld [vmem:[%s690] sm:$0xf]
        %v814 = vld [vmem:[%s690 + $0x4] sm:$0xf]
        %v815 = vld [vmem:[%s690 + $0x8] sm:$0xf]
        %v816 = vld [vmem:[%s690 + $0xc] sm:$0xf]
        %v817 = vld [vmem:[%s690 + $0x10] sm:$0xf]
        %v818 = vld [vmem:[%s690 + $0x14] sm:$0xf]
        %v819 = vld [vmem:[%s690 + $0x18] sm:$0xf]
        %v820 = vld [vmem:[%s690 + $0x1c] sm:$0xf]
        %v821 = vld [vmem:[%s690 + $0x20] sm:$0xf]
        %v822 = vld [vmem:[%s690 + $0x24] sm:$0xf]
        %v823 = vld [vmem:[%s690 + $0x28] sm:$0xf]
        %v824 = vld [vmem:[%s690 + $0x2c] sm:$0xf]
        %v825 = vld [vmem:[%s690 + $0x30] sm:$0xf]
        %v826 = vld [vmem:[%s690 + $0x34] sm:$0xf]
        %v827 = vld [vmem:[%s690 + $0x38] sm:$0xf]
        %v828 = vld [vmem:[%s690 + $0x3c] sm:$0xf]
        %v830 = vlaneseq
        %v831 = vshrl.u32 %v830, 7
        %v832 = vsub.s32 0, %v831
        %v833 = vrot.slane %v729, %v832
        %v851 = vunpack.c.l.b16 %v813
        %v852 = vunpack.c.l.b16 %v814
        %v853 = vunpack.c.l.b16 %v815
        %v854 = vunpack.c.l.b16 %v816
        %v855 = vunpack.c.l.b16 %v817
        %v856 = vunpack.c.l.b16 %v818
        %v857 = vunpack.c.l.b16 %v819
        %v858 = vunpack.c.l.b16 %v820
        %v859 = vunpack.c.l.b16 %v821
        %v860 = vunpack.c.l.b16 %v822
        %v861 = vunpack.c.l.b16 %v823
        %v862 = vunpack.c.l.b16 %v824
        %v863 = vunpack.c.l.b16 %v825
        %v864 = vunpack.c.l.b16 %v826
        %v865 = vunpack.c.l.b16 %v827
        %v866 = vunpack.c.l.b16 %v828
        %v867 = vpack.c.b16 %v852, %v851
        %v868 = vpack.c.b16 %v854, %v853
        %v869 = vpack.c.b16 %v856, %v855
        %v870 = vpack.c.b16 %v858, %v857
        %v871 = vpack.c.b16 %v860, %v859
        %v872 = vpack.c.b16 %v862, %v861
        %v873 = vpack.c.b16 %v864, %v863
        %v874 = vpack.c.b16 %v866, %v865
        %v899 = vunpack.c.l.b16 %v713
        %v900 = vunpack.c.l.b16 %v714
        %v901 = vunpack.c.l.b16 %v715
        %v902 = vunpack.c.l.b16 %v716
        %v903 = vunpack.c.l.b16 %v717
        %v904 = vunpack.c.l.b16 %v718
        %v905 = vunpack.c.l.b16 %v719
        %v906 = vunpack.c.l.b16 %v720
        %v907 = vunpack.c.l.b16 %v721
        %v908 = vunpack.c.l.b16 %v722
        %v909 = vunpack.c.l.b16 %v723
        %v910 = vunpack.c.l.b16 %v724
        %v911 = vunpack.c.l.b16 %v725
        %v912 = vunpack.c.l.b16 %v726
        %v913 = vunpack.c.l.b16 %v727
        %v914 = vunpack.c.l.b16 %v728
        %v915 = vpack.c.b16 %v900, %v899
        %v916 = vpack.c.b16 %v902, %v901
        %v917 = vpack.c.b16 %v904, %v903
        %v918 = vpack.c.b16 %v906, %v905
        %v919 = vpack.c.b16 %v908, %v907
        %v920 = vpack.c.b16 %v910, %v909
        %v921 = vpack.c.b16 %v912, %v911
        %v922 = vpack.c.b16 %v914, %v913
        %931 = vmatprep.subr.bf16.mxu0 0
        %932 = vmatpush1.bf16.msra.mxu0 %v915
        %933 = vmatprep.subr.bf16.mxu0 0
        %934 = vmatpush1.bf16.msra.mxu0 %v916
        %935 = vmatprep.subr.bf16.mxu0 0
        %936 = vmatpush1.bf16.msra.mxu0 %v917
        %937 = vmatprep.subr.bf16.mxu0 0
        %938 = vmatpush1.bf16.msra.mxu0 %v918
        %939 = vmatprep.subr.bf16.mxu0 0
        %940 = vmatpush1.bf16.msra.mxu0 %v919
        %941 = vmatprep.subr.bf16.mxu0 0
        %942 = vmatpush1.bf16.msra.mxu0 %v920
        %943 = vmatprep.subr.bf16.mxu0 0
        %944 = vmatpush1.bf16.msra.mxu0 %v921
        %945 = vmatprep.subr.bf16.mxu0 0
        %946 = vmatpush1.bf16.msra.mxu0 %v922
        %947 = vmatprep.subr.bf16.mxu0 0
        %948 = vmatpush1.bf16.msra.mxu0 0
        %949 = vmatprep.subr.bf16.mxu0 0
        %950 = vmatpush1.bf16.msra.mxu0 0
        %951 = vmatprep.subr.bf16.mxu0 0
        %952 = vmatpush1.bf16.msra.mxu0 0
        %953 = vmatprep.subr.bf16.mxu0 0
        %954 = vmatpush1.bf16.msra.mxu0 0
        %955 = vmatprep.subr.bf16.mxu0 0
        %956 = vmatpush1.bf16.msra.mxu0 0
        %957 = vmatprep.subr.bf16.mxu0 0
        %958 = vmatpush1.bf16.msra.mxu0 0
        %959 = vmatprep.subr.bf16.mxu0 0
        %960 = vmatpush1.bf16.msra.mxu0 0
        %961 = vmatprep.subr.bf16.mxu0 0
        %962 = vmatpush1.bf16.msra.mxu0 0
        %963 = vmatprep.mubr.bf16.mxu0 0
        %964 = vmatmul.mubr.bf16.gmra.mrb[0].mxu0 %v867
        %v965 = vpop.f32.mrb[0].mxu0
        %v966 = vadd.f32 %v833, %v965
        %v967 = vpop.f32.mrb[0].mxu0
        %v968 = vpop.f32.mrb[0].mxu0
        %v969 = vadd.f32 %v833, %v968
        %v970 = vpop.f32.mrb[0].mxu0
        %971 = vmatprep.mubr.bf16.mxu0 0
        %972 = vmatmul.mubr.bf16.gmra.mrb[0].mxu0 %v868
        %v973 = vpop.f32.mrb[0].mxu0
        %v974 = vadd.f32 %v833, %v973
        %v975 = vpop.f32.mrb[0].mxu0
        %v976 = vpop.f32.mrb[0].mxu0
        %v977 = vadd.f32 %v833, %v976
        %v978 = vpop.f32.mrb[0].mxu0
        %979 = vmatprep.mubr.bf16.mxu0 0
        %980 = vmatmul.mubr.bf16.gmra.mrb[0].mxu0 %v869
        %v981 = vpop.f32.mrb[0].mxu0
        %v982 = vadd.f32 %v833, %v981
        %v983 = vpop.f32.mrb[0].mxu0
        %v984 = vpop.f32.mrb[0].mxu0
        %v985 = vadd.f32 %v833, %v984
        %v986 = vpop.f32.mrb[0].mxu0
        %987 = vmatprep.mubr.bf16.mxu0 0
        %988 = vmatmul.mubr.bf16.gmra.mrb[0].mxu0 %v870
        %v989 = vpop.f32.mrb[0].mxu0
        %v990 = vadd.f32 %v833, %v989
        %v991 = vpop.f32.mrb[0].mxu0
        %v992 = vpop.f32.mrb[0].mxu0
        %v993 = vadd.f32 %v833, %v992
        %v994 = vpop.f32.mrb[0].mxu0
        %995 = vmatprep.mubr.bf16.mxu0 0
        %996 = vmatmul.mubr.bf16.gmra.mrb[0].mxu0 %v871
        %v997 = vpop.f32.mrb[0].mxu0
        %v998 = vadd.f32 %v833, %v997
        %v999 = vpop.f32.mrb[0].mxu0
        %v1000 = vpop.f32.mrb[0].mxu0
        %v1001 = vadd.f32 %v833, %v1000
        %v1002 = vpop.f32.mrb[0].mxu0
        %1003 = vmatprep.mubr.bf16.mxu0 0
        %1004 = vmatmul.mubr.bf16.gmra.mrb[0].mxu0 %v872
        %v1005 = vpop.f32.mrb[0].mxu0
        %v1006 = vadd.f32 %v833, %v1005
        %v1007 = vpop.f32.mrb[0].mxu0
        %v1008 = vpop.f32.mrb[0].mxu0
        %v1009 = vadd.f32 %v833, %v1008
        %v1010 = vpop.f32.mrb[0].mxu0
        %1011 = vmatprep.mubr.bf16.mxu0 0
        %1012 = vmatmul.mubr.bf16.gmra.mrb[0].mxu0 %v873
        %v1013 = vpop.f32.mrb[0].mxu0
        %v1014 = vadd.f32 %v833, %v1013
        %v1015 = vpop.f32.mrb[0].mxu0
        %v1016 = vpop.f32.mrb[0].mxu0
        %v1017 = vadd.f32 %v833, %v1016
        %v1018 = vpop.f32.mrb[0].mxu0
        %1019 = vmatprep.mubr.bf16.mxu0 0
        %1020 = vmatmul.mubr.bf16.gmra.mrb[0].mxu0 %v874
        %v1021 = vpop.f32.mrb[0].mxu0
        %v1022 = vadd.f32 %v833, %v1021
        %v1023 = vpop.f32.mrb[0].mxu0
        %v1024 = vpop.f32.mrb[0].mxu0
        %v1025 = vadd.f32 %v833, %v1024
        %v1026 = vpop.f32.mrb[0].mxu0
        %1027 = vdwg.mxu0
        %v1028 = vmax.f32 %v966, 0.0
        %v1029 = vmax.f32 %v969, 0.0
        %v1030 = vmax.f32 %v974, 0.0
        %v1031 = vmax.f32 %v977, 0.0
        %v1032 = vmax.f32 %v982, 0.0
        %v1033 = vmax.f32 %v985, 0.0
        %v1034 = vmax.f32 %v990, 0.0
        %v1035 = vmax.f32 %v993, 0.0
        %v1036 = vmax.f32 %v998, 0.0
        %v1037 = vmax.f32 %v1001, 0.0
        %v1038 = vmax.f32 %v1006, 0.0
        %v1039 = vmax.f32 %v1009, 0.0
        %v1040 = vmax.f32 %v1014, 0.0
        %v1041 = vmax.f32 %v1017, 0.0
        %v1042 = vmax.f32 %v1022, 0.0
        %v1043 = vmax.f32 %v1025, 0.0
        %v1044 = vmul.f32 %v1028, %v797
        %v1045 = vmul.f32 %v1029, %v798
        %v1046 = vmul.f32 %v1030, %v799
        %v1047 = vmul.f32 %v1031, %v800
        %v1048 = vmul.f32 %v1032, %v801
        %v1049 = vmul.f32 %v1033, %v802
        %v1050 = vmul.f32 %v1034, %v803
        %v1051 = vmul.f32 %v1035, %v804
        %v1052 = vmul.f32 %v1036, %v805
        %v1053 = vmul.f32 %v1037, %v806
        %v1054 = vmul.f32 %v1038, %v807
        %v1055 = vmul.f32 %v1039, %v808
        %v1056 = vmul.f32 %v1040, %v809
        %v1057 = vmul.f32 %v1041, %v810
        %v1058 = vmul.f32 %v1042, %v811
        %v1059 = vmul.f32 %v1043, %v812
        %v1060 = vld [vmem:[#allocation2] sm:$0x1]
        %v1061 = vadd.f32 %v1044, %v1045
        %v1062 = vadd.f32 %v1061, %v1046
        %v1063 = vadd.f32 %v1062, %v1047
        %v1064 = vadd.f32 %v1063, %v1048
        %v1065 = vadd.f32 %v1064, %v1049
        %v1066 = vadd.f32 %v1065, %v1050
        %v1067 = vadd.f32 %v1066, %v1051
        %v1068 = vadd.f32 %v1067, %v1052
        %v1069 = vadd.f32 %v1068, %v1053
        %v1070 = vadd.f32 %v1069, %v1054
        %v1071 = vadd.f32 %v1070, %v1055
        %v1072 = vadd.f32 %v1071, %v1056
        %v1073 = vadd.f32 %v1072, %v1057
        %v1074 = vadd.f32 %v1073, %v1058
        %v1075 = vadd.f32 %v1074, %v1059
        %v1076 = vrot.slane %v1075, 4
        %v1077 = vadd.f32 %v1075, %v1076
        %v1078 = vrot.slane %v1077, 2
        %v1079 = vadd.f32 %v1077, %v1078
        %v1080 = vrot.slane %v1079, 1
        %v1081 = vadd.f32 %v1079, %v1080
        %v1082 = vadd.f32 %v1060, %v1081
        %1083 = vst [vmem:[#allocation2] sm:$0x1] %v1082
        %s1084 = scalar_lea.vmem %s690, 64 [#allocation3]
        %v1085 = vld [vmem:[%s1084] sm:$0xf]
        %v1086 = vld [vmem:[%s1084 + $0x4] sm:$0xf]
        %v1087 = vld [vmem:[%s1084 + $0x8] sm:$0xf]
        %v1088 = vld [vmem:[%s1084 + $0xc] sm:$0xf]
        %v1089 = vld [vmem:[%s1084 + $0x10] sm:$0xf]
        %v1090 = vld [vmem:[%s1084 + $0x14] sm:$0xf]
        %v1091 = vld [vmem:[%s1084 + $0x18] sm:$0xf]
        %v1092 = vld [vmem:[%s1084 + $0x1c] sm:$0xf]
        %v1093 = vld [vmem:[%s1084 + $0x20] sm:$0xf]
        %v1094 = vld [vmem:[%s1084 + $0x24] sm:$0xf]
        %v1095 = vld [vmem:[%s1084 + $0x28] sm:$0xf]
        %v1096 = vld [vmem:[%s1084 + $0x2c] sm:$0xf]
        %v1097 = vld [vmem:[%s1084 + $0x30] sm:$0xf]
        %v1098 = vld [vmem:[%s1084 + $0x34] sm:$0xf]
        %v1099 = vld [vmem:[%s1084 + $0x38] sm:$0xf]
        %v1100 = vld [vmem:[%s1084 + $0x3c] sm:$0xf]
        %v1117 = vunpack.c.l.b16 %v1085
        %v1118 = vunpack.c.l.b16 %v1086
        %v1119 = vunpack.c.l.b16 %v1087
        %v1120 = vunpack.c.l.b16 %v1088
        %v1121 = vunpack.c.l.b16 %v1089
        %v1122 = vunpack.c.l.b16 %v1090
        %v1123 = vunpack.c.l.b16 %v1091
        %v1124 = vunpack.c.l.b16 %v1092
        %v1125 = vunpack.c.l.b16 %v1093
        %v1126 = vunpack.c.l.b16 %v1094
        %v1127 = vunpack.c.l.b16 %v1095
        %v1128 = vunpack.c.l.b16 %v1096
        %v1129 = vunpack.c.l.b16 %v1097
        %v1130 = vunpack.c.l.b16 %v1098
        %v1131 = vunpack.c.l.b16 %v1099
        %v1132 = vunpack.c.l.b16 %v1100
        %v1133 = vpack.c.b16 %v1118, %v1117
        %v1134 = vpack.c.b16 %v1120, %v1119
        %v1135 = vpack.c.b16 %v1122, %v1121
        %v1136 = vpack.c.b16 %v1124, %v1123
        %v1137 = vpack.c.b16 %v1126, %v1125
        %v1138 = vpack.c.b16 %v1128, %v1127
        %v1139 = vpack.c.b16 %v1130, %v1129
        %v1140 = vpack.c.b16 %v1132, %v1131
        %1149 = vmatprep.subr.bf16.mxu0 0
        %1150 = vmatpush1.bf16.msra.mxu0 %v915
        %1151 = vmatprep.subr.bf16.mxu0 0
        %1152 = vmatpush1.bf16.msra.mxu0 %v916
        %1153 = vmatprep.subr.bf16.mxu0 0
        %1154 = vmatpush1.bf16.msra.mxu0 %v917
        %1155 = vmatprep.subr.bf16.mxu0 0
        %1156 = vmatpush1.bf16.msra.mxu0 %v918
        %1157 = vmatprep.subr.bf16.mxu0 0
        %1158 = vmatpush1.bf16.msra.mxu0 %v919
        %1159 = vmatprep.subr.bf16.mxu0 0
        %1160 = vmatpush1.bf16.msra.mxu0 %v920
        %1161 = vmatprep.subr.bf16.mxu0 0
        %1162 = vmatpush1.bf16.msra.mxu0 %v921
        %1163 = vmatprep.subr.bf16.mxu0 0
        %1164 = vmatpush1.bf16.msra.mxu0 %v922
        %1165 = vmatprep.subr.bf16.mxu0 0
        %1166 = vmatpush1.bf16.msra.mxu0 0
        %1167 = vmatprep.subr.bf16.mxu0 0
        %1168 = vmatpush1.bf16.msra.mxu0 0
        %1169 = vmatprep.subr.bf16.mxu0 0
        %1170 = vmatpush1.bf16.msra.mxu0 0
        %1171 = vmatprep.subr.bf16.mxu0 0
        %1172 = vmatpush1.bf16.msra.mxu0 0
        %1173 = vmatprep.subr.bf16.mxu0 0
        %1174 = vmatpush1.bf16.msra.mxu0 0
        %1175 = vmatprep.subr.bf16.mxu0 0
        %1176 = vmatpush1.bf16.msra.mxu0 0
        %1177 = vmatprep.subr.bf16.mxu0 0
        %1178 = vmatpush1.bf16.msra.mxu0 0
        %1179 = vmatprep.subr.bf16.mxu0 0
        %1180 = vmatpush1.bf16.msra.mxu0 0
        %1181 = vmatprep.mubr.bf16.mxu0 0
        %1182 = vmatmul.mubr.bf16.gmra.mrb[0].mxu0 %v1133
        %v1183 = vpop.f32.mrb[0].mxu0
        %v1184 = vadd.f32 %v833, %v1183
        %v1185 = vpop.f32.mrb[0].mxu0
        %v1186 = vpop.f32.mrb[0].mxu0
        %v1187 = vadd.f32 %v833, %v1186
        %v1188 = vpop.f32.mrb[0].mxu0
        %1189 = vmatprep.mubr.bf16.mxu0 0
        %1190 = vmatmul.mubr.bf16.gmra.mrb[0].mxu0 %v1134
        %v1191 = vpop.f32.mrb[0].mxu0
        %v1192 = vadd.f32 %v833, %v1191
        %v1193 = vpop.f32.mrb[0].mxu0
        %v1194 = vpop.f32.mrb[0].mxu0
        %v1195 = vadd.f32 %v833, %v1194
        %v1196 = vpop.f32.mrb[0].mxu0
        %1197 = vmatprep.mubr.bf16.mxu0 0
        %1198 = vmatmul.mubr.bf16.gmra.mrb[0].mxu0 %v1135
        %v1199 = vpop.f32.mrb[0].mxu0
        %v1200 = vadd.f32 %v833, %v1199
        %v1201 = vpop.f32.mrb[0].mxu0
        %v1202 = vpop.f32.mrb[0].mxu0
        %v1203 = vadd.f32 %v833, %v1202
        %v1204 = vpop.f32.mrb[0].mxu0
        %1205 = vmatprep.mubr.bf16.mxu0 0
        %1206 = vmatmul.mubr.bf16.gmra.mrb[0].mxu0 %v1136
        %v1207 = vpop.f32.mrb[0].mxu0
        %v1208 = vadd.f32 %v833, %v1207
        %v1209 = vpop.f32.mrb[0].mxu0
        %v1210 = vpop.f32.mrb[0].mxu0
        %v1211 = vadd.f32 %v833, %v1210
        %v1212 = vpop.f32.mrb[0].mxu0
        %1213 = vmatprep.mubr.bf16.mxu0 0
        %1214 = vmatmul.mubr.bf16.gmra.mrb[0].mxu0 %v1137
        %v1215 = vpop.f32.mrb[0].mxu0
        %v1216 = vadd.f32 %v833, %v1215
        %v1217 = vpop.f32.mrb[0].mxu0
        %v1218 = vpop.f32.mrb[0].mxu0
        %v1219 = vadd.f32 %v833, %v1218
        %v1220 = vpop.f32.mrb[0].mxu0
        %1221 = vmatprep.mubr.bf16.mxu0 0
        %1222 = vmatmul.mubr.bf16.gmra.mrb[0].mxu0 %v1138
        %v1223 = vpop.f32.mrb[0].mxu0
        %v1224 = vadd.f32 %v833, %v1223
        %v1225 = vpop.f32.mrb[0].mxu0
        %v1226 = vpop.f32.mrb[0].mxu0
        %v1227 = vadd.f32 %v833, %v1226
        %v1228 = vpop.f32.mrb[0].mxu0
        %1229 = vmatprep.mubr.bf16.mxu0 0
        %1230 = vmatmul.mubr.bf16.gmra.mrb[0].mxu0 %v1139
        %v1231 = vpop.f32.mrb[0].mxu0
        %v1232 = vadd.f32 %v833, %v1231
        %v1233 = vpop.f32.mrb[0].mxu0
        %v1234 = vpop.f32.mrb[0].mxu0
        %v1235 = vadd.f32 %v833, %v1234
        %v1236 = vpop.f32.mrb[0].mxu0
        %1237 = vmatprep.mubr.bf16.mxu0 0
        %1238 = vmatmul.mubr.bf16.gmra.mrb[0].mxu0 %v1140
        %v1239 = vpop.f32.mrb[0].mxu0
        %v1240 = vadd.f32 %v833, %v1239
        %v1241 = vpop.f32.mrb[0].mxu0
        %v1242 = vpop.f32.mrb[0].mxu0
        %v1243 = vadd.f32 %v833, %v1242
        %v1244 = vpop.f32.mrb[0].mxu0
        %1245 = vdwg.mxu0
        %v1246 = vmax.f32 %v1184, 0.0
        %v1247 = vmax.f32 %v1187, 0.0
        %v1248 = vmax.f32 %v1192, 0.0
        %v1249 = vmax.f32 %v1195, 0.0
        %v1250 = vmax.f32 %v1200, 0.0
        %v1251 = vmax.f32 %v1203, 0.0
        %v1252 = vmax.f32 %v1208, 0.0
        %v1253 = vmax.f32 %v1211, 0.0
        %v1254 = vmax.f32 %v1216, 0.0
        %v1255 = vmax.f32 %v1219, 0.0
        %v1256 = vmax.f32 %v1224, 0.0
        %v1257 = vmax.f32 %v1227, 0.0
        %v1258 = vmax.f32 %v1232, 0.0
        %v1259 = vmax.f32 %v1235, 0.0
        %v1260 = vmax.f32 %v1240, 0.0
        %v1261 = vmax.f32 %v1243, 0.0
        %v1262 = vmul.f32 %v1246, %v797
        %v1263 = vmul.f32 %v1247, %v798
        %v1264 = vmul.f32 %v1248, %v799
        %v1265 = vmul.f32 %v1249, %v800
        %v1266 = vmul.f32 %v1250, %v801
        %v1267 = vmul.f32 %v1251, %v802
        %v1268 = vmul.f32 %v1252, %v803
        %v1269 = vmul.f32 %v1253, %v804
        %v1270 = vmul.f32 %v1254, %v805
        %v1271 = vmul.f32 %v1255, %v806
        %v1272 = vmul.f32 %v1256, %v807
        %v1273 = vmul.f32 %v1257, %v808
        %v1274 = vmul.f32 %v1258, %v809
        %v1275 = vmul.f32 %v1259, %v810
        %v1276 = vmul.f32 %v1260, %v811
        %v1277 = vmul.f32 %v1261, %v812
        %v1278 = vld [vmem:[#allocation2 + $0x1] sm:$0x1]
        %v1279 = vadd.f32 %v1262, %v1263
        %v1280 = vadd.f32 %v1279, %v1264
        %v1281 = vadd.f32 %v1280, %v1265
        %v1282 = vadd.f32 %v1281, %v1266
        %v1283 = vadd.f32 %v1282, %v1267
        %v1284 = vadd.f32 %v1283, %v1268
        %v1285 = vadd.f32 %v1284, %v1269
        %v1286 = vadd.f32 %v1285, %v1270
        %v1287 = vadd.f32 %v1286, %v1271
        %v1288 = vadd.f32 %v1287, %v1272
        %v1289 = vadd.f32 %v1288, %v1273
        %v1290 = vadd.f32 %v1289, %v1274
        %v1291 = vadd.f32 %v1290, %v1275
        %v1292 = vadd.f32 %v1291, %v1276
        %v1293 = vadd.f32 %v1292, %v1277
        %v1294 = vrot.slane %v1293, 4
        %v1295 = vadd.f32 %v1293, %v1294
        %v1296 = vrot.slane %v1295, 2
        %v1297 = vadd.f32 %v1295, %v1296
        %v1298 = vrot.slane %v1297, 1
        %v1299 = vadd.f32 %v1297, %v1298
        %v1300 = vadd.f32 %v1278, %v1299
        %1301 = vst [vmem:[#allocation2 + $0x1] sm:$0x1] %v1300
        %s1302 = scalar_lea.vmem %s690, 128 [#allocation3]
        %v1303 = vld [vmem:[%s1302] sm:$0xf]
        %v1304 = vld [vmem:[%s1302 + $0x4] sm:$0xf]
        %v1305 = vld [vmem:[%s1302 + $0x8] sm:$0xf]
        %v1306 = vld [vmem:[%s1302 + $0xc] sm:$0xf]
        %v1307 = vld [vmem:[%s1302 + $0x10] sm:$0xf]
        %v1308 = vld [vmem:[%s1302 + $0x14] sm:$0xf]
        %v1309 = vld [vmem:[%s1302 + $0x18] sm:$0xf]
        %v1310 = vld [vmem:[%s1302 + $0x1c] sm:$0xf]
        %v1311 = vld [vmem:[%s1302 + $0x20] sm:$0xf]
        %v1312 = vld [vmem:[%s1302 + $0x24] sm:$0xf]
        %v1313 = vld [vmem:[%s1302 + $0x28] sm:$0xf]
        %v1314 = vld [vmem:[%s1302 + $0x2c] sm:$0xf]
        %v1315 = vld [vmem:[%s1302 + $0x30] sm:$0xf]
        %v1316 = vld [vmem:[%s1302 + $0x34] sm:$0xf]
        %v1317 = vld [vmem:[%s1302 + $0x38] sm:$0xf]
        %v1318 = vld [vmem:[%s1302 + $0x3c] sm:$0xf]
        %v1335 = vunpack.c.l.b16 %v1303
        %v1336 = vunpack.c.l.b16 %v1304
        %v1337 = vunpack.c.l.b16 %v1305
        %v1338 = vunpack.c.l.b16 %v1306
        %v1339 = vunpack.c.l.b16 %v1307
        %v1340 = vunpack.c.l.b16 %v1308
        %v1341 = vunpack.c.l.b16 %v1309
        %v1342 = vunpack.c.l.b16 %v1310
        %v1343 = vunpack.c.l.b16 %v1311
        %v1344 = vunpack.c.l.b16 %v1312
        %v1345 = vunpack.c.l.b16 %v1313
        %v1346 = vunpack.c.l.b16 %v1314
        %v1347 = vunpack.c.l.b16 %v1315
        %v1348 = vunpack.c.l.b16 %v1316
        %v1349 = vunpack.c.l.b16 %v1317
        %v1350 = vunpack.c.l.b16 %v1318
        %v1351 = vpack.c.b16 %v1336, %v1335
        %v1352 = vpack.c.b16 %v1338, %v1337
        %v1353 = vpack.c.b16 %v1340, %v1339
        %v1354 = vpack.c.b16 %v1342, %v1341
        %v1355 = vpack.c.b16 %v1344, %v1343
        %v1356 = vpack.c.b16 %v1346, %v1345
        %v1357 = vpack.c.b16 %v1348, %v1347
        %v1358 = vpack.c.b16 %v1350, %v1349
        %1367 = vmatprep.subr.bf16.mxu0 0
        %1368 = vmatpush1.bf16.msra.mxu0 %v915
        %1369 = vmatprep.subr.bf16.mxu0 0
        %1370 = vmatpush1.bf16.msra.mxu0 %v916
        %1371 = vmatprep.subr.bf16.mxu0 0
        %1372 = vmatpush1.bf16.msra.mxu0 %v917
        %1373 = vmatprep.subr.bf16.mxu0 0
        %1374 = vmatpush1.bf16.msra.mxu0 %v918
        %1375 = vmatprep.subr.bf16.mxu0 0
        %1376 = vmatpush1.bf16.msra.mxu0 %v919
        %1377 = vmatprep.subr.bf16.mxu0 0
        %1378 = vmatpush1.bf16.msra.mxu0 %v920
        %1379 = vmatprep.subr.bf16.mxu0 0
        %1380 = vmatpush1.bf16.msra.mxu0 %v921
        %1381 = vmatprep.subr.bf16.mxu0 0
        %1382 = vmatpush1.bf16.msra.mxu0 %v922
        %1383 = vmatprep.subr.bf16.mxu0 0
        %1384 = vmatpush1.bf16.msra.mxu0 0
        %1385 = vmatprep.subr.bf16.mxu0 0
        %1386 = vmatpush1.bf16.msra.mxu0 0
        %1387 = vmatprep.subr.bf16.mxu0 0
        %1388 = vmatpush1.bf16.msra.mxu0 0
        %1389 = vmatprep.subr.bf16.mxu0 0
        %1390 = vmatpush1.bf16.msra.mxu0 0
        %1391 = vmatprep.subr.bf16.mxu0 0
        %1392 = vmatpush1.bf16.msra.mxu0 0
        %1393 = vmatprep.subr.bf16.mxu0 0
        %1394 = vmatpush1.bf16.msra.mxu0 0
        %1395 = vmatprep.subr.bf16.mxu0 0
        %1396 = vmatpush1.bf16.msra.mxu0 0
        %1397 = vmatprep.subr.bf16.mxu0 0
        %1398 = vmatpush1.bf16.msra.mxu0 0
        %1399 = vmatprep.mubr.bf16.mxu0 0
        %1400 = vmatmul.mubr.bf16.gmra.mrb[0].mxu0 %v1351
        %v1401 = vpop.f32.mrb[0].mxu0
        %v1402 = vadd.f32 %v833, %v1401
        %v1403 = vpop.f32.mrb[0].mxu0
        %v1404 = vpop.f32.mrb[0].mxu0
        %v1405 = vadd.f32 %v833, %v1404
        %v1406 = vpop.f32.mrb[0].mxu0
        %1407 = vmatprep.mubr.bf16.mxu0 0
        %1408 = vmatmul.mubr.bf16.gmra.mrb[0].mxu0 %v1352
        %v1409 = vpop.f32.mrb[0].mxu0
        %v1410 = vadd.f32 %v833, %v1409
        %v1411 = vpop.f32.mrb[0].mxu0
        %v1412 = vpop.f32.mrb[0].mxu0
        %v1413 = vadd.f32 %v833, %v1412
        %v1414 = vpop.f32.mrb[0].mxu0
        %1415 = vmatprep.mubr.bf16.mxu0 0
        %1416 = vmatmul.mubr.bf16.gmra.mrb[0].mxu0 %v1353
        %v1417 = vpop.f32.mrb[0].mxu0
        %v1418 = vadd.f32 %v833, %v1417
        %v1419 = vpop.f32.mrb[0].mxu0
        %v1420 = vpop.f32.mrb[0].mxu0
        %v1421 = vadd.f32 %v833, %v1420
        %v1422 = vpop.f32.mrb[0].mxu0
        %1423 = vmatprep.mubr.bf16.mxu0 0
        %1424 = vmatmul.mubr.bf16.gmra.mrb[0].mxu0 %v1354
        %v1425 = vpop.f32.mrb[0].mxu0
        %v1426 = vadd.f32 %v833, %v1425
        %v1427 = vpop.f32.mrb[0].mxu0
        %v1428 = vpop.f32.mrb[0].mxu0
        %v1429 = vadd.f32 %v833, %v1428
        %v1430 = vpop.f32.mrb[0].mxu0
        %1431 = vmatprep.mubr.bf16.mxu0 0
        %1432 = vmatmul.mubr.bf16.gmra.mrb[0].mxu0 %v1355
        %v1433 = vpop.f32.mrb[0].mxu0
        %v1434 = vadd.f32 %v833, %v1433
        %v1435 = vpop.f32.mrb[0].mxu0
        %v1436 = vpop.f32.mrb[0].mxu0
        %v1437 = vadd.f32 %v833, %v1436
        %v1438 = vpop.f32.mrb[0].mxu0
        %1439 = vmatprep.mubr.bf16.mxu0 0
        %1440 = vmatmul.mubr.bf16.gmra.mrb[0].mxu0 %v1356
        %v1441 = vpop.f32.mrb[0].mxu0
        %v1442 = vadd.f32 %v833, %v1441
        %v1443 = vpop.f32.mrb[0].mxu0
        %v1444 = vpop.f32.mrb[0].mxu0
        %v1445 = vadd.f32 %v833, %v1444
        %v1446 = vpop.f32.mrb[0].mxu0
        %1447 = vmatprep.mubr.bf16.mxu0 0
        %1448 = vmatmul.mubr.bf16.gmra.mrb[0].mxu0 %v1357
        %v1449 = vpop.f32.mrb[0].mxu0
        %v1450 = vadd.f32 %v833, %v1449
        %v1451 = vpop.f32.mrb[0].mxu0
        %v1452 = vpop.f32.mrb[0].mxu0
        %v1453 = vadd.f32 %v833, %v1452
        %v1454 = vpop.f32.mrb[0].mxu0
        %1455 = vmatprep.mubr.bf16.mxu0 0
        %1456 = vmatmul.mubr.bf16.gmra.mrb[0].mxu0 %v1358
        %v1457 = vpop.f32.mrb[0].mxu0
        %v1458 = vadd.f32 %v833, %v1457
        %v1459 = vpop.f32.mrb[0].mxu0
        %v1460 = vpop.f32.mrb[0].mxu0
        %v1461 = vadd.f32 %v833, %v1460
        %v1462 = vpop.f32.mrb[0].mxu0
        %1463 = vdwg.mxu0
        %v1464 = vmax.f32 %v1402, 0.0
        %v1465 = vmax.f32 %v1405, 0.0
        %v1466 = vmax.f32 %v1410, 0.0
        %v1467 = vmax.f32 %v1413, 0.0
        %v1468 = vmax.f32 %v1418, 0.0
        %v1469 = vmax.f32 %v1421, 0.0
        %v1470 = vmax.f32 %v1426, 0.0
        %v1471 = vmax.f32 %v1429, 0.0
        %v1472 = vmax.f32 %v1434, 0.0
        %v1473 = vmax.f32 %v1437, 0.0
        %v1474 = vmax.f32 %v1442, 0.0
        %v1475 = vmax.f32 %v1445, 0.0
        %v1476 = vmax.f32 %v1450, 0.0
        %v1477 = vmax.f32 %v1453, 0.0
        %v1478 = vmax.f32 %v1458, 0.0
        %v1479 = vmax.f32 %v1461, 0.0
        %v1480 = vmul.f32 %v1464, %v797
        %v1481 = vmul.f32 %v1465, %v798
        %v1482 = vmul.f32 %v1466, %v799
        %v1483 = vmul.f32 %v1467, %v800
        %v1484 = vmul.f32 %v1468, %v801
        %v1485 = vmul.f32 %v1469, %v802
        %v1486 = vmul.f32 %v1470, %v803
        %v1487 = vmul.f32 %v1471, %v804
        %v1488 = vmul.f32 %v1472, %v805
        %v1489 = vmul.f32 %v1473, %v806
        %v1490 = vmul.f32 %v1474, %v807
        %v1491 = vmul.f32 %v1475, %v808
        %v1492 = vmul.f32 %v1476, %v809
        %v1493 = vmul.f32 %v1477, %v810
        %v1494 = vmul.f32 %v1478, %v811
        %v1495 = vmul.f32 %v1479, %v812
        %v1496 = vld [vmem:[#allocation2 + $0x2] sm:$0x1]
        %v1497 = vadd.f32 %v1480, %v1481
        %v1498 = vadd.f32 %v1497, %v1482
        %v1499 = vadd.f32 %v1498, %v1483
        %v1500 = vadd.f32 %v1499, %v1484
        %v1501 = vadd.f32 %v1500, %v1485
        %v1502 = vadd.f32 %v1501, %v1486
        %v1503 = vadd.f32 %v1502, %v1487
        %v1504 = vadd.f32 %v1503, %v1488
        %v1505 = vadd.f32 %v1504, %v1489
        %v1506 = vadd.f32 %v1505, %v1490
        %v1507 = vadd.f32 %v1506, %v1491
        %v1508 = vadd.f32 %v1507, %v1492
        %v1509 = vadd.f32 %v1508, %v1493
        %v1510 = vadd.f32 %v1509, %v1494
        %v1511 = vadd.f32 %v1510, %v1495
        %v1512 = vrot.slane %v1511, 4
        %v1513 = vadd.f32 %v1511, %v1512
        %v1514 = vrot.slane %v1513, 2
        %v1515 = vadd.f32 %v1513, %v1514
        %v1516 = vrot.slane %v1515, 1
        %v1517 = vadd.f32 %v1515, %v1516
        %v1518 = vadd.f32 %v1496, %v1517
        %1519 = vst [vmem:[#allocation2 + $0x2] sm:$0x1] %v1518
        %s1520 = scalar_lea.vmem %s690, 192 [#allocation3]
        %v1521 = vld [vmem:[%s1520] sm:$0xf]
        %v1522 = vld [vmem:[%s1520 + $0x4] sm:$0xf]
        %v1523 = vld [vmem:[%s1520 + $0x8] sm:$0xf]
        %v1524 = vld [vmem:[%s1520 + $0xc] sm:$0xf]
        %v1525 = vld [vmem:[%s1520 + $0x10] sm:$0xf]
        %v1526 = vld [vmem:[%s1520 + $0x14] sm:$0xf]
        %v1527 = vld [vmem:[%s1520 + $0x18] sm:$0xf]
        %v1528 = vld [vmem:[%s1520 + $0x1c] sm:$0xf]
        %v1529 = vld [vmem:[%s1520 + $0x20] sm:$0xf]
        %v1530 = vld [vmem:[%s1520 + $0x24] sm:$0xf]
        %v1531 = vld [vmem:[%s1520 + $0x28] sm:$0xf]
        %v1532 = vld [vmem:[%s1520 + $0x2c] sm:$0xf]
        %v1533 = vld [vmem:[%s1520 + $0x30] sm:$0xf]
        %v1534 = vld [vmem:[%s1520 + $0x34] sm:$0xf]
        %v1535 = vld [vmem:[%s1520 + $0x38] sm:$0xf]
        %v1536 = vld [vmem:[%s1520 + $0x3c] sm:$0xf]
        %v1553 = vunpack.c.l.b16 %v1521
        %v1554 = vunpack.c.l.b16 %v1522
        %v1555 = vunpack.c.l.b16 %v1523
        %v1556 = vunpack.c.l.b16 %v1524
        %v1557 = vunpack.c.l.b16 %v1525
        %v1558 = vunpack.c.l.b16 %v1526
        %v1559 = vunpack.c.l.b16 %v1527
        %v1560 = vunpack.c.l.b16 %v1528
        %v1561 = vunpack.c.l.b16 %v1529
        %v1562 = vunpack.c.l.b16 %v1530
        %v1563 = vunpack.c.l.b16 %v1531
        %v1564 = vunpack.c.l.b16 %v1532
        %v1565 = vunpack.c.l.b16 %v1533
        %v1566 = vunpack.c.l.b16 %v1534
        %v1567 = vunpack.c.l.b16 %v1535
        %v1568 = vunpack.c.l.b16 %v1536
        %v1569 = vpack.c.b16 %v1554, %v1553
        %v1570 = vpack.c.b16 %v1556, %v1555
        %v1571 = vpack.c.b16 %v1558, %v1557
        %v1572 = vpack.c.b16 %v1560, %v1559
        %v1573 = vpack.c.b16 %v1562, %v1561
        %v1574 = vpack.c.b16 %v1564, %v1563
        %v1575 = vpack.c.b16 %v1566, %v1565
        %v1576 = vpack.c.b16 %v1568, %v1567
        %1585 = vmatprep.subr.bf16.mxu0 0
        %1586 = vmatpush1.bf16.msra.mxu0 %v915
        %1587 = vmatprep.subr.bf16.mxu0 0
        %1588 = vmatpush1.bf16.msra.mxu0 %v916
        %1589 = vmatprep.subr.bf16.mxu0 0
        %1590 = vmatpush1.bf16.msra.mxu0 %v917
        %1591 = vmatprep.subr.bf16.mxu0 0
        %1592 = vmatpush1.bf16.msra.mxu0 %v918
        %1593 = vmatprep.subr.bf16.mxu0 0
        %1594 = vmatpush1.bf16.msra.mxu0 %v919
        %1595 = vmatprep.subr.bf16.mxu0 0
        %1596 = vmatpush1.bf16.msra.mxu0 %v920
        %1597 = vmatprep.subr.bf16.mxu0 0
        %1598 = vmatpush1.bf16.msra.mxu0 %v921
        %1599 = vmatprep.subr.bf16.mxu0 0
        %1600 = vmatpush1.bf16.msra.mxu0 %v922
        %1601 = vmatprep.subr.bf16.mxu0 0
        %1602 = vmatpush1.bf16.msra.mxu0 0
        %1603 = vmatprep.subr.bf16.mxu0 0
        %1604 = vmatpush1.bf16.msra.mxu0 0
        %1605 = vmatprep.subr.bf16.mxu0 0
        %1606 = vmatpush1.bf16.msra.mxu0 0
        %1607 = vmatprep.subr.bf16.mxu0 0
        %1608 = vmatpush1.bf16.msra.mxu0 0
        %1609 = vmatprep.subr.bf16.mxu0 0
        %1610 = vmatpush1.bf16.msra.mxu0 0
        %1611 = vmatprep.subr.bf16.mxu0 0
        %1612 = vmatpush1.bf16.msra.mxu0 0
        %1613 = vmatprep.subr.bf16.mxu0 0
        %1614 = vmatpush1.bf16.msra.mxu0 0
        %1615 = vmatprep.subr.bf16.mxu0 0
        %1616 = vmatpush1.bf16.msra.mxu0 0
        %1617 = vmatprep.mubr.bf16.mxu0 0
        %1618 = vmatmul.mubr.bf16.gmra.mrb[0].mxu0 %v1569
        %v1619 = vpop.f32.mrb[0].mxu0
        %v1620 = vadd.f32 %v833, %v1619
        %v1621 = vpop.f32.mrb[0].mxu0
        %v1622 = vpop.f32.mrb[0].mxu0
        %v1623 = vadd.f32 %v833, %v1622
        %v1624 = vpop.f32.mrb[0].mxu0
        %1625 = vmatprep.mubr.bf16.mxu0 0
        %1626 = vmatmul.mubr.bf16.gmra.mrb[0].mxu0 %v1570
        %v1627 = vpop.f32.mrb[0].mxu0
        %v1628 = vadd.f32 %v833, %v1627
        %v1629 = vpop.f32.mrb[0].mxu0
        %v1630 = vpop.f32.mrb[0].mxu0
        %v1631 = vadd.f32 %v833, %v1630
        %v1632 = vpop.f32.mrb[0].mxu0
        %1633 = vmatprep.mubr.bf16.mxu0 0
        %1634 = vmatmul.mubr.bf16.gmra.mrb[0].mxu0 %v1571
        %v1635 = vpop.f32.mrb[0].mxu0
        %v1636 = vadd.f32 %v833, %v1635
        %v1637 = vpop.f32.mrb[0].mxu0
        %v1638 = vpop.f32.mrb[0].mxu0
        %v1639 = vadd.f32 %v833, %v1638
        %v1640 = vpop.f32.mrb[0].mxu0
        %1641 = vmatprep.mubr.bf16.mxu0 0
        %1642 = vmatmul.mubr.bf16.gmra.mrb[0].mxu0 %v1572
        %v1643 = vpop.f32.mrb[0].mxu0
        %v1644 = vadd.f32 %v833, %v1643
        %v1645 = vpop.f32.mrb[0].mxu0
        %v1646 = vpop.f32.mrb[0].mxu0
        %v1647 = vadd.f32 %v833, %v1646
        %v1648 = vpop.f32.mrb[0].mxu0
        %1649 = vmatprep.mubr.bf16.mxu0 0
        %1650 = vmatmul.mubr.bf16.gmra.mrb[0].mxu0 %v1573
        %v1651 = vpop.f32.mrb[0].mxu0
        %v1652 = vadd.f32 %v833, %v1651
        %v1653 = vpop.f32.mrb[0].mxu0
        %v1654 = vpop.f32.mrb[0].mxu0
        %v1655 = vadd.f32 %v833, %v1654
        %v1656 = vpop.f32.mrb[0].mxu0
        %1657 = vmatprep.mubr.bf16.mxu0 0
        %1658 = vmatmul.mubr.bf16.gmra.mrb[0].mxu0 %v1574
        %v1659 = vpop.f32.mrb[0].mxu0
        %v1660 = vadd.f32 %v833, %v1659
        %v1661 = vpop.f32.mrb[0].mxu0
        %v1662 = vpop.f32.mrb[0].mxu0
        %v1663 = vadd.f32 %v833, %v1662
        %v1664 = vpop.f32.mrb[0].mxu0
        %1665 = vmatprep.mubr.bf16.mxu0 0
        %1666 = vmatmul.mubr.bf16.gmra.mrb[0].mxu0 %v1575
        %v1667 = vpop.f32.mrb[0].mxu0
        %v1668 = vadd.f32 %v833, %v1667
        %v1669 = vpop.f32.mrb[0].mxu0
        %v1670 = vpop.f32.mrb[0].mxu0
        %v1671 = vadd.f32 %v833, %v1670
        %v1672 = vpop.f32.mrb[0].mxu0
        %1673 = vmatprep.mubr.bf16.mxu0 0
        %1674 = vmatmul.mubr.bf16.gmra.mrb[0].mxu0 %v1576
        %v1675 = vpop.f32.mrb[0].mxu0
        %v1676 = vadd.f32 %v833, %v1675
        %v1677 = vpop.f32.mrb[0].mxu0
        %v1678 = vpop.f32.mrb[0].mxu0
        %v1679 = vadd.f32 %v833, %v1678
        %v1680 = vpop.f32.mrb[0].mxu0
        %1681 = vdwg.mxu0
        %v1682 = vmax.f32 %v1620, 0.0
        %v1683 = vmax.f32 %v1623, 0.0
        %v1684 = vmax.f32 %v1628, 0.0
        %v1685 = vmax.f32 %v1631, 0.0
        %v1686 = vmax.f32 %v1636, 0.0
        %v1687 = vmax.f32 %v1639, 0.0
        %v1688 = vmax.f32 %v1644, 0.0
        %v1689 = vmax.f32 %v1647, 0.0
        %v1690 = vmax.f32 %v1652, 0.0
        %v1691 = vmax.f32 %v1655, 0.0
        %v1692 = vmax.f32 %v1660, 0.0
        %v1693 = vmax.f32 %v1663, 0.0
        %v1694 = vmax.f32 %v1668, 0.0
        %v1695 = vmax.f32 %v1671, 0.0
        %v1696 = vmax.f32 %v1676, 0.0
        %v1697 = vmax.f32 %v1679, 0.0
        %v1698 = vmul.f32 %v1682, %v797
        %v1699 = vmul.f32 %v1683, %v798
        %v1700 = vmul.f32 %v1684, %v799
        %v1701 = vmul.f32 %v1685, %v800
        %v1702 = vmul.f32 %v1686, %v801
        %v1703 = vmul.f32 %v1687, %v802
        %v1704 = vmul.f32 %v1688, %v803
        %v1705 = vmul.f32 %v1689, %v804
        %v1706 = vmul.f32 %v1690, %v805
        %v1707 = vmul.f32 %v1691, %v806
        %v1708 = vmul.f32 %v1692, %v807
        %v1709 = vmul.f32 %v1693, %v808
        %v1710 = vmul.f32 %v1694, %v809
        %v1711 = vmul.f32 %v1695, %v810
        %v1712 = vmul.f32 %v1696, %v811
        %v1713 = vmul.f32 %v1697, %v812
        %v1714 = vld [vmem:[#allocation2 + $0x3] sm:$0x1]
        %v1715 = vadd.f32 %v1698, %v1699
        %v1716 = vadd.f32 %v1715, %v1700
        %v1717 = vadd.f32 %v1716, %v1701
        %v1718 = vadd.f32 %v1717, %v1702
        %v1719 = vadd.f32 %v1718, %v1703
        %v1720 = vadd.f32 %v1719, %v1704
        %v1721 = vadd.f32 %v1720, %v1705
        %v1722 = vadd.f32 %v1721, %v1706
        %v1723 = vadd.f32 %v1722, %v1707
        %v1724 = vadd.f32 %v1723, %v1708
        %v1725 = vadd.f32 %v1724, %v1709
        %v1726 = vadd.f32 %v1725, %v1710
        %v1727 = vadd.f32 %v1726, %v1711
        %v1728 = vadd.f32 %v1727, %v1712
        %v1729 = vadd.f32 %v1728, %v1713
        %v1730 = vrot.slane %v1729, 4
        %v1731 = vadd.f32 %v1729, %v1730
        %v1732 = vrot.slane %v1731, 2
        %v1733 = vadd.f32 %v1731, %v1732
        %v1734 = vrot.slane %v1733, 1
        %v1735 = vadd.f32 %v1733, %v1734
        %v1736 = vadd.f32 %v1714, %v1735
        %1737 = vst [vmem:[#allocation2 + $0x3] sm:$0x1] %v1736
        %s1738 = scalar_lea.vmem %s690, 256 [#allocation3]
        %v1739 = vld [vmem:[%s1738] sm:$0xf]
        %v1740 = vld [vmem:[%s1738 + $0x4] sm:$0xf]
        %v1741 = vld [vmem:[%s1738 + $0x8] sm:$0xf]
        %v1742 = vld [vmem:[%s1738 + $0xc] sm:$0xf]
        %v1743 = vld [vmem:[%s1738 + $0x10] sm:$0xf]
        %v1744 = vld [vmem:[%s1738 + $0x14] sm:$0xf]
        %v1745 = vld [vmem:[%s1738 + $0x18] sm:$0xf]
        %v1746 = vld [vmem:[%s1738 + $0x1c] sm:$0xf]
        %v1747 = vld [vmem:[%s1738 + $0x20] sm:$0xf]
        %v1748 = vld [vmem:[%s1738 + $0x24] sm:$0xf]
        %v1749 = vld [vmem:[%s1738 + $0x28] sm:$0xf]
        %v1750 = vld [vmem:[%s1738 + $0x2c] sm:$0xf]
        %v1751 = vld [vmem:[%s1738 + $0x30] sm:$0xf]
        %v1752 = vld [vmem:[%s1738 + $0x34] sm:$0xf]
        %v1753 = vld [vmem:[%s1738 + $0x38] sm:$0xf]
        %v1754 = vld [vmem:[%s1738 + $0x3c] sm:$0xf]
        %v1771 = vunpack.c.l.b16 %v1739
        %v1772 = vunpack.c.l.b16 %v1740
        %v1773 = vunpack.c.l.b16 %v1741
        %v1774 = vunpack.c.l.b16 %v1742
        %v1775 = vunpack.c.l.b16 %v1743
        %v1776 = vunpack.c.l.b16 %v1744
        %v1777 = vunpack.c.l.b16 %v1745
        %v1778 = vunpack.c.l.b16 %v1746
        %v1779 = vunpack.c.l.b16 %v1747
        %v1780 = vunpack.c.l.b16 %v1748
        %v1781 = vunpack.c.l.b16 %v1749
        %v1782 = vunpack.c.l.b16 %v1750
        %v1783 = vunpack.c.l.b16 %v1751
        %v1784 = vunpack.c.l.b16 %v1752
        %v1785 = vunpack.c.l.b16 %v1753
        %v1786 = vunpack.c.l.b16 %v1754
        %v1787 = vpack.c.b16 %v1772, %v1771
        %v1788 = vpack.c.b16 %v1774, %v1773
        %v1789 = vpack.c.b16 %v1776, %v1775
        %v1790 = vpack.c.b16 %v1778, %v1777
        %v1791 = vpack.c.b16 %v1780, %v1779
        %v1792 = vpack.c.b16 %v1782, %v1781
        %v1793 = vpack.c.b16 %v1784, %v1783
        %v1794 = vpack.c.b16 %v1786, %v1785
        %1803 = vmatprep.subr.bf16.mxu0 0
        %1804 = vmatpush1.bf16.msra.mxu0 %v915
        %1805 = vmatprep.subr.bf16.mxu0 0
        %1806 = vmatpush1.bf16.msra.mxu0 %v916
        %1807 = vmatprep.subr.bf16.mxu0 0
        %1808 = vmatpush1.bf16.msra.mxu0 %v917
        %1809 = vmatprep.subr.bf16.mxu0 0
        %1810 = vmatpush1.bf16.msra.mxu0 %v918
        %1811 = vmatprep.subr.bf16.mxu0 0
        %1812 = vmatpush1.bf16.msra.mxu0 %v919
        %1813 = vmatprep.subr.bf16.mxu0 0
        %1814 = vmatpush1.bf16.msra.mxu0 %v920
        %1815 = vmatprep.subr.bf16.mxu0 0
        %1816 = vmatpush1.bf16.msra.mxu0 %v921
        %1817 = vmatprep.subr.bf16.mxu0 0
        %1818 = vmatpush1.bf16.msra.mxu0 %v922
        %1819 = vmatprep.subr.bf16.mxu0 0
        %1820 = vmatpush1.bf16.msra.mxu0 0
        %1821 = vmatprep.subr.bf16.mxu0 0
        %1822 = vmatpush1.bf16.msra.mxu0 0
        %1823 = vmatprep.subr.bf16.mxu0 0
        %1824 = vmatpush1.bf16.msra.mxu0 0
        %1825 = vmatprep.subr.bf16.mxu0 0
        %1826 = vmatpush1.bf16.msra.mxu0 0
        %1827 = vmatprep.subr.bf16.mxu0 0
        %1828 = vmatpush1.bf16.msra.mxu0 0
        %1829 = vmatprep.subr.bf16.mxu0 0
        %1830 = vmatpush1.bf16.msra.mxu0 0
        %1831 = vmatprep.subr.bf16.mxu0 0
        %1832 = vmatpush1.bf16.msra.mxu0 0
        %1833 = vmatprep.subr.bf16.mxu0 0
        %1834 = vmatpush1.bf16.msra.mxu0 0
        %1835 = vmatprep.mubr.bf16.mxu0 0
        %1836 = vmatmul.mubr.bf16.gmra.mrb[0].mxu0 %v1787
        %v1837 = vpop.f32.mrb[0].mxu0
        %v1838 = vadd.f32 %v833, %v1837
        %v1839 = vpop.f32.mrb[0].mxu0
        %v1840 = vpop.f32.mrb[0].mxu0
        %v1841 = vadd.f32 %v833, %v1840
        %v1842 = vpop.f32.mrb[0].mxu0
        %1843 = vmatprep.mubr.bf16.mxu0 0
        %1844 = vmatmul.mubr.bf16.gmra.mrb[0].mxu0 %v1788
        %v1845 = vpop.f32.mrb[0].mxu0
        %v1846 = vadd.f32 %v833, %v1845
        %v1847 = vpop.f32.mrb[0].mxu0
        %v1848 = vpop.f32.mrb[0].mxu0
        %v1849 = vadd.f32 %v833, %v1848
        %v1850 = vpop.f32.mrb[0].mxu0
        %1851 = vmatprep.mubr.bf16.mxu0 0
        %1852 = vmatmul.mubr.bf16.gmra.mrb[0].mxu0 %v1789
        %v1853 = vpop.f32.mrb[0].mxu0
        %v1854 = vadd.f32 %v833, %v1853
        %v1855 = vpop.f32.mrb[0].mxu0
        %v1856 = vpop.f32.mrb[0].mxu0
        %v1857 = vadd.f32 %v833, %v1856
        %v1858 = vpop.f32.mrb[0].mxu0
        %1859 = vmatprep.mubr.bf16.mxu0 0
        %1860 = vmatmul.mubr.bf16.gmra.mrb[0].mxu0 %v1790
        %v1861 = vpop.f32.mrb[0].mxu0
        %v1862 = vadd.f32 %v833, %v1861
        %v1863 = vpop.f32.mrb[0].mxu0
        %v1864 = vpop.f32.mrb[0].mxu0
        %v1865 = vadd.f32 %v833, %v1864
        %v1866 = vpop.f32.mrb[0].mxu0
        %1867 = vmatprep.mubr.bf16.mxu0 0
        %1868 = vmatmul.mubr.bf16.gmra.mrb[0].mxu0 %v1791
        %v1869 = vpop.f32.mrb[0].mxu0
        %v1870 = vadd.f32 %v833, %v1869
        %v1871 = vpop.f32.mrb[0].mxu0
        %v1872 = vpop.f32.mrb[0].mxu0
        %v1873 = vadd.f32 %v833, %v1872
        %v1874 = vpop.f32.mrb[0].mxu0
        %1875 = vmatprep.mubr.bf16.mxu0 0
        %1876 = vmatmul.mubr.bf16.gmra.mrb[0].mxu0 %v1792
        %v1877 = vpop.f32.mrb[0].mxu0
        %v1878 = vadd.f32 %v833, %v1877
        %v1879 = vpop.f32.mrb[0].mxu0
        %v1880 = vpop.f32.mrb[0].mxu0
        %v1881 = vadd.f32 %v833, %v1880
        %v1882 = vpop.f32.mrb[0].mxu0
        %1883 = vmatprep.mubr.bf16.mxu0 0
        %1884 = vmatmul.mubr.bf16.gmra.mrb[0].mxu0 %v1793
        %v1885 = vpop.f32.mrb[0].mxu0
        %v1886 = vadd.f32 %v833, %v1885
        %v1887 = vpop.f32.mrb[0].mxu0
        %v1888 = vpop.f32.mrb[0].mxu0
        %v1889 = vadd.f32 %v833, %v1888
        %v1890 = vpop.f32.mrb[0].mxu0
        %1891 = vmatprep.mubr.bf16.mxu0 0
        %1892 = vmatmul.mubr.bf16.gmra.mrb[0].mxu0 %v1794
        %v1893 = vpop.f32.mrb[0].mxu0
        %v1894 = vadd.f32 %v833, %v1893
        %v1895 = vpop.f32.mrb[0].mxu0
        %v1896 = vpop.f32.mrb[0].mxu0
        %v1897 = vadd.f32 %v833, %v1896
        %v1898 = vpop.f32.mrb[0].mxu0
        %1899 = vdwg.mxu0
        %v1900 = vmax.f32 %v1838, 0.0
        %v1901 = vmax.f32 %v1841, 0.0
        %v1902 = vmax.f32 %v1846, 0.0
        %v1903 = vmax.f32 %v1849, 0.0
        %v1904 = vmax.f32 %v1854, 0.0
        %v1905 = vmax.f32 %v1857, 0.0
        %v1906 = vmax.f32 %v1862, 0.0
        %v1907 = vmax.f32 %v1865, 0.0
        %v1908 = vmax.f32 %v1870, 0.0
        %v1909 = vmax.f32 %v1873, 0.0
        %v1910 = vmax.f32 %v1878, 0.0
        %v1911 = vmax.f32 %v1881, 0.0
        %v1912 = vmax.f32 %v1886, 0.0
        %v1913 = vmax.f32 %v1889, 0.0
        %v1914 = vmax.f32 %v1894, 0.0
        %v1915 = vmax.f32 %v1897, 0.0
        %v1916 = vmul.f32 %v1900, %v797
        %v1917 = vmul.f32 %v1901, %v798
        %v1918 = vmul.f32 %v1902, %v799
        %v1919 = vmul.f32 %v1903, %v800
        %v1920 = vmul.f32 %v1904, %v801
        %v1921 = vmul.f32 %v1905, %v802
        %v1922 = vmul.f32 %v1906, %v803
        %v1923 = vmul.f32 %v1907, %v804
        %v1924 = vmul.f32 %v1908, %v805
        %v1925 = vmul.f32 %v1909, %v806
        %v1926 = vmul.f32 %v1910, %v807
        %v1927 = vmul.f32 %v1911, %v808
        %v1928 = vmul.f32 %v1912, %v809
        %v1929 = vmul.f32 %v1913, %v810
        %v1930 = vmul.f32 %v1914, %v811
        %v1931 = vmul.f32 %v1915, %v812
        %v1932 = vld [vmem:[#allocation2 + $0x4] sm:$0x1]
        %v1933 = vadd.f32 %v1916, %v1917
        %v1934 = vadd.f32 %v1933, %v1918
        %v1935 = vadd.f32 %v1934, %v1919
        %v1936 = vadd.f32 %v1935, %v1920
        %v1937 = vadd.f32 %v1936, %v1921
        %v1938 = vadd.f32 %v1937, %v1922
        %v1939 = vadd.f32 %v1938, %v1923
        %v1940 = vadd.f32 %v1939, %v1924
        %v1941 = vadd.f32 %v1940, %v1925
        %v1942 = vadd.f32 %v1941, %v1926
        %v1943 = vadd.f32 %v1942, %v1927
        %v1944 = vadd.f32 %v1943, %v1928
        %v1945 = vadd.f32 %v1944, %v1929
        %v1946 = vadd.f32 %v1945, %v1930
        %v1947 = vadd.f32 %v1946, %v1931
        %v1948 = vrot.slane %v1947, 4
        %v1949 = vadd.f32 %v1947, %v1948
        %v1950 = vrot.slane %v1949, 2
        %v1951 = vadd.f32 %v1949, %v1950
        %v1952 = vrot.slane %v1951, 1
        %v1953 = vadd.f32 %v1951, %v1952
        %v1954 = vadd.f32 %v1932, %v1953
        %1955 = vst [vmem:[#allocation2 + $0x4] sm:$0x1] %v1954
        %s1956 = scalar_lea.vmem %s690, 320 [#allocation3]
        %v1957 = vld [vmem:[%s1956] sm:$0xf]
        %v1958 = vld [vmem:[%s1956 + $0x4] sm:$0xf]
        %v1959 = vld [vmem:[%s1956 + $0x8] sm:$0xf]
        %v1960 = vld [vmem:[%s1956 + $0xc] sm:$0xf]
        %v1961 = vld [vmem:[%s1956 + $0x10] sm:$0xf]
        %v1962 = vld [vmem:[%s1956 + $0x14] sm:$0xf]
        %v1963 = vld [vmem:[%s1956 + $0x18] sm:$0xf]
        %v1964 = vld [vmem:[%s1956 + $0x1c] sm:$0xf]
        %v1965 = vld [vmem:[%s1956 + $0x20] sm:$0xf]
        %v1966 = vld [vmem:[%s1956 + $0x24] sm:$0xf]
        %v1967 = vld [vmem:[%s1956 + $0x28] sm:$0xf]
        %v1968 = vld [vmem:[%s1956 + $0x2c] sm:$0xf]
        %v1969 = vld [vmem:[%s1956 + $0x30] sm:$0xf]
        %v1970 = vld [vmem:[%s1956 + $0x34] sm:$0xf]
        %v1971 = vld [vmem:[%s1956 + $0x38] sm:$0xf]
        %v1972 = vld [vmem:[%s1956 + $0x3c] sm:$0xf]
        %v1989 = vunpack.c.l.b16 %v1957
        %v1990 = vunpack.c.l.b16 %v1958
        %v1991 = vunpack.c.l.b16 %v1959
        %v1992 = vunpack.c.l.b16 %v1960
        %v1993 = vunpack.c.l.b16 %v1961
        %v1994 = vunpack.c.l.b16 %v1962
        %v1995 = vunpack.c.l.b16 %v1963
        %v1996 = vunpack.c.l.b16 %v1964
        %v1997 = vunpack.c.l.b16 %v1965
        %v1998 = vunpack.c.l.b16 %v1966
        %v1999 = vunpack.c.l.b16 %v1967
        %v2000 = vunpack.c.l.b16 %v1968
        %v2001 = vunpack.c.l.b16 %v1969
        %v2002 = vunpack.c.l.b16 %v1970
        %v2003 = vunpack.c.l.b16 %v1971
        %v2004 = vunpack.c.l.b16 %v1972
        %v2005 = vpack.c.b16 %v1990, %v1989
        %v2006 = vpack.c.b16 %v1992, %v1991
        %v2007 = vpack.c.b16 %v1994, %v1993
        %v2008 = vpack.c.b16 %v1996, %v1995
        %v2009 = vpack.c.b16 %v1998, %v1997
        %v2010 = vpack.c.b16 %v2000, %v1999
        %v2011 = vpack.c.b16 %v2002, %v2001
        %v2012 = vpack.c.b16 %v2004, %v2003
        %2021 = vmatprep.subr.bf16.mxu0 0
        %2022 = vmatpush1.bf16.msra.mxu0 %v915
        %2023 = vmatprep.subr.bf16.mxu0 0
        %2024 = vmatpush1.bf16.msra.mxu0 %v916
        %2025 = vmatprep.subr.bf16.mxu0 0
        %2026 = vmatpush1.bf16.msra.mxu0 %v917
        %2027 = vmatprep.subr.bf16.mxu0 0
        %2028 = vmatpush1.bf16.msra.mxu0 %v918
        %2029 = vmatprep.subr.bf16.mxu0 0
        %2030 = vmatpush1.bf16.msra.mxu0 %v919
        %2031 = vmatprep.subr.bf16.mxu0 0
        %2032 = vmatpush1.bf16.msra.mxu0 %v920
        %2033 = vmatprep.subr.bf16.mxu0 0
        %2034 = vmatpush1.bf16.msra.mxu0 %v921
        %2035 = vmatprep.subr.bf16.mxu0 0
        %2036 = vmatpush1.bf16.msra.mxu0 %v922
        %2037 = vmatprep.subr.bf16.mxu0 0
        %2038 = vmatpush1.bf16.msra.mxu0 0
        %2039 = vmatprep.subr.bf16.mxu0 0
        %2040 = vmatpush1.bf16.msra.mxu0 0
        %2041 = vmatprep.subr.bf16.mxu0 0
        %2042 = vmatpush1.bf16.msra.mxu0 0
        %2043 = vmatprep.subr.bf16.mxu0 0
        %2044 = vmatpush1.bf16.msra.mxu0 0
        %2045 = vmatprep.subr.bf16.mxu0 0
        %2046 = vmatpush1.bf16.msra.mxu0 0
        %2047 = vmatprep.subr.bf16.mxu0 0
        %2048 = vmatpush1.bf16.msra.mxu0 0
        %2049 = vmatprep.subr.bf16.mxu0 0
        %2050 = vmatpush1.bf16.msra.mxu0 0
        %2051 = vmatprep.subr.bf16.mxu0 0
        %2052 = vmatpush1.bf16.msra.mxu0 0
        %2053 = vmatprep.mubr.bf16.mxu0 0
        %2054 = vmatmul.mubr.bf16.gmra.mrb[0].mxu0 %v2005
        %v2055 = vpop.f32.mrb[0].mxu0
        %v2056 = vadd.f32 %v833, %v2055
        %v2057 = vpop.f32.mrb[0].mxu0
        %v2058 = vpop.f32.mrb[0].mxu0
        %v2059 = vadd.f32 %v833, %v2058
        %v2060 = vpop.f32.mrb[0].mxu0
        %2061 = vmatprep.mubr.bf16.mxu0 0
        %2062 = vmatmul.mubr.bf16.gmra.mrb[0].mxu0 %v2006
        %v2063 = vpop.f32.mrb[0].mxu0
        %v2064 = vadd.f32 %v833, %v2063
        %v2065 = vpop.f32.mrb[0].mxu0
        %v2066 = vpop.f32.mrb[0].mxu0
        %v2067 = vadd.f32 %v833, %v2066
        %v2068 = vpop.f32.mrb[0].mxu0
        %2069 = vmatprep.mubr.bf16.mxu0 0
        %2070 = vmatmul.mubr.bf16.gmra.mrb[0].mxu0 %v2007
        %v2071 = vpop.f32.mrb[0].mxu0
        %v2072 = vadd.f32 %v833, %v2071
        %v2073 = vpop.f32.mrb[0].mxu0
        %v2074 = vpop.f32.mrb[0].mxu0
        %v2075 = vadd.f32 %v833, %v2074
        %v2076 = vpop.f32.mrb[0].mxu0
        %2077 = vmatprep.mubr.bf16.mxu0 0
        %2078 = vmatmul.mubr.bf16.gmra.mrb[0].mxu0 %v2008
        %v2079 = vpop.f32.mrb[0].mxu0
        %v2080 = vadd.f32 %v833, %v2079
        %v2081 = vpop.f32.mrb[0].mxu0
        %v2082 = vpop.f32.mrb[0].mxu0
        %v2083 = vadd.f32 %v833, %v2082
        %v2084 = vpop.f32.mrb[0].mxu0
        %2085 = vmatprep.mubr.bf16.mxu0 0
        %2086 = vmatmul.mubr.bf16.gmra.mrb[0].mxu0 %v2009
        %v2087 = vpop.f32.mrb[0].mxu0
        %v2088 = vadd.f32 %v833, %v2087
        %v2089 = vpop.f32.mrb[0].mxu0
        %v2090 = vpop.f32.mrb[0].mxu0
        %v2091 = vadd.f32 %v833, %v2090
        %v2092 = vpop.f32.mrb[0].mxu0
        %2093 = vmatprep.mubr.bf16.mxu0 0
        %2094 = vmatmul.mubr.bf16.gmra.mrb[0].mxu0 %v2010
        %v2095 = vpop.f32.mrb[0].mxu0
        %v2096 = vadd.f32 %v833, %v2095
        %v2097 = vpop.f32.mrb[0].mxu0
        %v2098 = vpop.f32.mrb[0].mxu0
        %v2099 = vadd.f32 %v833, %v2098
        %v2100 = vpop.f32.mrb[0].mxu0
        %2101 = vmatprep.mubr.bf16.mxu0 0
        %2102 = vmatmul.mubr.bf16.gmra.mrb[0].mxu0 %v2011
        %v2103 = vpop.f32.mrb[0].mxu0
        %v2104 = vadd.f32 %v833, %v2103
        %v2105 = vpop.f32.mrb[0].mxu0
        %v2106 = vpop.f32.mrb[0].mxu0
        %v2107 = vadd.f32 %v833, %v2106
        %v2108 = vpop.f32.mrb[0].mxu0
        %2109 = vmatprep.mubr.bf16.mxu0 0
        %2110 = vmatmul.mubr.bf16.gmra.mrb[0].mxu0 %v2012
        %v2111 = vpop.f32.mrb[0].mxu0
        %v2112 = vadd.f32 %v833, %v2111
        %v2113 = vpop.f32.mrb[0].mxu0
        %v2114 = vpop.f32.mrb[0].mxu0
        %v2115 = vadd.f32 %v833, %v2114
        %v2116 = vpop.f32.mrb[0].mxu0
        %2117 = vdwg.mxu0
        %v2118 = vmax.f32 %v2056, 0.0
        %v2119 = vmax.f32 %v2059, 0.0
        %v2120 = vmax.f32 %v2064, 0.0
        %v2121 = vmax.f32 %v2067, 0.0
        %v2122 = vmax.f32 %v2072, 0.0
        %v2123 = vmax.f32 %v2075, 0.0
        %v2124 = vmax.f32 %v2080, 0.0
        %v2125 = vmax.f32 %v2083, 0.0
        %v2126 = vmax.f32 %v2088, 0.0
        %v2127 = vmax.f32 %v2091, 0.0
        %v2128 = vmax.f32 %v2096, 0.0
        %v2129 = vmax.f32 %v2099, 0.0
        %v2130 = vmax.f32 %v2104, 0.0
        %v2131 = vmax.f32 %v2107, 0.0
        %v2132 = vmax.f32 %v2112, 0.0
        %v2133 = vmax.f32 %v2115, 0.0
        %v2134 = vmul.f32 %v2118, %v797
        %v2135 = vmul.f32 %v2119, %v798
        %v2136 = vmul.f32 %v2120, %v799
        %v2137 = vmul.f32 %v2121, %v800
        %v2138 = vmul.f32 %v2122, %v801
        %v2139 = vmul.f32 %v2123, %v802
        %v2140 = vmul.f32 %v2124, %v803
        %v2141 = vmul.f32 %v2125, %v804
        %v2142 = vmul.f32 %v2126, %v805
        %v2143 = vmul.f32 %v2127, %v806
        %v2144 = vmul.f32 %v2128, %v807
        %v2145 = vmul.f32 %v2129, %v808
        %v2146 = vmul.f32 %v2130, %v809
        %v2147 = vmul.f32 %v2131, %v810
        %v2148 = vmul.f32 %v2132, %v811
        %v2149 = vmul.f32 %v2133, %v812
        %v2150 = vld [vmem:[#allocation2 + $0x5] sm:$0x1]
        %v2151 = vadd.f32 %v2134, %v2135
        %v2152 = vadd.f32 %v2151, %v2136
        %v2153 = vadd.f32 %v2152, %v2137
        %v2154 = vadd.f32 %v2153, %v2138
        %v2155 = vadd.f32 %v2154, %v2139
        %v2156 = vadd.f32 %v2155, %v2140
        %v2157 = vadd.f32 %v2156, %v2141
        %v2158 = vadd.f32 %v2157, %v2142
        %v2159 = vadd.f32 %v2158, %v2143
        %v2160 = vadd.f32 %v2159, %v2144
        %v2161 = vadd.f32 %v2160, %v2145
        %v2162 = vadd.f32 %v2161, %v2146
        %v2163 = vadd.f32 %v2162, %v2147
        %v2164 = vadd.f32 %v2163, %v2148
        %v2165 = vadd.f32 %v2164, %v2149
        %v2166 = vrot.slane %v2165, 4
        %v2167 = vadd.f32 %v2165, %v2166
        %v2168 = vrot.slane %v2167, 2
        %v2169 = vadd.f32 %v2167, %v2168
        %v2170 = vrot.slane %v2169, 1
        %v2171 = vadd.f32 %v2169, %v2170
        %v2172 = vadd.f32 %v2150, %v2171
        %2173 = vst [vmem:[#allocation2 + $0x5] sm:$0x1] %v2172
        %s2174 = scalar_lea.vmem %s690, 384 [#allocation3]
        %v2175 = vld [vmem:[%s2174] sm:$0xf]
        %v2176 = vld [vmem:[%s2174 + $0x4] sm:$0xf]
        %v2177 = vld [vmem:[%s2174 + $0x8] sm:$0xf]
        %v2178 = vld [vmem:[%s2174 + $0xc] sm:$0xf]
        %v2179 = vld [vmem:[%s2174 + $0x10] sm:$0xf]
        %v2180 = vld [vmem:[%s2174 + $0x14] sm:$0xf]
        %v2181 = vld [vmem:[%s2174 + $0x18] sm:$0xf]
        %v2182 = vld [vmem:[%s2174 + $0x1c] sm:$0xf]
        %v2183 = vld [vmem:[%s2174 + $0x20] sm:$0xf]
        %v2184 = vld [vmem:[%s2174 + $0x24] sm:$0xf]
        %v2185 = vld [vmem:[%s2174 + $0x28] sm:$0xf]
        %v2186 = vld [vmem:[%s2174 + $0x2c] sm:$0xf]
        %v2187 = vld [vmem:[%s2174 + $0x30] sm:$0xf]
        %v2188 = vld [vmem:[%s2174 + $0x34] sm:$0xf]
        %v2189 = vld [vmem:[%s2174 + $0x38] sm:$0xf]
        %v2190 = vld [vmem:[%s2174 + $0x3c] sm:$0xf]
        %v2207 = vunpack.c.l.b16 %v2175
        %v2208 = vunpack.c.l.b16 %v2176
        %v2209 = vunpack.c.l.b16 %v2177
        %v2210 = vunpack.c.l.b16 %v2178
        %v2211 = vunpack.c.l.b16 %v2179
        %v2212 = vunpack.c.l.b16 %v2180
        %v2213 = vunpack.c.l.b16 %v2181
        %v2214 = vunpack.c.l.b16 %v2182
        %v2215 = vunpack.c.l.b16 %v2183
        %v2216 = vunpack.c.l.b16 %v2184
        %v2217 = vunpack.c.l.b16 %v2185
        %v2218 = vunpack.c.l.b16 %v2186
        %v2219 = vunpack.c.l.b16 %v2187
        %v2220 = vunpack.c.l.b16 %v2188
        %v2221 = vunpack.c.l.b16 %v2189
        %v2222 = vunpack.c.l.b16 %v2190
        %v2223 = vpack.c.b16 %v2208, %v2207
        %v2224 = vpack.c.b16 %v2210, %v2209
        %v2225 = vpack.c.b16 %v2212, %v2211
        %v2226 = vpack.c.b16 %v2214, %v2213
        %v2227 = vpack.c.b16 %v2216, %v2215
        %v2228 = vpack.c.b16 %v2218, %v2217
        %v2229 = vpack.c.b16 %v2220, %v2219
        %v2230 = vpack.c.b16 %v2222, %v2221
        %2239 = vmatprep.subr.bf16.mxu0 0
        %2240 = vmatpush1.bf16.msra.mxu0 %v915
        %2241 = vmatprep.subr.bf16.mxu0 0
        %2242 = vmatpush1.bf16.msra.mxu0 %v916
        %2243 = vmatprep.subr.bf16.mxu0 0
        %2244 = vmatpush1.bf16.msra.mxu0 %v917
        %2245 = vmatprep.subr.bf16.mxu0 0
        %2246 = vmatpush1.bf16.msra.mxu0 %v918
        %2247 = vmatprep.subr.bf16.mxu0 0
        %2248 = vmatpush1.bf16.msra.mxu0 %v919
        %2249 = vmatprep.subr.bf16.mxu0 0
        %2250 = vmatpush1.bf16.msra.mxu0 %v920
        %2251 = vmatprep.subr.bf16.mxu0 0
        %2252 = vmatpush1.bf16.msra.mxu0 %v921
        %2253 = vmatprep.subr.bf16.mxu0 0
        %2254 = vmatpush1.bf16.msra.mxu0 %v922
        %2255 = vmatprep.subr.bf16.mxu0 0
        %2256 = vmatpush1.bf16.msra.mxu0 0
        %2257 = vmatprep.subr.bf16.mxu0 0
        %2258 = vmatpush1.bf16.msra.mxu0 0
        %2259 = vmatprep.subr.bf16.mxu0 0
        %2260 = vmatpush1.bf16.msra.mxu0 0
        %2261 = vmatprep.subr.bf16.mxu0 0
        %2262 = vmatpush1.bf16.msra.mxu0 0
        %2263 = vmatprep.subr.bf16.mxu0 0
        %2264 = vmatpush1.bf16.msra.mxu0 0
        %2265 = vmatprep.subr.bf16.mxu0 0
        %2266 = vmatpush1.bf16.msra.mxu0 0
        %2267 = vmatprep.subr.bf16.mxu0 0
        %2268 = vmatpush1.bf16.msra.mxu0 0
        %2269 = vmatprep.subr.bf16.mxu0 0
        %2270 = vmatpush1.bf16.msra.mxu0 0
        %2271 = vmatprep.mubr.bf16.mxu0 0
        %2272 = vmatmul.mubr.bf16.gmra.mrb[0].mxu0 %v2223
        %v2273 = vpop.f32.mrb[0].mxu0
        %v2274 = vadd.f32 %v833, %v2273
        %v2275 = vpop.f32.mrb[0].mxu0
        %v2276 = vpop.f32.mrb[0].mxu0
        %v2277 = vadd.f32 %v833, %v2276
        %v2278 = vpop.f32.mrb[0].mxu0
        %2279 = vmatprep.mubr.bf16.mxu0 0
        %2280 = vmatmul.mubr.bf16.gmra.mrb[0].mxu0 %v2224
        %v2281 = vpop.f32.mrb[0].mxu0
        %v2282 = vadd.f32 %v833, %v2281
        %v2283 = vpop.f32.mrb[0].mxu0
        %v2284 = vpop.f32.mrb[0].mxu0
        %v2285 = vadd.f32 %v833, %v2284
        %v2286 = vpop.f32.mrb[0].mxu0
        %2287 = vmatprep.mubr.bf16.mxu0 0
        %2288 = vmatmul.mubr.bf16.gmra.mrb[0].mxu0 %v2225
        %v2289 = vpop.f32.mrb[0].mxu0
        %v2290 = vadd.f32 %v833, %v2289
        %v2291 = vpop.f32.mrb[0].mxu0
        %v2292 = vpop.f32.mrb[0].mxu0
        %v2293 = vadd.f32 %v833, %v2292
        %v2294 = vpop.f32.mrb[0].mxu0
        %2295 = vmatprep.mubr.bf16.mxu0 0
        %2296 = vmatmul.mubr.bf16.gmra.mrb[0].mxu0 %v2226
        %v2297 = vpop.f32.mrb[0].mxu0
        %v2298 = vadd.f32 %v833, %v2297
        %v2299 = vpop.f32.mrb[0].mxu0
        %v2300 = vpop.f32.mrb[0].mxu0
        %v2301 = vadd.f32 %v833, %v2300
        %v2302 = vpop.f32.mrb[0].mxu0
        %2303 = vmatprep.mubr.bf16.mxu0 0
        %2304 = vmatmul.mubr.bf16.gmra.mrb[0].mxu0 %v2227
        %v2305 = vpop.f32.mrb[0].mxu0
        %v2306 = vadd.f32 %v833, %v2305
        %v2307 = vpop.f32.mrb[0].mxu0
        %v2308 = vpop.f32.mrb[0].mxu0
        %v2309 = vadd.f32 %v833, %v2308
        %v2310 = vpop.f32.mrb[0].mxu0
        %2311 = vmatprep.mubr.bf16.mxu0 0
        %2312 = vmatmul.mubr.bf16.gmra.mrb[0].mxu0 %v2228
        %v2313 = vpop.f32.mrb[0].mxu0
        %v2314 = vadd.f32 %v833, %v2313
        %v2315 = vpop.f32.mrb[0].mxu0
        %v2316 = vpop.f32.mrb[0].mxu0
        %v2317 = vadd.f32 %v833, %v2316
        %v2318 = vpop.f32.mrb[0].mxu0
        %2319 = vmatprep.mubr.bf16.mxu0 0
        %2320 = vmatmul.mubr.bf16.gmra.mrb[0].mxu0 %v2229
        %v2321 = vpop.f32.mrb[0].mxu0
        %v2322 = vadd.f32 %v833, %v2321
        %v2323 = vpop.f32.mrb[0].mxu0
        %v2324 = vpop.f32.mrb[0].mxu0
        %v2325 = vadd.f32 %v833, %v2324
        %v2326 = vpop.f32.mrb[0].mxu0
        %2327 = vmatprep.mubr.bf16.mxu0 0
        %2328 = vmatmul.mubr.bf16.gmra.mrb[0].mxu0 %v2230
        %v2329 = vpop.f32.mrb[0].mxu0
        %v2330 = vadd.f32 %v833, %v2329
        %v2331 = vpop.f32.mrb[0].mxu0
        %v2332 = vpop.f32.mrb[0].mxu0
        %v2333 = vadd.f32 %v833, %v2332
        %v2334 = vpop.f32.mrb[0].mxu0
        %2335 = vdwg.mxu0
        %v2336 = vmax.f32 %v2274, 0.0
        %v2337 = vmax.f32 %v2277, 0.0
        %v2338 = vmax.f32 %v2282, 0.0
        %v2339 = vmax.f32 %v2285, 0.0
        %v2340 = vmax.f32 %v2290, 0.0
        %v2341 = vmax.f32 %v2293, 0.0
        %v2342 = vmax.f32 %v2298, 0.0
        %v2343 = vmax.f32 %v2301, 0.0
        %v2344 = vmax.f32 %v2306, 0.0
        %v2345 = vmax.f32 %v2309, 0.0
        %v2346 = vmax.f32 %v2314, 0.0
        %v2347 = vmax.f32 %v2317, 0.0
        %v2348 = vmax.f32 %v2322, 0.0
        %v2349 = vmax.f32 %v2325, 0.0
        %v2350 = vmax.f32 %v2330, 0.0
        %v2351 = vmax.f32 %v2333, 0.0
        %v2352 = vmul.f32 %v2336, %v797
        %v2353 = vmul.f32 %v2337, %v798
        %v2354 = vmul.f32 %v2338, %v799
        %v2355 = vmul.f32 %v2339, %v800
        %v2356 = vmul.f32 %v2340, %v801
        %v2357 = vmul.f32 %v2341, %v802
        %v2358 = vmul.f32 %v2342, %v803
        %v2359 = vmul.f32 %v2343, %v804
        %v2360 = vmul.f32 %v2344, %v805
        %v2361 = vmul.f32 %v2345, %v806
        %v2362 = vmul.f32 %v2346, %v807
        %v2363 = vmul.f32 %v2347, %v808
        %v2364 = vmul.f32 %v2348, %v809
        %v2365 = vmul.f32 %v2349, %v810
        %v2366 = vmul.f32 %v2350, %v811
        %v2367 = vmul.f32 %v2351, %v812
        %v2368 = vld [vmem:[#allocation2 + $0x6] sm:$0x1]
        %v2369 = vadd.f32 %v2352, %v2353
        %v2370 = vadd.f32 %v2369, %v2354
        %v2371 = vadd.f32 %v2370, %v2355
        %v2372 = vadd.f32 %v2371, %v2356
        %v2373 = vadd.f32 %v2372, %v2357
        %v2374 = vadd.f32 %v2373, %v2358
        %v2375 = vadd.f32 %v2374, %v2359
        %v2376 = vadd.f32 %v2375, %v2360
        %v2377 = vadd.f32 %v2376, %v2361
        %v2378 = vadd.f32 %v2377, %v2362
        %v2379 = vadd.f32 %v2378, %v2363
        %v2380 = vadd.f32 %v2379, %v2364
        %v2381 = vadd.f32 %v2380, %v2365
        %v2382 = vadd.f32 %v2381, %v2366
        %v2383 = vadd.f32 %v2382, %v2367
        %v2384 = vrot.slane %v2383, 4
        %v2385 = vadd.f32 %v2383, %v2384
        %v2386 = vrot.slane %v2385, 2
        %v2387 = vadd.f32 %v2385, %v2386
        %v2388 = vrot.slane %v2387, 1
        %v2389 = vadd.f32 %v2387, %v2388
        %v2390 = vadd.f32 %v2368, %v2389
        %2391 = vst [vmem:[#allocation2 + $0x6] sm:$0x1] %v2390
        %s2392 = scalar_lea.vmem %s690, 448 [#allocation3]
        %v2393 = vld [vmem:[%s2392] sm:$0xf]
        %v2394 = vld [vmem:[%s2392 + $0x4] sm:$0xf]
        %v2395 = vld [vmem:[%s2392 + $0x8] sm:$0xf]
        %v2396 = vld [vmem:[%s2392 + $0xc] sm:$0xf]
        %v2397 = vld [vmem:[%s2392 + $0x10] sm:$0xf]
        %v2398 = vld [vmem:[%s2392 + $0x14] sm:$0xf]
        %v2399 = vld [vmem:[%s2392 + $0x18] sm:$0xf]
        %v2400 = vld [vmem:[%s2392 + $0x1c] sm:$0xf]
        %v2401 = vld [vmem:[%s2392 + $0x20] sm:$0xf]
        %v2402 = vld [vmem:[%s2392 + $0x24] sm:$0xf]
        %v2403 = vld [vmem:[%s2392 + $0x28] sm:$0xf]
        %v2404 = vld [vmem:[%s2392 + $0x2c] sm:$0xf]
        %v2405 = vld [vmem:[%s2392 + $0x30] sm:$0xf]
        %v2406 = vld [vmem:[%s2392 + $0x34] sm:$0xf]
        %v2407 = vld [vmem:[%s2392 + $0x38] sm:$0xf]
        %v2408 = vld [vmem:[%s2392 + $0x3c] sm:$0xf]
        %v2425 = vunpack.c.l.b16 %v2393
        %v2426 = vunpack.c.l.b16 %v2394
        %v2427 = vunpack.c.l.b16 %v2395
        %v2428 = vunpack.c.l.b16 %v2396
        %v2429 = vunpack.c.l.b16 %v2397
        %v2430 = vunpack.c.l.b16 %v2398
        %v2431 = vunpack.c.l.b16 %v2399
        %v2432 = vunpack.c.l.b16 %v2400
        %v2433 = vunpack.c.l.b16 %v2401
        %v2434 = vunpack.c.l.b16 %v2402
        %v2435 = vunpack.c.l.b16 %v2403
        %v2436 = vunpack.c.l.b16 %v2404
        %v2437 = vunpack.c.l.b16 %v2405
        %v2438 = vunpack.c.l.b16 %v2406
        %v2439 = vunpack.c.l.b16 %v2407
        %v2440 = vunpack.c.l.b16 %v2408
        %v2441 = vpack.c.b16 %v2426, %v2425
        %v2442 = vpack.c.b16 %v2428, %v2427
        %v2443 = vpack.c.b16 %v2430, %v2429
        %v2444 = vpack.c.b16 %v2432, %v2431
        %v2445 = vpack.c.b16 %v2434, %v2433
        %v2446 = vpack.c.b16 %v2436, %v2435
        %v2447 = vpack.c.b16 %v2438, %v2437
        %v2448 = vpack.c.b16 %v2440, %v2439
        %2457 = vmatprep.subr.bf16.mxu0 0
        %2458 = vmatpush1.bf16.msra.mxu0 %v915
        %2459 = vmatprep.subr.bf16.mxu0 0
        %2460 = vmatpush1.bf16.msra.mxu0 %v916
        %2461 = vmatprep.subr.bf16.mxu0 0
        %2462 = vmatpush1.bf16.msra.mxu0 %v917
        %2463 = vmatprep.subr.bf16.mxu0 0
        %2464 = vmatpush1.bf16.msra.mxu0 %v918
        %2465 = vmatprep.subr.bf16.mxu0 0
        %2466 = vmatpush1.bf16.msra.mxu0 %v919
        %2467 = vmatprep.subr.bf16.mxu0 0
        %2468 = vmatpush1.bf16.msra.mxu0 %v920
        %2469 = vmatprep.subr.bf16.mxu0 0
        %2470 = vmatpush1.bf16.msra.mxu0 %v921
        %2471 = vmatprep.subr.bf16.mxu0 0
        %2472 = vmatpush1.bf16.msra.mxu0 %v922
        %2473 = vmatprep.subr.bf16.mxu0 0
        %2474 = vmatpush1.bf16.msra.mxu0 0
        %2475 = vmatprep.subr.bf16.mxu0 0
        %2476 = vmatpush1.bf16.msra.mxu0 0
        %2477 = vmatprep.subr.bf16.mxu0 0
        %2478 = vmatpush1.bf16.msra.mxu0 0
        %2479 = vmatprep.subr.bf16.mxu0 0
        %2480 = vmatpush1.bf16.msra.mxu0 0
        %2481 = vmatprep.subr.bf16.mxu0 0
        %2482 = vmatpush1.bf16.msra.mxu0 0
        %2483 = vmatprep.subr.bf16.mxu0 0
        %2484 = vmatpush1.bf16.msra.mxu0 0
        %2485 = vmatprep.subr.bf16.mxu0 0
        %2486 = vmatpush1.bf16.msra.mxu0 0
        %2487 = vmatprep.subr.bf16.mxu0 0
        %2488 = vmatpush1.bf16.msra.mxu0 0
        %2489 = vmatprep.mubr.bf16.mxu0 0
        %2490 = vmatmul.mubr.bf16.gmra.mrb[0].mxu0 %v2441
        %v2491 = vpop.f32.mrb[0].mxu0
        %v2492 = vadd.f32 %v833, %v2491
        %v2493 = vpop.f32.mrb[0].mxu0
        %v2494 = vpop.f32.mrb[0].mxu0
        %v2495 = vadd.f32 %v833, %v2494
        %v2496 = vpop.f32.mrb[0].mxu0
        %2497 = vmatprep.mubr.bf16.mxu0 0
        %2498 = vmatmul.mubr.bf16.gmra.mrb[0].mxu0 %v2442
        %v2499 = vpop.f32.mrb[0].mxu0
        %v2500 = vadd.f32 %v833, %v2499
        %v2501 = vpop.f32.mrb[0].mxu0
        %v2502 = vpop.f32.mrb[0].mxu0
        %v2503 = vadd.f32 %v833, %v2502
        %v2504 = vpop.f32.mrb[0].mxu0
        %2505 = vmatprep.mubr.bf16.mxu0 0
        %2506 = vmatmul.mubr.bf16.gmra.mrb[0].mxu0 %v2443
        %v2507 = vpop.f32.mrb[0].mxu0
        %v2508 = vadd.f32 %v833, %v2507
        %v2509 = vpop.f32.mrb[0].mxu0
        %v2510 = vpop.f32.mrb[0].mxu0
        %v2511 = vadd.f32 %v833, %v2510
        %v2512 = vpop.f32.mrb[0].mxu0
        %2513 = vmatprep.mubr.bf16.mxu0 0
        %2514 = vmatmul.mubr.bf16.gmra.mrb[0].mxu0 %v2444
        %v2515 = vpop.f32.mrb[0].mxu0
        %v2516 = vadd.f32 %v833, %v2515
        %v2517 = vpop.f32.mrb[0].mxu0
        %v2518 = vpop.f32.mrb[0].mxu0
        %v2519 = vadd.f32 %v833, %v2518
        %v2520 = vpop.f32.mrb[0].mxu0
        %2521 = vmatprep.mubr.bf16.mxu0 0
        %2522 = vmatmul.mubr.bf16.gmra.mrb[0].mxu0 %v2445
        %v2523 = vpop.f32.mrb[0].mxu0
        %v2524 = vadd.f32 %v833, %v2523
        %v2525 = vpop.f32.mrb[0].mxu0
        %v2526 = vpop.f32.mrb[0].mxu0
        %v2527 = vadd.f32 %v833, %v2526
        %v2528 = vpop.f32.mrb[0].mxu0
        %2529 = vmatprep.mubr.bf16.mxu0 0
        %2530 = vmatmul.mubr.bf16.gmra.mrb[0].mxu0 %v2446
        %v2531 = vpop.f32.mrb[0].mxu0
        %v2532 = vadd.f32 %v833, %v2531
        %v2533 = vpop.f32.mrb[0].mxu0
        %v2534 = vpop.f32.mrb[0].mxu0
        %v2535 = vadd.f32 %v833, %v2534
        %v2536 = vpop.f32.mrb[0].mxu0
        %2537 = vmatprep.mubr.bf16.mxu0 0
        %2538 = vmatmul.mubr.bf16.gmra.mrb[0].mxu0 %v2447
        %v2539 = vpop.f32.mrb[0].mxu0
        %v2540 = vadd.f32 %v833, %v2539
        %v2541 = vpop.f32.mrb[0].mxu0
        %v2542 = vpop.f32.mrb[0].mxu0
        %v2543 = vadd.f32 %v833, %v2542
        %v2544 = vpop.f32.mrb[0].mxu0
        %2545 = vmatprep.mubr.bf16.mxu0 0
        %2546 = vmatmul.mubr.bf16.gmra.mrb[0].mxu0 %v2448
        %v2547 = vpop.f32.mrb[0].mxu0
        %v2548 = vadd.f32 %v833, %v2547
        %v2549 = vpop.f32.mrb[0].mxu0
        %v2550 = vpop.f32.mrb[0].mxu0
        %v2551 = vadd.f32 %v833, %v2550
        %v2552 = vpop.f32.mrb[0].mxu0
        %2553 = vdwg.mxu0
        %v2554 = vmax.f32 %v2492, 0.0
        %v2555 = vmax.f32 %v2495, 0.0
        %v2556 = vmax.f32 %v2500, 0.0
        %v2557 = vmax.f32 %v2503, 0.0
        %v2558 = vmax.f32 %v2508, 0.0
        %v2559 = vmax.f32 %v2511, 0.0
        %v2560 = vmax.f32 %v2516, 0.0
        %v2561 = vmax.f32 %v2519, 0.0
        %v2562 = vmax.f32 %v2524, 0.0
        %v2563 = vmax.f32 %v2527, 0.0
        %v2564 = vmax.f32 %v2532, 0.0
        %v2565 = vmax.f32 %v2535, 0.0
        %v2566 = vmax.f32 %v2540, 0.0
        %v2567 = vmax.f32 %v2543, 0.0
        %v2568 = vmax.f32 %v2548, 0.0
        %v2569 = vmax.f32 %v2551, 0.0
        %v2570 = vmul.f32 %v2554, %v797
        %v2571 = vmul.f32 %v2555, %v798
        %v2572 = vmul.f32 %v2556, %v799
        %v2573 = vmul.f32 %v2557, %v800
        %v2574 = vmul.f32 %v2558, %v801
        %v2575 = vmul.f32 %v2559, %v802
        %v2576 = vmul.f32 %v2560, %v803
        %v2577 = vmul.f32 %v2561, %v804
        %v2578 = vmul.f32 %v2562, %v805
        %v2579 = vmul.f32 %v2563, %v806
        %v2580 = vmul.f32 %v2564, %v807
        %v2581 = vmul.f32 %v2565, %v808
        %v2582 = vmul.f32 %v2566, %v809
        %v2583 = vmul.f32 %v2567, %v810
        %v2584 = vmul.f32 %v2568, %v811
        %v2585 = vmul.f32 %v2569, %v812
        %v2586 = vld [vmem:[#allocation2 + $0x7] sm:$0x1]
        %v2587 = vadd.f32 %v2570, %v2571
        %v2588 = vadd.f32 %v2587, %v2572
        %v2589 = vadd.f32 %v2588, %v2573
        %v2590 = vadd.f32 %v2589, %v2574
        %v2591 = vadd.f32 %v2590, %v2575
        %v2592 = vadd.f32 %v2591, %v2576
        %v2593 = vadd.f32 %v2592, %v2577
        %v2594 = vadd.f32 %v2593, %v2578
        %v2595 = vadd.f32 %v2594, %v2579
        %v2596 = vadd.f32 %v2595, %v2580
        %v2597 = vadd.f32 %v2596, %v2581
        %v2598 = vadd.f32 %v2597, %v2582
        %v2599 = vadd.f32 %v2598, %v2583
        %v2600 = vadd.f32 %v2599, %v2584
        %v2601 = vadd.f32 %v2600, %v2585
        %v2602 = vrot.slane %v2601, 4
        %v2603 = vadd.f32 %v2601, %v2602
        %v2604 = vrot.slane %v2603, 2
        %v2605 = vadd.f32 %v2603, %v2604
        %v2606 = vrot.slane %v2605, 1
        %v2607 = vadd.f32 %v2605, %v2606
        %v2608 = vadd.f32 %v2586, %v2607
        %2609 = vst [vmem:[#allocation2 + $0x7] sm:$0x1] %v2608
        %p2610 = scmp.eq.s32.totalorder %s14, 1
        // Predicated region
        $region78: #{cnn_to_rnn_forward.7} parent=68 // pred_check
          %p2611 = pneg %p2610
        $region79: #{cnn_to_rnn_forward.7} parent=68 // pred_check_branch
          %2613 = sbr.rel (%p2611) target = $region81
        $region80: #{cnn_to_rnn_forward.7} parent=68 // pred_region
          %v2614 = vld [vmem:[#allocation2] sm:$0xff]
          %v2615 = vmul.f32 %v2614, 0.0051020407
          %2616 = vst [vmem:[%s3] sm:$0xff] %v2615
        $region81: #{cnn_to_rnn_forward.7} parent=68 // pred_fallthru
          _
        // Predicated region
        $region82: #{cnn_to_rnn_forward.7} parent=68 // pred_check
          %p2617 = pneg %p95
        $region83: #{cnn_to_rnn_forward.7} parent=68 // pred_check_branch
          %2619 = sbr.rel (%p2617) target = $region85
        $region84: #{cnn_to_rnn_forward.7} parent=68 // pred_region
          _
        $region85: #{cnn_to_rnn_forward.7} parent=68 // pred_fallthru
          _
        // Predicated region
        $region86: #{cnn_to_rnn_forward.7} parent=68 // pred_check
          %p2620 = pneg %p95
        $region87: #{cnn_to_rnn_forward.7} parent=68 // pred_check_branch
          %2622 = sbr.rel (%p2620) target = $region89
        $region88: #{cnn_to_rnn_forward.7} parent=68 // pred_region
          _
        $region89: #{cnn_to_rnn_forward.7} parent=68 // pred_fallthru
          _
      $region69: #{cnn_to_rnn_forward.7} parent=5 // pred_fallthru
        _
      %p2623 = scmp.le.s32.totalorder 2, %s9
      // Predicated region
      $region90: #{cnn_to_rnn_forward.7} parent=5 // pred_check
        %p2624 = pneg %p2623
      $region91: #{cnn_to_rnn_forward.7} parent=5 // pred_check_branch
        %2626 = sbr.rel (%p2624) target = $region93
      $region92: #{cnn_to_rnn_forward.7} parent=5 // pred_region
        %s2627 = ssub.s32 %s9, 2
      $region93: #{cnn_to_rnn_forward.7} parent=5 // pred_fallthru
        _
    $region6: #{cnn_to_rnn_forward.7} parent=1 // loop_footer
      %s13 = sadd.s32 1, %s9
    $region7: #{cnn_to_rnn_forward.7} parent=1 // loop_footer_branch
      %8 = sbr.rel target = $region3
    $region8: #{cnn_to_rnn_forward.7} parent=1 // loop_exit
      _

// kernel: cnn_to_rnn_forward.10
$region0: #{cnn_to_rnn_forward.10}
  #allocation0 [shape = 'u32[]', space=smem, size = 0x4, offset = 0x4, fixed_abs, tag = 'smem constant byte address 0x4 - core index']
  #allocation1 [shape = 'u32[144,128]{1,0:T(1,128)}', space=vmem, size = 0x12000, scoped, tag = 'internal scratch']
  #allocation2 [shape = 'f32[8,128]{1,0:T(8,128)}', space=vmem, size = 0x1000, scoped, tag = 'scratch operand']
  #allocation3 [shape = 'f32[8,128]{1,0:T(8,128)}', space=vmem, size = 0x1000, scoped, tag = 'scratch operand']
  %s0 = inlined_call_operand.vmem [shape: f32[12,8,512], index: 0, kind: input, shape index: {}]
  %s1 = inlined_call_operand.vmem [shape: f32[128,512], index: 1, kind: input, shape index: {}]
  %s2 = inlined_call_operand.vmem [shape: f32[12,8,128], index: 2, kind: output, shape index: {}]
  %s3 = sld [smem:[#allocation0]]
  $region45: #{cnn_to_rnn_forward.10} parent=0
    _
  %s5 = ssub.s32 1, %s3
  %s6 = scalar_select 0, %s5, %s3
  loop: start=0, step=1, limit=5
  $region2: #{cnn_to_rnn_forward.10} parent=0 // loop_pre_header
    _
  $region3: #{cnn_to_rnn_forward.10} parent=0 // loop_header
    %s8 = sphi 0, %s12
    %p9 = scmp.ge.s32.totalorder %s8, 5
    %s18 = sphi 0, %s20
    %s21 = sphi 0, %s18
    %s22 = sphi 0, %s21
    %s38 = sphi 0, %s22
    %s42 = sphi 0, %s42
    %s44 = sphi 0, %s42
    %s45 = sphi 0, %s44
    %s59 = sphi 0, %s45
    %s65 = sphi 0, %s67
    %s68 = sphi 0, %s65
    %s69 = sphi 0, %s68
    %s85 = sphi 0, %s69
  $region4: #{cnn_to_rnn_forward.10} parent=0 // loop_header_branch
    %11 = sbr.rel (%p9) target = $region8
  $region5: #{cnn_to_rnn_forward.10} parent=0 // loop_body
    %s13 = ssub.s32 %s8, 1
    %s14 = ssub.s32 %s8, 2
    %s15 = sadd.s32 %s8, 1
    %s16 = ssub.s32 %s8, %s15
    %p17 = scmp.eq.s32.totalorder %s16, 0
    %s19 = sadd.s32 %s18, 1
    %s20 = scalar_select %p17, %s18, %s19
    %p23 = pneg %p17
    %p24 = scmp.eq.s32.totalorder %s8, 2
    %p25 = por %p23, %p24
    %p26 = scmp.ne.s32.totalorder %s18, %s21
    %p27 = scmp.eq.s32.totalorder %s8, 0
    %p28 = por %p26, %p27
    %p29 = scmp.ne.s32.totalorder %s18, %s21
    %p30 = scmp.eq.s32.totalorder %s13, 2
    %p31 = por %p29, %p30
    %p32 = scmp.ne.s32.totalorder %s21, %s22
    %p33 = scmp.eq.s32.totalorder %s13, 0
    %p34 = por %p32, %p33
    %p35 = scmp.ne.s32.totalorder %s21, %s22
    %p36 = scmp.eq.s32.totalorder %s14, 2
    %p37 = por %p35, %p36
    %p39 = scmp.ne.s32.totalorder %s22, %s38
    %p40 = scmp.eq.s32.totalorder %s14, 0
    %p41 = por %p39, %p40
    %s43 = sadd.s32 %s42, 1
    %p46 = scmp.eq.s32.totalorder %s8, 2
    %p47 = scmp.ne.s32.totalorder %s42, %s44
    %p48 = scmp.eq.s32.totalorder %s8, 0
    %p49 = por %p47, %p48
    %p50 = scmp.ne.s32.totalorder %s42, %s44
    %p51 = scmp.eq.s32.totalorder %s13, 2
    %p52 = por %p50, %p51
    %p53 = scmp.ne.s32.totalorder %s44, %s45
    %p54 = scmp.eq.s32.totalorder %s13, 0
    %p55 = por %p53, %p54
    %p56 = scmp.ne.s32.totalorder %s44, %s45
    %p57 = scmp.eq.s32.totalorder %s14, 2
    %p58 = por %p56, %p57
    %p60 = scmp.ne.s32.totalorder %s45, %s59
    %p61 = scmp.eq.s32.totalorder %s14, 0
    %p62 = por %p60, %p61
    %s63 = ssub.s32 %s8, %s15
    %p64 = scmp.eq.s32.totalorder %s63, 0
    %s66 = sadd.s32 %s65, 1
    %s67 = scalar_select %p64, %s65, %s66
    %p70 = pneg %p64
    %p71 = scmp.eq.s32.totalorder %s8, 2
    %p72 = por %p70, %p71
    %p73 = scmp.ne.s32.totalorder %s65, %s68
    %p74 = scmp.eq.s32.totalorder %s8, 0
    %p75 = por %p73, %p74
    %p76 = scmp.ne.s32.totalorder %s65, %s68
    %p77 = scmp.eq.s32.totalorder %s13, 2
    %p78 = por %p76, %p77
    %p79 = scmp.ne.s32.totalorder %s68, %s69
    %p80 = scmp.eq.s32.totalorder %s13, 0
    %p81 = por %p79, %p80
    %p82 = scmp.ne.s32.totalorder %s68, %s69
    %p83 = scmp.eq.s32.totalorder %s14, 2
    %p84 = por %p82, %p83
    %p86 = scmp.ne.s32.totalorder %s69, %s85
    %p87 = scmp.eq.s32.totalorder %s14, 0
    %p88 = por %p86, %p87
    %p89 = scmp.le.s32.totalorder 1, %s8
    %p90 = scmp.lt.s32.totalorder %s8, 4
    %p91 = pnand %p89, %p90
    %p92 = pneg %p91
    // Predicated region
    $region9: #{cnn_to_rnn_forward.10} parent=5 // pred_check
      _
    $region10: #{cnn_to_rnn_forward.10} parent=5 // pred_check_branch
      %94 = sbr.rel (%p91) target = $region12
    $region11: #{cnn_to_rnn_forward.10} parent=5 // pred_region
      %s95 = ssub.s32 %s8, 1
      // Predicated region
      $region13: #{cnn_to_rnn_forward.10} parent=11 // pred_check
        %p96 = pneg %p55
      $region14: #{cnn_to_rnn_forward.10} parent=11 // pred_check_branch
        %98 = sbr.rel (%p96) target = $region16
      $region15: #{cnn_to_rnn_forward.10} parent=11 // pred_region
        _
      $region16: #{cnn_to_rnn_forward.10} parent=11 // pred_fallthru
        _
    $region12: #{cnn_to_rnn_forward.10} parent=5 // pred_fallthru
      _
    %p99 = scmp.lt.s32.totalorder %s8, 3
    // Predicated region
    $region17: #{cnn_to_rnn_forward.10} parent=5 // pred_check
      %p100 = pneg %p99
    $region18: #{cnn_to_rnn_forward.10} parent=5 // pred_check_branch
      %102 = sbr.rel (%p100) target = $region20
    $region19: #{cnn_to_rnn_forward.10} parent=5 // pred_region
      // Predicated region
      $region21: #{cnn_to_rnn_forward.10} parent=19 // pred_check
        %p103 = pneg %p28
      $region22: #{cnn_to_rnn_forward.10} parent=19 // pred_check_branch
        %105 = sbr.rel (%p103) target = $region24
      $region23: #{cnn_to_rnn_forward.10} parent=19 // pred_region
        %s106 = smul.u32 4, %s8
        %p107 = scmp.lt.s32.totalorder %s106, 11
        %s108 = scalar_select %p107, %s106, 11
        %s109 = smul.addr %s108, 4
        %s110 = smul.addr %s109, 8
        %s111 = scalar_lea.vmem %s0, %s110
        %s112 = smul.u32 4, %s8
      $region24: #{cnn_to_rnn_forward.10} parent=19 // pred_fallthru
        _
    $region20: #{cnn_to_rnn_forward.10} parent=5 // pred_fallthru
      _
    %p113 = scmp.le.s32.totalorder 1, %s8
    %p114 = scmp.lt.s32.totalorder %s8, 4
    %p115 = pnand %p113, %p114
    %p116 = pneg %p115
    // Predicated region
    $region25: #{cnn_to_rnn_forward.10} parent=5 // pred_check
      _
    $region26: #{cnn_to_rnn_forward.10} parent=5 // pred_check_branch
      %118 = sbr.rel (%p115) target = $region28
    $region27: #{cnn_to_rnn_forward.10} parent=5 // pred_region
      %s119 = ssub.s32 %s8, 1
      %s120 = smul.u32 4, %s13
      %p121 = scmp.lt.s32.totalorder %s120, 11
      %s122 = scalar_select %p121, %s120, 11
      %s123 = smul.addr %s122, 4
      %s124 = smul.addr %s123, 8
      %s125 = scalar_lea.vmem %s0, %s124
      %p126 = pneg %p34
      %p127 = pneg %p31
      %p128 = pneg %p55
      %p129 = pneg %p52
      %p130 = pneg %p81
      %p131 = pneg %p78
      %s132 = smul.u32 4, %s13
      %p133 = scmp.lt.s32.totalorder %s132, 11
      %s134 = scalar_select %p133, %s132, 11
      %s135 = smul.addr %s134, 8
      %s136 = scalar_lea.vmem %s2, %s135
      %s137 = smul.u32 4, %s13
      %p138 = scmp.lt.s32.totalorder %s137, 11
      %s139 = scalar_select %p138, %s137, 11
      %s140 = smul.addr %s139, 4
      %s141 = smul.addr %s140, 8
      %s142 = scalar_lea.vmem %s0, %s141
      %s143 = smul.u32 4, %s13
      %s144 = smul.u32 4, %s13
      %p145 = scmp.lt.s32.totalorder %s144, 11
      %s146 = scalar_select %p145, %s144, 11
      %s147 = smul.addr %s146, 8
      %s148 = scalar_lea.vmem %s2, %s147
      %s149 = smul.u32 4, %s13
      %p150 = scmp.eq.s32.totalorder %s13, 0
      // Predicated region
      $region29: #{cnn_to_rnn_forward.10} parent=27 // pred_check
        %p151 = pneg %p150
      $region30: #{cnn_to_rnn_forward.10} parent=27 // pred_check_branch
        %153 = sbr.rel (%p151) target = $region32
      $region31: #{cnn_to_rnn_forward.10} parent=27 // pred_region
        %154 = vst [vmem:[#allocation2] sm:$0xff] 0.0
        %155 = vst [vmem:[#allocation3] sm:$0xff] 0.0
      $region32: #{cnn_to_rnn_forward.10} parent=27 // pred_fallthru
        _
      %v156 = vld [vmem:[%s1] sm:$0xff]
      %v157 = vld [vmem:[%s1 + $0x8] sm:$0xff]
      %v158 = vld [vmem:[%s1 + $0x10] sm:$0xff]
      %v159 = vld [vmem:[%s1 + $0x18] sm:$0xff]
      %v160 = vld [vmem:[%s1 + $0x20] sm:$0xff]
      %v161 = vld [vmem:[%s1 + $0x28] sm:$0xff]
      %v162 = vld [vmem:[%s1 + $0x30] sm:$0xff]
      %v163 = vld [vmem:[%s1 + $0x38] sm:$0xff]
      %v164 = vld [vmem:[%s1 + $0x40] sm:$0xff]
      %v165 = vld [vmem:[%s1 + $0x48] sm:$0xff]
      %v166 = vld [vmem:[%s1 + $0x50] sm:$0xff]
      %v167 = vld [vmem:[%s1 + $0x58] sm:$0xff]
      %v168 = vld [vmem:[%s1 + $0x60] sm:$0xff]
      %v169 = vld [vmem:[%s1 + $0x68] sm:$0xff]
      %v170 = vld [vmem:[%s1 + $0x70] sm:$0xff]
      %v171 = vld [vmem:[%s1 + $0x78] sm:$0xff]
      %v172 = vld [vmem:[%s1 + $0x80] sm:$0xff]
      %v173 = vld [vmem:[%s1 + $0x88] sm:$0xff]
      %v174 = vld [vmem:[%s1 + $0x90] sm:$0xff]
      %v175 = vld [vmem:[%s1 + $0x98] sm:$0xff]
      %v176 = vld [vmem:[%s1 + $0xa0] sm:$0xff]
      %v177 = vld [vmem:[%s1 + $0xa8] sm:$0xff]
      %v178 = vld [vmem:[%s1 + $0xb0] sm:$0xff]
      %v179 = vld [vmem:[%s1 + $0xb8] sm:$0xff]
      %v180 = vld [vmem:[%s1 + $0xc0] sm:$0xff]
      %v181 = vld [vmem:[%s1 + $0xc8] sm:$0xff]
      %v182 = vld [vmem:[%s1 + $0xd0] sm:$0xff]
      %v183 = vld [vmem:[%s1 + $0xd8] sm:$0xff]
      %v184 = vld [vmem:[%s1 + $0xe0] sm:$0xff]
      %v185 = vld [vmem:[%s1 + $0xe8] sm:$0xff]
      %v186 = vld [vmem:[%s1 + $0xf0] sm:$0xff]
      %v187 = vld [vmem:[%s1 + $0xf8] sm:$0xff]
      %v188 = vld [vmem:[%s1 + $0x100] sm:$0xff]
      %v189 = vld [vmem:[%s1 + $0x108] sm:$0xff]
      %v190 = vld [vmem:[%s1 + $0x110] sm:$0xff]
      %v191 = vld [vmem:[%s1 + $0x118] sm:$0xff]
      %v192 = vld [vmem:[%s1 + $0x120] sm:$0xff]
      %v193 = vld [vmem:[%s1 + $0x128] sm:$0xff]
      %v194 = vld [vmem:[%s1 + $0x130] sm:$0xff]
      %v195 = vld [vmem:[%s1 + $0x138] sm:$0xff]
      %v196 = vld [vmem:[%s1 + $0x140] sm:$0xff]
      %v197 = vld [vmem:[%s1 + $0x148] sm:$0xff]
      %v198 = vld [vmem:[%s1 + $0x150] sm:$0xff]
      %v199 = vld [vmem:[%s1 + $0x158] sm:$0xff]
      %v200 = vld [vmem:[%s1 + $0x160] sm:$0xff]
      %v201 = vld [vmem:[%s1 + $0x168] sm:$0xff]
      %v202 = vld [vmem:[%s1 + $0x170] sm:$0xff]
      %v203 = vld [vmem:[%s1 + $0x178] sm:$0xff]
      %v204 = vld [vmem:[%s1 + $0x180] sm:$0xff]
      %v205 = vld [vmem:[%s1 + $0x188] sm:$0xff]
      %v206 = vld [vmem:[%s1 + $0x190] sm:$0xff]
      %v207 = vld [vmem:[%s1 + $0x198] sm:$0xff]
      %v208 = vld [vmem:[%s1 + $0x1a0] sm:$0xff]
      %v209 = vld [vmem:[%s1 + $0x1a8] sm:$0xff]
      %v210 = vld [vmem:[%s1 + $0x1b0] sm:$0xff]
      %v211 = vld [vmem:[%s1 + $0x1b8] sm:$0xff]
      %v212 = vld [vmem:[%s1 + $0x1c0] sm:$0xff]
      %v213 = vld [vmem:[%s1 + $0x1c8] sm:$0xff]
      %v214 = vld [vmem:[%s1 + $0x1d0] sm:$0xff]
      %v215 = vld [vmem:[%s1 + $0x1d8] sm:$0xff]
      %v216 = vld [vmem:[%s1 + $0x1e0] sm:$0xff]
      %v217 = vld [vmem:[%s1 + $0x1e8] sm:$0xff]
      %v218 = vld [vmem:[%s1 + $0x1f0] sm:$0xff]
      %v219 = vld [vmem:[%s1 + $0x1f8] sm:$0xff]
      %v220 = vld [vmem:[#allocation2] sm:$0xff]
      %v221 = vld [vmem:[#allocation3] sm:$0xff]
      %v222 = vld [vmem:[%s142] sm:$0xff]
      %v223 = vld [vmem:[%s142 + $0x8] sm:$0xff]
      %v224 = vld [vmem:[%s142 + $0x10] sm:$0xff]
      %v225 = vld [vmem:[%s142 + $0x18] sm:$0xff]
      %226 = vmatprep.subr.mxu0 %v157
      %227 = vmatpush1.msra.mxu0 %v156
      %228 = vmatprep.subr.mxu0 %v161
      %229 = vmatpush1.msra.mxu0 %v160
      %230 = vmatprep.subr.mxu0 %v165
      %231 = vmatpush1.msra.mxu0 %v164
      %232 = vmatprep.subr.mxu0 %v169
      %233 = vmatpush1.msra.mxu0 %v168
      %234 = vmatprep.subr.mxu0 %v173
      %235 = vmatpush1.msra.mxu0 %v172
      %236 = vmatprep.subr.mxu0 %v177
      %237 = vmatpush1.msra.mxu0 %v176
      %238 = vmatprep.subr.mxu0 %v181
      %239 = vmatpush1.msra.mxu0 %v180
      %240 = vmatprep.subr.mxu0 %v185
      %241 = vmatpush1.msra.mxu0 %v184
      %242 = vmatprep.subr.mxu0 %v189
      %243 = vmatpush1.msra.mxu0 %v188
      %244 = vmatprep.subr.mxu0 %v193
      %245 = vmatpush1.msra.mxu0 %v192
      %246 = vmatprep.subr.mxu0 %v197
      %247 = vmatpush1.msra.mxu0 %v196
      %248 = vmatprep.subr.mxu0 %v201
      %249 = vmatpush1.msra.mxu0 %v200
      %250 = vmatprep.subr.mxu0 %v205
      %251 = vmatpush1.msra.mxu0 %v204
      %252 = vmatprep.subr.mxu0 %v209
      %253 = vmatpush1.msra.mxu0 %v208
      %254 = vmatprep.subr.mxu0 %v213
      %255 = vmatpush1.msra.mxu0 %v212
      %256 = vmatprep.subr.mxu0 %v217
      %257 = vmatpush1.msra.mxu0 %v216
      %258 = vmatprep.subr.mxu0 0.0
      %259 = vmatpush1.msra.mxu0 0.0
      %260 = vmatprep.subr.mxu0 0.0
      %261 = vmatpush1.msra.mxu0 0.0
      %262 = vmatprep.subr.mxu0 0.0
      %263 = vmatpush1.msra.mxu0 0.0
      %264 = vmatprep.subr.mxu0 0.0
      %265 = vmatpush1.msra.mxu0 0.0
      %266 = vmatprep.subr.mxu0 0.0
      %267 = vmatpush1.msra.mxu0 0.0
      %268 = vmatprep.subr.mxu0 0.0
      %269 = vmatpush1.msra.mxu0 0.0
      %270 = vmatprep.subr.mxu0 0.0
      %271 = vmatpush1.msra.mxu0 0.0
      %272 = vmatprep.subr.mxu0 0.0
      %273 = vmatpush1.msra.mxu0 0.0
      %274 = vmatprep.subr.mxu0 0.0
      %275 = vmatpush1.msra.mxu0 0.0
      %276 = vmatprep.subr.mxu0 0.0
      %277 = vmatpush1.msra.mxu0 0.0
      %278 = vmatprep.subr.mxu0 0.0
      %279 = vmatpush1.msra.mxu0 0.0
      %280 = vmatprep.subr.mxu0 0.0
      %281 = vmatpush1.msra.mxu0 0.0
      %282 = vmatprep.subr.mxu0 0.0
      %283 = vmatpush1.msra.mxu0 0.0
      %284 = vmatprep.subr.mxu0 0.0
      %285 = vmatpush1.msra.mxu0 0.0
      %286 = vmatprep.subr.mxu0 0.0
      %287 = vmatpush1.msra.mxu0 0.0
      %288 = vmatprep.subr.mxu0 0.0
      %289 = vmatpush1.msra.mxu0 0.0
      %290 = vmatprep.mubr.f32.mxu0 0.0
      %291 = vmatmul.mubr.f32.gmra.mrb[0].mxu0 %v220
      %v292 = vpop.f32.mrb[0].mxu0
      %v293 = vadd.f32 0.0, %v292
      %v294 = vpop.f32.mrb[0].mxu0
      %v295 = vadd.f32 0.0, %v294
      %296 = vdwg.mxu0
      %297 = vmatprep.subr.mxu0 %v159
      %298 = vmatpush1.msra.mxu0 %v158
      %299 = vmatprep.subr.mxu0 %v163
      %300 = vmatpush1.msra.mxu0 %v162
      %301 = vmatprep.subr.mxu0 %v167
      %302 = vmatpush1.msra.mxu0 %v166
      %303 = vmatprep.subr.mxu0 %v171
      %304 = vmatpush1.msra.mxu0 %v170
      %305 = vmatprep.subr.mxu0 %v175
      %306 = vmatpush1.msra.mxu0 %v174
      %307 = vmatprep.subr.mxu0 %v179
      %308 = vmatpush1.msra.mxu0 %v178
      %309 = vmatprep.subr.mxu0 %v183
      %310 = vmatpush1.msra.mxu0 %v182
      %311 = vmatprep.subr.mxu0 %v187
      %312 = vmatpush1.msra.mxu0 %v186
      %313 = vmatprep.subr.mxu0 %v191
      %314 = vmatpush1.msra.mxu0 %v190
      %315 = vmatprep.subr.mxu0 %v195
      %316 = vmatpush1.msra.mxu0 %v194
      %317 = vmatprep.subr.mxu0 %v199
      %318 = vmatpush1.msra.mxu0 %v198
      %319 = vmatprep.subr.mxu0 %v203
      %320 = vmatpush1.msra.mxu0 %v202
      %321 = vmatprep.subr.mxu0 %v207
      %322 = vmatpush1.msra.mxu0 %v206
      %323 = vmatprep.subr.mxu0 %v211
      %324 = vmatpush1.msra.mxu0 %v210
      %325 = vmatprep.subr.mxu0 %v215
      %326 = vmatpush1.msra.mxu0 %v214
      %327 = vmatprep.subr.mxu0 %v219
      %328 = vmatpush1.msra.mxu0 %v218
      %329 = vmatprep.subr.mxu0 0.0
      %330 = vmatpush1.msra.mxu0 0.0
      %331 = vmatprep.subr.mxu0 0.0
      %332 = vmatpush1.msra.mxu0 0.0
      %333 = vmatprep.subr.mxu0 0.0
      %334 = vmatpush1.msra.mxu0 0.0
      %335 = vmatprep.subr.mxu0 0.0
      %336 = vmatpush1.msra.mxu0 0.0
      %337 = vmatprep.subr.mxu0 0.0
      %338 = vmatpush1.msra.mxu0 0.0
      %339 = vmatprep.subr.mxu0 0.0
      %340 = vmatpush1.msra.mxu0 0.0
      %341 = vmatprep.subr.mxu0 0.0
      %342 = vmatpush1.msra.mxu0 0.0
      %343 = vmatprep.subr.mxu0 0.0
      %344 = vmatpush1.msra.mxu0 0.0
      %345 = vmatprep.subr.mxu0 0.0
      %346 = vmatpush1.msra.mxu0 0.0
      %347 = vmatprep.subr.mxu0 0.0
      %348 = vmatpush1.msra.mxu0 0.0
      %349 = vmatprep.subr.mxu0 0.0
      %350 = vmatpush1.msra.mxu0 0.0
      %351 = vmatprep.subr.mxu0 0.0
      %352 = vmatpush1.msra.mxu0 0.0
      %353 = vmatprep.subr.mxu0 0.0
      %354 = vmatpush1.msra.mxu0 0.0
      %355 = vmatprep.subr.mxu0 0.0
      %356 = vmatpush1.msra.mxu0 0.0
      %357 = vmatprep.subr.mxu0 0.0
      %358 = vmatpush1.msra.mxu0 0.0
      %359 = vmatprep.subr.mxu0 0.0
      %360 = vmatpush1.msra.mxu0 0.0
      %361 = vmatprep.mubr.f32.mxu0 0.0
      %362 = vmatmul.mubr.f32.gmra.mrb[0].mxu0 %v220
      %v363 = vpop.f32.mrb[0].mxu0
      %v364 = vadd.f32 0.0, %v363
      %v365 = vpop.f32.mrb[0].mxu0
      %v366 = vadd.f32 0.0, %v365
      %367 = vdwg.mxu0
      %v368 = vadd.f32 %v222, %v293
      %v369 = vadd.f32 %v223, %v295
      %v370 = vadd.f32 %v224, %v364
      %v371 = vadd.f32 %v225, %v366
      %v372 = vxor.u32 %v368, 2147483648
      %v373 = vmul.f32 %v372, 1.442695
      %v374 = vpow.pop %v373
      %v375 = vadd.f32 %v374, 1.0
      %v376 = vrcp.pop %v375
      %v377 = vmul.f32 1.0, %v376
      %v378 = vxor.u32 %v369, 2147483648
      %v379 = vmul.f32 %v378, 1.442695
      %v380 = vpow.pop %v379
      %v381 = vadd.f32 %v380, 1.0
      %v382 = vrcp.pop %v381
      %v383 = vmul.f32 1.0, %v382
      %v384 = vtanh.pop %v370
      %v385 = vxor.u32 %v371, 2147483648
      %v386 = vmul.f32 %v385, 1.442695
      %v387 = vpow.pop %v386
      %v388 = vadd.f32 %v387, 1.0
      %v389 = vrcp.pop %v388
      %v390 = vmul.f32 1.0, %v389
      %v391 = vmul.f32 %v383, %v221
      %v392 = vmul.f32 %v377, %v384
      %v393 = vadd.f32 %v391, %v392
      %v394 = vtanh.pop %v393
      %v395 = vmul.f32 %v390, %v394
      %396 = vst [vmem:[#allocation2] sm:$0xff] %v395
      %397 = vst [vmem:[#allocation3] sm:$0xff] %v393
      %398 = vst [vmem:[%s148] sm:$0xff] %v395
      %v399 = vld [vmem:[#allocation2] sm:$0xff]
      %v400 = vld [vmem:[#allocation3] sm:$0xff]
      %s401 = scalar_lea.vmem %s142, 32
      %v402 = vld [vmem:[%s401] sm:$0xff]
      %v403 = vld [vmem:[%s401 + $0x8] sm:$0xff]
      %v404 = vld [vmem:[%s401 + $0x10] sm:$0xff]
      %v405 = vld [vmem:[%s401 + $0x18] sm:$0xff]
      %406 = vmatprep.subr.mxu0 %v157
      %407 = vmatpush1.msra.mxu0 %v156
      %408 = vmatprep.subr.mxu0 %v161
      %409 = vmatpush1.msra.mxu0 %v160
      %410 = vmatprep.subr.mxu0 %v165
      %411 = vmatpush1.msra.mxu0 %v164
      %412 = vmatprep.subr.mxu0 %v169
      %413 = vmatpush1.msra.mxu0 %v168
      %414 = vmatprep.subr.mxu0 %v173
      %415 = vmatpush1.msra.mxu0 %v172
      %416 = vmatprep.subr.mxu0 %v177
      %417 = vmatpush1.msra.mxu0 %v176
      %418 = vmatprep.subr.mxu0 %v181
      %419 = vmatpush1.msra.mxu0 %v180
      %420 = vmatprep.subr.mxu0 %v185
      %421 = vmatpush1.msra.mxu0 %v184
      %422 = vmatprep.subr.mxu0 %v189
      %423 = vmatpush1.msra.mxu0 %v188
      %424 = vmatprep.subr.mxu0 %v193
      %425 = vmatpush1.msra.mxu0 %v192
      %426 = vmatprep.subr.mxu0 %v197
      %427 = vmatpush1.msra.mxu0 %v196
      %428 = vmatprep.subr.mxu0 %v201
      %429 = vmatpush1.msra.mxu0 %v200
      %430 = vmatprep.subr.mxu0 %v205
      %431 = vmatpush1.msra.mxu0 %v204
      %432 = vmatprep.subr.mxu0 %v209
      %433 = vmatpush1.msra.mxu0 %v208
      %434 = vmatprep.subr.mxu0 %v213
      %435 = vmatpush1.msra.mxu0 %v212
      %436 = vmatprep.subr.mxu0 %v217
      %437 = vmatpush1.msra.mxu0 %v216
      %438 = vmatprep.subr.mxu0 0.0
      %439 = vmatpush1.msra.mxu0 0.0
      %440 = vmatprep.subr.mxu0 0.0
      %441 = vmatpush1.msra.mxu0 0.0
      %442 = vmatprep.subr.mxu0 0.0
      %443 = vmatpush1.msra.mxu0 0.0
      %444 = vmatprep.subr.mxu0 0.0
      %445 = vmatpush1.msra.mxu0 0.0
      %446 = vmatprep.subr.mxu0 0.0
      %447 = vmatpush1.msra.mxu0 0.0
      %448 = vmatprep.subr.mxu0 0.0
      %449 = vmatpush1.msra.mxu0 0.0
      %450 = vmatprep.subr.mxu0 0.0
      %451 = vmatpush1.msra.mxu0 0.0
      %452 = vmatprep.subr.mxu0 0.0
      %453 = vmatpush1.msra.mxu0 0.0
      %454 = vmatprep.subr.mxu0 0.0
      %455 = vmatpush1.msra.mxu0 0.0
      %456 = vmatprep.subr.mxu0 0.0
      %457 = vmatpush1.msra.mxu0 0.0
      %458 = vmatprep.subr.mxu0 0.0
      %459 = vmatpush1.msra.mxu0 0.0
      %460 = vmatprep.subr.mxu0 0.0
      %461 = vmatpush1.msra.mxu0 0.0
      %462 = vmatprep.subr.mxu0 0.0
      %463 = vmatpush1.msra.mxu0 0.0
      %464 = vmatprep.subr.mxu0 0.0
      %465 = vmatpush1.msra.mxu0 0.0
      %466 = vmatprep.subr.mxu0 0.0
      %467 = vmatpush1.msra.mxu0 0.0
      %468 = vmatprep.subr.mxu0 0.0
      %469 = vmatpush1.msra.mxu0 0.0
      %470 = vmatprep.mubr.f32.mxu0 0.0
      %471 = vmatmul.mubr.f32.gmra.mrb[0].mxu0 %v399
      %v472 = vpop.f32.mrb[0].mxu0
      %v473 = vadd.f32 0.0, %v472
      %v474 = vpop.f32.mrb[0].mxu0
      %v475 = vadd.f32 0.0, %v474
      %476 = vdwg.mxu0
      %477 = vmatprep.subr.mxu0 %v159
      %478 = vmatpush1.msra.mxu0 %v158
      %479 = vmatprep.subr.mxu0 %v163
      %480 = vmatpush1.msra.mxu0 %v162
      %481 = vmatprep.subr.mxu0 %v167
      %482 = vmatpush1.msra.mxu0 %v166
      %483 = vmatprep.subr.mxu0 %v171
      %484 = vmatpush1.msra.mxu0 %v170
      %485 = vmatprep.subr.mxu0 %v175
      %486 = vmatpush1.msra.mxu0 %v174
      %487 = vmatprep.subr.mxu0 %v179
      %488 = vmatpush1.msra.mxu0 %v178
      %489 = vmatprep.subr.mxu0 %v183
      %490 = vmatpush1.msra.mxu0 %v182
      %491 = vmatprep.subr.mxu0 %v187
      %492 = vmatpush1.msra.mxu0 %v186
      %493 = vmatprep.subr.mxu0 %v191
      %494 = vmatpush1.msra.mxu0 %v190
      %495 = vmatprep.subr.mxu0 %v195
      %496 = vmatpush1.msra.mxu0 %v194
      %497 = vmatprep.subr.mxu0 %v199
      %498 = vmatpush1.msra.mxu0 %v198
      %499 = vmatprep.subr.mxu0 %v203
      %500 = vmatpush1.msra.mxu0 %v202
      %501 = vmatprep.subr.mxu0 %v207
      %502 = vmatpush1.msra.mxu0 %v206
      %503 = vmatprep.subr.mxu0 %v211
      %504 = vmatpush1.msra.mxu0 %v210
      %505 = vmatprep.subr.mxu0 %v215
      %506 = vmatpush1.msra.mxu0 %v214
      %507 = vmatprep.subr.mxu0 %v219
      %508 = vmatpush1.msra.mxu0 %v218
      %509 = vmatprep.subr.mxu0 0.0
      %510 = vmatpush1.msra.mxu0 0.0
      %511 = vmatprep.subr.mxu0 0.0
      %512 = vmatpush1.msra.mxu0 0.0
      %513 = vmatprep.subr.mxu0 0.0
      %514 = vmatpush1.msra.mxu0 0.0
      %515 = vmatprep.subr.mxu0 0.0
      %516 = vmatpush1.msra.mxu0 0.0
      %517 = vmatprep.subr.mxu0 0.0
      %518 = vmatpush1.msra.mxu0 0.0
      %519 = vmatprep.subr.mxu0 0.0
      %520 = vmatpush1.msra.mxu0 0.0
      %521 = vmatprep.subr.mxu0 0.0
      %522 = vmatpush1.msra.mxu0 0.0
      %523 = vmatprep.subr.mxu0 0.0
      %524 = vmatpush1.msra.mxu0 0.0
      %525 = vmatprep.subr.mxu0 0.0
      %526 = vmatpush1.msra.mxu0 0.0
      %527 = vmatprep.subr.mxu0 0.0
      %528 = vmatpush1.msra.mxu0 0.0
      %529 = vmatprep.subr.mxu0 0.0
      %530 = vmatpush1.msra.mxu0 0.0
      %531 = vmatprep.subr.mxu0 0.0
      %532 = vmatpush1.msra.mxu0 0.0
      %533 = vmatprep.subr.mxu0 0.0
      %534 = vmatpush1.msra.mxu0 0.0
      %535 = vmatprep.subr.mxu0 0.0
      %536 = vmatpush1.msra.mxu0 0.0
      %537 = vmatprep.subr.mxu0 0.0
      %538 = vmatpush1.msra.mxu0 0.0
      %539 = vmatprep.subr.mxu0 0.0
      %540 = vmatpush1.msra.mxu0 0.0
      %541 = vmatprep.mubr.f32.mxu0 0.0
      %542 = vmatmul.mubr.f32.gmra.mrb[0].mxu0 %v399
      %v543 = vpop.f32.mrb[0].mxu0
      %v544 = vadd.f32 0.0, %v543
      %v545 = vpop.f32.mrb[0].mxu0
      %v546 = vadd.f32 0.0, %v545
      %547 = vdwg.mxu0
      %v548 = vadd.f32 %v402, %v473
      %v549 = vadd.f32 %v403, %v475
      %v550 = vadd.f32 %v404, %v544
      %v551 = vadd.f32 %v405, %v546
      %v552 = vxor.u32 %v548, 2147483648
      %v553 = vmul.f32 %v552, 1.442695
      %v554 = vpow.pop %v553
      %v555 = vadd.f32 %v554, 1.0
      %v556 = vrcp.pop %v555
      %v557 = vmul.f32 1.0, %v556
      %v558 = vxor.u32 %v549, 2147483648
      %v559 = vmul.f32 %v558, 1.442695
      %v560 = vpow.pop %v559
      %v561 = vadd.f32 %v560, 1.0
      %v562 = vrcp.pop %v561
      %v563 = vmul.f32 1.0, %v562
      %v564 = vtanh.pop %v550
      %v565 = vxor.u32 %v551, 2147483648
      %v566 = vmul.f32 %v565, 1.442695
      %v567 = vpow.pop %v566
      %v568 = vadd.f32 %v567, 1.0
      %v569 = vrcp.pop %v568
      %v570 = vmul.f32 1.0, %v569
      %v571 = vmul.f32 %v563, %v400
      %v572 = vmul.f32 %v557, %v564
      %v573 = vadd.f32 %v571, %v572
      %v574 = vtanh.pop %v573
      %v575 = vmul.f32 %v570, %v574
      %576 = vst [vmem:[#allocation2] sm:$0xff] %v575
      %577 = vst [vmem:[#allocation3] sm:$0xff] %v573
      %s578 = scalar_lea.vmem %s148, 8
      %579 = vst [vmem:[%s578] sm:$0xff] %v575
      %v580 = vld [vmem:[#allocation2] sm:$0xff]
      %v581 = vld [vmem:[#allocation3] sm:$0xff]
      %s582 = scalar_lea.vmem %s142, 64
      %v583 = vld [vmem:[%s582] sm:$0xff]
      %v584 = vld [vmem:[%s582 + $0x8] sm:$0xff]
      %v585 = vld [vmem:[%s582 + $0x10] sm:$0xff]
      %v586 = vld [vmem:[%s582 + $0x18] sm:$0xff]
      %587 = vmatprep.subr.mxu0 %v157
      %588 = vmatpush1.msra.mxu0 %v156
      %589 = vmatprep.subr.mxu0 %v161
      %590 = vmatpush1.msra.mxu0 %v160
      %591 = vmatprep.subr.mxu0 %v165
      %592 = vmatpush1.msra.mxu0 %v164
      %593 = vmatprep.subr.mxu0 %v169
      %594 = vmatpush1.msra.mxu0 %v168
      %595 = vmatprep.subr.mxu0 %v173
      %596 = vmatpush1.msra.mxu0 %v172
      %597 = vmatprep.subr.mxu0 %v177
      %598 = vmatpush1.msra.mxu0 %v176
      %599 = vmatprep.subr.mxu0 %v181
      %600 = vmatpush1.msra.mxu0 %v180
      %601 = vmatprep.subr.mxu0 %v185
      %602 = vmatpush1.msra.mxu0 %v184
      %603 = vmatprep.subr.mxu0 %v189
      %604 = vmatpush1.msra.mxu0 %v188
      %605 = vmatprep.subr.mxu0 %v193
      %606 = vmatpush1.msra.mxu0 %v192
      %607 = vmatprep.subr.mxu0 %v197
      %608 = vmatpush1.msra.mxu0 %v196
      %609 = vmatprep.subr.mxu0 %v201
      %610 = vmatpush1.msra.mxu0 %v200
      %611 = vmatprep.subr.mxu0 %v205
      %612 = vmatpush1.msra.mxu0 %v204
      %613 = vmatprep.subr.mxu0 %v209
      %614 = vmatpush1.msra.mxu0 %v208
      %615 = vmatprep.subr.mxu0 %v213
      %616 = vmatpush1.msra.mxu0 %v212
      %617 = vmatprep.subr.mxu0 %v217
      %618 = vmatpush1.msra.mxu0 %v216
      %619 = vmatprep.subr.mxu0 0.0
      %620 = vmatpush1.msra.mxu0 0.0
      %621 = vmatprep.subr.mxu0 0.0
      %622 = vmatpush1.msra.mxu0 0.0
      %623 = vmatprep.subr.mxu0 0.0
      %624 = vmatpush1.msra.mxu0 0.0
      %625 = vmatprep.subr.mxu0 0.0
      %626 = vmatpush1.msra.mxu0 0.0
      %627 = vmatprep.subr.mxu0 0.0
      %628 = vmatpush1.msra.mxu0 0.0
      %629 = vmatprep.subr.mxu0 0.0
      %630 = vmatpush1.msra.mxu0 0.0
      %631 = vmatprep.subr.mxu0 0.0
      %632 = vmatpush1.msra.mxu0 0.0
      %633 = vmatprep.subr.mxu0 0.0
      %634 = vmatpush1.msra.mxu0 0.0
      %635 = vmatprep.subr.mxu0 0.0
      %636 = vmatpush1.msra.mxu0 0.0
      %637 = vmatprep.subr.mxu0 0.0
      %638 = vmatpush1.msra.mxu0 0.0
      %639 = vmatprep.subr.mxu0 0.0
      %640 = vmatpush1.msra.mxu0 0.0
      %641 = vmatprep.subr.mxu0 0.0
      %642 = vmatpush1.msra.mxu0 0.0
      %643 = vmatprep.subr.mxu0 0.0
      %644 = vmatpush1.msra.mxu0 0.0
      %645 = vmatprep.subr.mxu0 0.0
      %646 = vmatpush1.msra.mxu0 0.0
      %647 = vmatprep.subr.mxu0 0.0
      %648 = vmatpush1.msra.mxu0 0.0
      %649 = vmatprep.subr.mxu0 0.0
      %650 = vmatpush1.msra.mxu0 0.0
      %651 = vmatprep.mubr.f32.mxu0 0.0
      %652 = vmatmul.mubr.f32.gmra.mrb[0].mxu0 %v580
      %v653 = vpop.f32.mrb[0].mxu0
      %v654 = vadd.f32 0.0, %v653
      %v655 = vpop.f32.mrb[0].mxu0
      %v656 = vadd.f32 0.0, %v655
      %657 = vdwg.mxu0
      %658 = vmatprep.subr.mxu0 %v159
      %659 = vmatpush1.msra.mxu0 %v158
      %660 = vmatprep.subr.mxu0 %v163
      %661 = vmatpush1.msra.mxu0 %v162
      %662 = vmatprep.subr.mxu0 %v167
      %663 = vmatpush1.msra.mxu0 %v166
      %664 = vmatprep.subr.mxu0 %v171
      %665 = vmatpush1.msra.mxu0 %v170
      %666 = vmatprep.subr.mxu0 %v175
      %667 = vmatpush1.msra.mxu0 %v174
      %668 = vmatprep.subr.mxu0 %v179
      %669 = vmatpush1.msra.mxu0 %v178
      %670 = vmatprep.subr.mxu0 %v183
      %671 = vmatpush1.msra.mxu0 %v182
      %672 = vmatprep.subr.mxu0 %v187
      %673 = vmatpush1.msra.mxu0 %v186
      %674 = vmatprep.subr.mxu0 %v191
      %675 = vmatpush1.msra.mxu0 %v190
      %676 = vmatprep.subr.mxu0 %v195
      %677 = vmatpush1.msra.mxu0 %v194
      %678 = vmatprep.subr.mxu0 %v199
      %679 = vmatpush1.msra.mxu0 %v198
      %680 = vmatprep.subr.mxu0 %v203
      %681 = vmatpush1.msra.mxu0 %v202
      %682 = vmatprep.subr.mxu0 %v207
      %683 = vmatpush1.msra.mxu0 %v206
      %684 = vmatprep.subr.mxu0 %v211
      %685 = vmatpush1.msra.mxu0 %v210
      %686 = vmatprep.subr.mxu0 %v215
      %687 = vmatpush1.msra.mxu0 %v214
      %688 = vmatprep.subr.mxu0 %v219
      %689 = vmatpush1.msra.mxu0 %v218
      %690 = vmatprep.subr.mxu0 0.0
      %691 = vmatpush1.msra.mxu0 0.0
      %692 = vmatprep.subr.mxu0 0.0
      %693 = vmatpush1.msra.mxu0 0.0
      %694 = vmatprep.subr.mxu0 0.0
      %695 = vmatpush1.msra.mxu0 0.0
      %696 = vmatprep.subr.mxu0 0.0
      %697 = vmatpush1.msra.mxu0 0.0
      %698 = vmatprep.subr.mxu0 0.0
      %699 = vmatpush1.msra.mxu0 0.0
      %700 = vmatprep.subr.mxu0 0.0
      %701 = vmatpush1.msra.mxu0 0.0
      %702 = vmatprep.subr.mxu0 0.0
      %703 = vmatpush1.msra.mxu0 0.0
      %704 = vmatprep.subr.mxu0 0.0
      %705 = vmatpush1.msra.mxu0 0.0
      %706 = vmatprep.subr.mxu0 0.0
      %707 = vmatpush1.msra.mxu0 0.0
      %708 = vmatprep.subr.mxu0 0.0
      %709 = vmatpush1.msra.mxu0 0.0
      %710 = vmatprep.subr.mxu0 0.0
      %711 = vmatpush1.msra.mxu0 0.0
      %712 = vmatprep.subr.mxu0 0.0
      %713 = vmatpush1.msra.mxu0 0.0
      %714 = vmatprep.subr.mxu0 0.0
      %715 = vmatpush1.msra.mxu0 0.0
      %716 = vmatprep.subr.mxu0 0.0
      %717 = vmatpush1.msra.mxu0 0.0
      %718 = vmatprep.subr.mxu0 0.0
      %719 = vmatpush1.msra.mxu0 0.0
      %720 = vmatprep.subr.mxu0 0.0
      %721 = vmatpush1.msra.mxu0 0.0
      %722 = vmatprep.mubr.f32.mxu0 0.0
      %723 = vmatmul.mubr.f32.gmra.mrb[0].mxu0 %v580
      %v724 = vpop.f32.mrb[0].mxu0
      %v725 = vadd.f32 0.0, %v724
      %v726 = vpop.f32.mrb[0].mxu0
      %v727 = vadd.f32 0.0, %v726
      %728 = vdwg.mxu0
      %v729 = vadd.f32 %v583, %v654
      %v730 = vadd.f32 %v584, %v656
      %v731 = vadd.f32 %v585, %v725
      %v732 = vadd.f32 %v586, %v727
      %v733 = vxor.u32 %v729, 2147483648
      %v734 = vmul.f32 %v733, 1.442695
      %v735 = vpow.pop %v734
      %v736 = vadd.f32 %v735, 1.0
      %v737 = vrcp.pop %v736
      %v738 = vmul.f32 1.0, %v737
      %v739 = vxor.u32 %v730, 2147483648
      %v740 = vmul.f32 %v739, 1.442695
      %v741 = vpow.pop %v740
      %v742 = vadd.f32 %v741, 1.0
      %v743 = vrcp.pop %v742
      %v744 = vmul.f32 1.0, %v743
      %v745 = vtanh.pop %v731
      %v746 = vxor.u32 %v732, 2147483648
      %v747 = vmul.f32 %v746, 1.442695
      %v748 = vpow.pop %v747
      %v749 = vadd.f32 %v748, 1.0
      %v750 = vrcp.pop %v749
      %v751 = vmul.f32 1.0, %v750
      %v752 = vmul.f32 %v744, %v581
      %v753 = vmul.f32 %v738, %v745
      %v754 = vadd.f32 %v752, %v753
      %v755 = vtanh.pop %v754
      %v756 = vmul.f32 %v751, %v755
      %757 = vst [vmem:[#allocation2] sm:$0xff] %v756
      %758 = vst [vmem:[#allocation3] sm:$0xff] %v754
      %s759 = scalar_lea.vmem %s148, 16
      %760 = vst [vmem:[%s759] sm:$0xff] %v756
      %v761 = vld [vmem:[#allocation2] sm:$0xff]
      %v762 = vld [vmem:[#allocation3] sm:$0xff]
      %s763 = scalar_lea.vmem %s142, 96
      %v764 = vld [vmem:[%s763] sm:$0xff]
      %v765 = vld [vmem:[%s763 + $0x8] sm:$0xff]
      %v766 = vld [vmem:[%s763 + $0x10] sm:$0xff]
      %v767 = vld [vmem:[%s763 + $0x18] sm:$0xff]
      %768 = vmatprep.subr.mxu0 %v157
      %769 = vmatpush1.msra.mxu0 %v156
      %770 = vmatprep.subr.mxu0 %v161
      %771 = vmatpush1.msra.mxu0 %v160
      %772 = vmatprep.subr.mxu0 %v165
      %773 = vmatpush1.msra.mxu0 %v164
      %774 = vmatprep.subr.mxu0 %v169
      %775 = vmatpush1.msra.mxu0 %v168
      %776 = vmatprep.subr.mxu0 %v173
      %777 = vmatpush1.msra.mxu0 %v172
      %778 = vmatprep.subr.mxu0 %v177
      %779 = vmatpush1.msra.mxu0 %v176
      %780 = vmatprep.subr.mxu0 %v181
      %781 = vmatpush1.msra.mxu0 %v180
      %782 = vmatprep.subr.mxu0 %v185
      %783 = vmatpush1.msra.mxu0 %v184
      %784 = vmatprep.subr.mxu0 %v189
      %785 = vmatpush1.msra.mxu0 %v188
      %786 = vmatprep.subr.mxu0 %v193
      %787 = vmatpush1.msra.mxu0 %v192
      %788 = vmatprep.subr.mxu0 %v197
      %789 = vmatpush1.msra.mxu0 %v196
      %790 = vmatprep.subr.mxu0 %v201
      %791 = vmatpush1.msra.mxu0 %v200
      %792 = vmatprep.subr.mxu0 %v205
      %793 = vmatpush1.msra.mxu0 %v204
      %794 = vmatprep.subr.mxu0 %v209
      %795 = vmatpush1.msra.mxu0 %v208
      %796 = vmatprep.subr.mxu0 %v213
      %797 = vmatpush1.msra.mxu0 %v212
      %798 = vmatprep.subr.mxu0 %v217
      %799 = vmatpush1.msra.mxu0 %v216
      %800 = vmatprep.subr.mxu0 0.0
      %801 = vmatpush1.msra.mxu0 0.0
      %802 = vmatprep.subr.mxu0 0.0
      %803 = vmatpush1.msra.mxu0 0.0
      %804 = vmatprep.subr.mxu0 0.0
      %805 = vmatpush1.msra.mxu0 0.0
      %806 = vmatprep.subr.mxu0 0.0
      %807 = vmatpush1.msra.mxu0 0.0
      %808 = vmatprep.subr.mxu0 0.0
      %809 = vmatpush1.msra.mxu0 0.0
      %810 = vmatprep.subr.mxu0 0.0
      %811 = vmatpush1.msra.mxu0 0.0
      %812 = vmatprep.subr.mxu0 0.0
      %813 = vmatpush1.msra.mxu0 0.0
      %814 = vmatprep.subr.mxu0 0.0
      %815 = vmatpush1.msra.mxu0 0.0
      %816 = vmatprep.subr.mxu0 0.0
      %817 = vmatpush1.msra.mxu0 0.0
      %818 = vmatprep.subr.mxu0 0.0
      %819 = vmatpush1.msra.mxu0 0.0
      %820 = vmatprep.subr.mxu0 0.0
      %821 = vmatpush1.msra.mxu0 0.0
      %822 = vmatprep.subr.mxu0 0.0
      %823 = vmatpush1.msra.mxu0 0.0
      %824 = vmatprep.subr.mxu0 0.0
      %825 = vmatpush1.msra.mxu0 0.0
      %826 = vmatprep.subr.mxu0 0.0
      %827 = vmatpush1.msra.mxu0 0.0
      %828 = vmatprep.subr.mxu0 0.0
      %829 = vmatpush1.msra.mxu0 0.0
      %830 = vmatprep.subr.mxu0 0.0
      %831 = vmatpush1.msra.mxu0 0.0
      %832 = vmatprep.mubr.f32.mxu0 0.0
      %833 = vmatmul.mubr.f32.gmra.mrb[0].mxu0 %v761
      %v834 = vpop.f32.mrb[0].mxu0
      %v835 = vadd.f32 0.0, %v834
      %v836 = vpop.f32.mrb[0].mxu0
      %v837 = vadd.f32 0.0, %v836
      %838 = vdwg.mxu0
      %839 = vmatprep.subr.mxu0 %v159
      %840 = vmatpush1.msra.mxu0 %v158
      %841 = vmatprep.subr.mxu0 %v163
      %842 = vmatpush1.msra.mxu0 %v162
      %843 = vmatprep.subr.mxu0 %v167
      %844 = vmatpush1.msra.mxu0 %v166
      %845 = vmatprep.subr.mxu0 %v171
      %846 = vmatpush1.msra.mxu0 %v170
      %847 = vmatprep.subr.mxu0 %v175
      %848 = vmatpush1.msra.mxu0 %v174
      %849 = vmatprep.subr.mxu0 %v179
      %850 = vmatpush1.msra.mxu0 %v178
      %851 = vmatprep.subr.mxu0 %v183
      %852 = vmatpush1.msra.mxu0 %v182
      %853 = vmatprep.subr.mxu0 %v187
      %854 = vmatpush1.msra.mxu0 %v186
      %855 = vmatprep.subr.mxu0 %v191
      %856 = vmatpush1.msra.mxu0 %v190
      %857 = vmatprep.subr.mxu0 %v195
      %858 = vmatpush1.msra.mxu0 %v194
      %859 = vmatprep.subr.mxu0 %v199
      %860 = vmatpush1.msra.mxu0 %v198
      %861 = vmatprep.subr.mxu0 %v203
      %862 = vmatpush1.msra.mxu0 %v202
      %863 = vmatprep.subr.mxu0 %v207
      %864 = vmatpush1.msra.mxu0 %v206
      %865 = vmatprep.subr.mxu0 %v211
      %866 = vmatpush1.msra.mxu0 %v210
      %867 = vmatprep.subr.mxu0 %v215
      %868 = vmatpush1.msra.mxu0 %v214
      %869 = vmatprep.subr.mxu0 %v219
      %870 = vmatpush1.msra.mxu0 %v218
      %871 = vmatprep.subr.mxu0 0.0
      %872 = vmatpush1.msra.mxu0 0.0
      %873 = vmatprep.subr.mxu0 0.0
      %874 = vmatpush1.msra.mxu0 0.0
      %875 = vmatprep.subr.mxu0 0.0
      %876 = vmatpush1.msra.mxu0 0.0
      %877 = vmatprep.subr.mxu0 0.0
      %878 = vmatpush1.msra.mxu0 0.0
      %879 = vmatprep.subr.mxu0 0.0
      %880 = vmatpush1.msra.mxu0 0.0
      %881 = vmatprep.subr.mxu0 0.0
      %882 = vmatpush1.msra.mxu0 0.0
      %883 = vmatprep.subr.mxu0 0.0
      %884 = vmatpush1.msra.mxu0 0.0
      %885 = vmatprep.subr.mxu0 0.0
      %886 = vmatpush1.msra.mxu0 0.0
      %887 = vmatprep.subr.mxu0 0.0
      %888 = vmatpush1.msra.mxu0 0.0
      %889 = vmatprep.subr.mxu0 0.0
      %890 = vmatpush1.msra.mxu0 0.0
      %891 = vmatprep.subr.mxu0 0.0
      %892 = vmatpush1.msra.mxu0 0.0
      %893 = vmatprep.subr.mxu0 0.0
      %894 = vmatpush1.msra.mxu0 0.0
      %895 = vmatprep.subr.mxu0 0.0
      %896 = vmatpush1.msra.mxu0 0.0
      %897 = vmatprep.subr.mxu0 0.0
      %898 = vmatpush1.msra.mxu0 0.0
      %899 = vmatprep.subr.mxu0 0.0
      %900 = vmatpush1.msra.mxu0 0.0
      %901 = vmatprep.subr.mxu0 0.0
      %902 = vmatpush1.msra.mxu0 0.0
      %903 = vmatprep.mubr.f32.mxu0 0.0
      %904 = vmatmul.mubr.f32.gmra.mrb[0].mxu0 %v761
      %v905 = vpop.f32.mrb[0].mxu0
      %v906 = vadd.f32 0.0, %v905
      %v907 = vpop.f32.mrb[0].mxu0
      %v908 = vadd.f32 0.0, %v907
      %909 = vdwg.mxu0
      %v910 = vadd.f32 %v764, %v835
      %v911 = vadd.f32 %v765, %v837
      %v912 = vadd.f32 %v766, %v906
      %v913 = vadd.f32 %v767, %v908
      %v914 = vxor.u32 %v910, 2147483648
      %v915 = vmul.f32 %v914, 1.442695
      %v916 = vpow.pop %v915
      %v917 = vadd.f32 %v916, 1.0
      %v918 = vrcp.pop %v917
      %v919 = vmul.f32 1.0, %v918
      %v920 = vxor.u32 %v911, 2147483648
      %v921 = vmul.f32 %v920, 1.442695
      %v922 = vpow.pop %v921
      %v923 = vadd.f32 %v922, 1.0
      %v924 = vrcp.pop %v923
      %v925 = vmul.f32 1.0, %v924
      %v926 = vtanh.pop %v912
      %v927 = vxor.u32 %v913, 2147483648
      %v928 = vmul.f32 %v927, 1.442695
      %v929 = vpow.pop %v928
      %v930 = vadd.f32 %v929, 1.0
      %v931 = vrcp.pop %v930
      %v932 = vmul.f32 1.0, %v931
      %v933 = vmul.f32 %v925, %v762
      %v934 = vmul.f32 %v919, %v926
      %v935 = vadd.f32 %v933, %v934
      %v936 = vtanh.pop %v935
      %v937 = vmul.f32 %v932, %v936
      %938 = vst [vmem:[#allocation2] sm:$0xff] %v937
      %939 = vst [vmem:[#allocation3] sm:$0xff] %v935
      %s940 = scalar_lea.vmem %s148, 24
      %941 = vst [vmem:[%s940] sm:$0xff] %v937
      %s942 = smul.u32 4, %s13
      %p943 = scmp.lt.s32.totalorder %s942, 11
      %s944 = scalar_select %p943, %s942, 11
      %s945 = smul.addr %s944, 8
      %s946 = scalar_lea.vmem %s2, %s945
      // Predicated region
      $region33: #{cnn_to_rnn_forward.10} parent=27 // pred_check
        %p947 = pneg %p78
      $region34: #{cnn_to_rnn_forward.10} parent=27 // pred_check_branch
        %949 = sbr.rel (%p947) target = $region36
      $region35: #{cnn_to_rnn_forward.10} parent=27 // pred_region
        %s950 = smul.u32 4, %s13
      $region36: #{cnn_to_rnn_forward.10} parent=27 // pred_fallthru
        _
    $region28: #{cnn_to_rnn_forward.10} parent=5 // pred_fallthru
      _
    %p951 = scmp.le.s32.totalorder 2, %s8
    // Predicated region
    $region37: #{cnn_to_rnn_forward.10} parent=5 // pred_check
      %p952 = pneg %p951
    $region38: #{cnn_to_rnn_forward.10} parent=5 // pred_check_branch
      %954 = sbr.rel (%p952) target = $region40
    $region39: #{cnn_to_rnn_forward.10} parent=5 // pred_region
      %s955 = ssub.s32 %s8, 2
      // Predicated region
      $region41: #{cnn_to_rnn_forward.10} parent=39 // pred_check
        %p956 = pneg %p84
      $region42: #{cnn_to_rnn_forward.10} parent=39 // pred_check_branch
        %958 = sbr.rel (%p956) target = $region44
      $region43: #{cnn_to_rnn_forward.10} parent=39 // pred_region
        %s959 = smul.u32 4, %s14
        %p960 = scmp.lt.s32.totalorder %s959, 11
        %s961 = scalar_select %p960, %s959, 11
        %s962 = smul.addr %s961, 8
        %s963 = scalar_lea.vmem %s2, %s962
      $region44: #{cnn_to_rnn_forward.10} parent=39 // pred_fallthru
        _
    $region40: #{cnn_to_rnn_forward.10} parent=5 // pred_fallthru
      _
  $region6: #{cnn_to_rnn_forward.10} parent=0 // loop_footer
    %s12 = sadd.s32 1, %s8
  $region7: #{cnn_to_rnn_forward.10} parent=0 // loop_footer_branch
    %7 = sbr.rel target = $region3
  $region8: #{cnn_to_rnn_forward.10} parent=0 // loop_exit
    _

// kernel: cnn_to_rnn_forward.9
$region0: #{cnn_to_rnn_forward.9}
  #allocation0 [shape = 'u32[]', space=smem, size = 0x4, offset = 0x4, fixed_abs, tag = 'smem constant byte address 0x4 - core index']
  #allocation1 [shape = 'u32[144,128]{1,0:T(1,128)}', space=vmem, size = 0x12000, scoped, tag = 'internal scratch']
  #allocation2 [shape = 'f32[96,512]{1,0:T(8,128)}', space=vmem, size = 0x30000, scoped, tag = 'scratch operand']
  %s0 = inlined_call_operand.vmem [shape: bf16[96,128], index: 0, kind: input, shape index: {}]
  %s1 = inlined_call_operand.vmem [shape: bf16[128,512], index: 1, kind: input, shape index: {}]
  %s2 = inlined_call_operand.vmem [shape: f32[1,512], index: 2, kind: input, shape index: {}]
  %s3 = inlined_call_operand.vmem [shape: f32[96,512], index: 3, kind: output, shape index: {}]
  %s4 = sld [smem:[#allocation0]]
  $region30: #{cnn_to_rnn_forward.9} parent=0
    _
  %s6 = ssub.s32 1, %s4
  %s7 = scalar_select 0, %s6, %s4
  // Predicated region
  $region2: #{cnn_to_rnn_forward.9} parent=0 // pred_check
    _
  $region3: #{cnn_to_rnn_forward.9} parent=0 // pred_check_branch
    %9 = sbr.rel (0) target = $region5
  $region4: #{cnn_to_rnn_forward.9} parent=0 // pred_region
    _
  $region5: #{cnn_to_rnn_forward.9} parent=0 // pred_fallthru
    _
  // Predicated region
  $region6: #{cnn_to_rnn_forward.9} parent=0 // pred_check
    _
  $region7: #{cnn_to_rnn_forward.9} parent=0 // pred_check_branch
    %11 = sbr.rel (0) target = $region9
  $region8: #{cnn_to_rnn_forward.9} parent=0 // pred_region
    _
  $region9: #{cnn_to_rnn_forward.9} parent=0 // pred_fallthru
    _
  // Predicated region
  $region10: #{cnn_to_rnn_forward.9} parent=0 // pred_check
    _
  $region11: #{cnn_to_rnn_forward.9} parent=0 // pred_check_branch
    %13 = sbr.rel (0) target = $region13
  $region12: #{cnn_to_rnn_forward.9} parent=0 // pred_region
    _
  $region13: #{cnn_to_rnn_forward.9} parent=0 // pred_fallthru
    _
  %p15 = scmp.eq.s32.totalorder 0, 0
  // Predicated region
  $region14: #{cnn_to_rnn_forward.9} parent=0 // pred_check
    %p16 = pneg %p15
  $region15: #{cnn_to_rnn_forward.9} parent=0 // pred_check_branch
    %18 = sbr.rel (%p16) target = $region17
  $region16: #{cnn_to_rnn_forward.9} parent=0 // pred_region
    %19 = vst [vmem:[#allocation2] sm:$0xff] 0.0
    %20 = vst [vmem:[#allocation2 + $0x8] sm:$0xff] 0.0
    %21 = vst [vmem:[#allocation2 + $0x10] sm:$0xff] 0.0
    %22 = vst [vmem:[#allocation2 + $0x18] sm:$0xff] 0.0
    %23 = vst [vmem:[#allocation2 + $0x20] sm:$0xff] 0.0
    %24 = vst [vmem:[#allocation2 + $0x28] sm:$0xff] 0.0
    %25 = vst [vmem:[#allocation2 + $0x30] sm:$0xff] 0.0
    %26 = vst [vmem:[#allocation2 + $0x38] sm:$0xff] 0.0
    %27 = vst [vmem:[#allocation2 + $0x40] sm:$0xff] 0.0
    %28 = vst [vmem:[#allocation2 + $0x48] sm:$0xff] 0.0
    %29 = vst [vmem:[#allocation2 + $0x50] sm:$0xff] 0.0
    %30 = vst [vmem:[#allocation2 + $0x58] sm:$0xff] 0.0
    %31 = vst [vmem:[#allocation2 + $0x60] sm:$0xff] 0.0
    %32 = vst [vmem:[#allocation2 + $0x68] sm:$0xff] 0.0
    %33 = vst [vmem:[#allocation2 + $0x70] sm:$0xff] 0.0
    %34 = vst [vmem:[#allocation2 + $0x78] sm:$0xff] 0.0
    %35 = vst [vmem:[#allocation2 + $0x80] sm:$0xff] 0.0
    %36 = vst [vmem:[#allocation2 + $0x88] sm:$0xff] 0.0
    %37 = vst [vmem:[#allocation2 + $0x90] sm:$0xff] 0.0
    %38 = vst [vmem:[#allocation2 + $0x98] sm:$0xff] 0.0
    %39 = vst [vmem:[#allocation2 + $0xa0] sm:$0xff] 0.0
    %40 = vst [vmem:[#allocation2 + $0xa8] sm:$0xff] 0.0
    %41 = vst [vmem:[#allocation2 + $0xb0] sm:$0xff] 0.0
    %42 = vst [vmem:[#allocation2 + $0xb8] sm:$0xff] 0.0
    %43 = vst [vmem:[#allocation2 + $0xc0] sm:$0xff] 0.0
    %44 = vst [vmem:[#allocation2 + $0xc8] sm:$0xff] 0.0
    %45 = vst [vmem:[#allocation2 + $0xd0] sm:$0xff] 0.0
    %46 = vst [vmem:[#allocation2 + $0xd8] sm:$0xff] 0.0
    %47 = vst [vmem:[#allocation2 + $0xe0] sm:$0xff] 0.0
    %48 = vst [vmem:[#allocation2 + $0xe8] sm:$0xff] 0.0
    %49 = vst [vmem:[#allocation2 + $0xf0] sm:$0xff] 0.0
    %50 = vst [vmem:[#allocation2 + $0xf8] sm:$0xff] 0.0
    %51 = vst [vmem:[#allocation2 + $0x100] sm:$0xff] 0.0
    %52 = vst [vmem:[#allocation2 + $0x108] sm:$0xff] 0.0
    %53 = vst [vmem:[#allocation2 + $0x110] sm:$0xff] 0.0
    %54 = vst [vmem:[#allocation2 + $0x118] sm:$0xff] 0.0
    %55 = vst [vmem:[#allocation2 + $0x120] sm:$0xff] 0.0
    %56 = vst [vmem:[#allocation2 + $0x128] sm:$0xff] 0.0
    %57 = vst [vmem:[#allocation2 + $0x130] sm:$0xff] 0.0
    %58 = vst [vmem:[#allocation2 + $0x138] sm:$0xff] 0.0
    %59 = vst [vmem:[#allocation2 + $0x140] sm:$0xff] 0.0
    %60 = vst [vmem:[#allocation2 + $0x148] sm:$0xff] 0.0
    %61 = vst [vmem:[#allocation2 + $0x150] sm:$0xff] 0.0
    %62 = vst [vmem:[#allocation2 + $0x158] sm:$0xff] 0.0
    %63 = vst [vmem:[#allocation2 + $0x160] sm:$0xff] 0.0
    %64 = vst [vmem:[#allocation2 + $0x168] sm:$0xff] 0.0
    %65 = vst [vmem:[#allocation2 + $0x170] sm:$0xff] 0.0
    %66 = vst [vmem:[#allocation2 + $0x178] sm:$0xff] 0.0
  $region17: #{cnn_to_rnn_forward.9} parent=0 // pred_fallthru
    _
  %v67 = vld [vmem:[#allocation2] sm:$0xff]
  %v68 = vld [vmem:[#allocation2 + $0x8] sm:$0xff]
  %v69 = vld [vmem:[#allocation2 + $0x10] sm:$0xff]
  %v70 = vld [vmem:[#allocation2 + $0x18] sm:$0xff]
  %v71 = vld [vmem:[#allocation2 + $0x20] sm:$0xff]
  %v72 = vld [vmem:[#allocation2 + $0x28] sm:$0xff]
  %v73 = vld [vmem:[#allocation2 + $0x30] sm:$0xff]
  %v74 = vld [vmem:[#allocation2 + $0x38] sm:$0xff]
  %v75 = vld [vmem:[#allocation2 + $0x40] sm:$0xff]
  %v76 = vld [vmem:[#allocation2 + $0x48] sm:$0xff]
  %v77 = vld [vmem:[#allocation2 + $0x50] sm:$0xff]
  %v78 = vld [vmem:[#allocation2 + $0x58] sm:$0xff]
  %v79 = vld [vmem:[#allocation2 + $0x60] sm:$0xff]
  %v80 = vld [vmem:[#allocation2 + $0x68] sm:$0xff]
  %v81 = vld [vmem:[#allocation2 + $0x70] sm:$0xff]
  %v82 = vld [vmem:[#allocation2 + $0x78] sm:$0xff]
  %v83 = vld [vmem:[#allocation2 + $0x80] sm:$0xff]
  %v84 = vld [vmem:[#allocation2 + $0x88] sm:$0xff]
  %v85 = vld [vmem:[#allocation2 + $0x90] sm:$0xff]
  %v86 = vld [vmem:[#allocation2 + $0x98] sm:$0xff]
  %v87 = vld [vmem:[#allocation2 + $0xa0] sm:$0xff]
  %v88 = vld [vmem:[#allocation2 + $0xa8] sm:$0xff]
  %v89 = vld [vmem:[#allocation2 + $0xb0] sm:$0xff]
  %v90 = vld [vmem:[#allocation2 + $0xb8] sm:$0xff]
  %v91 = vld [vmem:[#allocation2 + $0xc0] sm:$0xff]
  %v92 = vld [vmem:[#allocation2 + $0xc8] sm:$0xff]
  %v93 = vld [vmem:[#allocation2 + $0xd0] sm:$0xff]
  %v94 = vld [vmem:[#allocation2 + $0xd8] sm:$0xff]
  %v95 = vld [vmem:[#allocation2 + $0xe0] sm:$0xff]
  %v96 = vld [vmem:[#allocation2 + $0xe8] sm:$0xff]
  %v97 = vld [vmem:[#allocation2 + $0xf0] sm:$0xff]
  %v98 = vld [vmem:[#allocation2 + $0xf8] sm:$0xff]
  %v99 = vld [vmem:[#allocation2 + $0x100] sm:$0xff]
  %v100 = vld [vmem:[#allocation2 + $0x108] sm:$0xff]
  %v101 = vld [vmem:[#allocation2 + $0x110] sm:$0xff]
  %v102 = vld [vmem:[#allocation2 + $0x118] sm:$0xff]
  %v103 = vld [vmem:[#allocation2 + $0x120] sm:$0xff]
  %v104 = vld [vmem:[#allocation2 + $0x128] sm:$0xff]
  %v105 = vld [vmem:[#allocation2 + $0x130] sm:$0xff]
  %v106 = vld [vmem:[#allocation2 + $0x138] sm:$0xff]
  %v107 = vld [vmem:[#allocation2 + $0x140] sm:$0xff]
  %v108 = vld [vmem:[#allocation2 + $0x148] sm:$0xff]
  %v109 = vld [vmem:[#allocation2 + $0x150] sm:$0xff]
  %v110 = vld [vmem:[#allocation2 + $0x158] sm:$0xff]
  %v111 = vld [vmem:[#allocation2 + $0x160] sm:$0xff]
  %v112 = vld [vmem:[#allocation2 + $0x168] sm:$0xff]
  %v113 = vld [vmem:[#allocation2 + $0x170] sm:$0xff]
  %v114 = vld [vmem:[#allocation2 + $0x178] sm:$0xff]
  %v115 = vld [vmem:[%s0] sm:$0xf]
  %v116 = vld [vmem:[%s0 + $0x4] sm:$0xf]
  %v117 = vld [vmem:[%s0 + $0x8] sm:$0xf]
  %v118 = vld [vmem:[%s0 + $0xc] sm:$0xf]
  %v119 = vld [vmem:[%s0 + $0x10] sm:$0xf]
  %v120 = vld [vmem:[%s0 + $0x14] sm:$0xf]
  %v121 = vld [vmem:[%s0 + $0x18] sm:$0xf]
  %v122 = vld [vmem:[%s0 + $0x1c] sm:$0xf]
  %v123 = vld [vmem:[%s0 + $0x20] sm:$0xf]
  %v124 = vld [vmem:[%s0 + $0x24] sm:$0xf]
  %v125 = vld [vmem:[%s0 + $0x28] sm:$0xf]
  %v126 = vld [vmem:[%s0 + $0x2c] sm:$0xf]
  %v127 = vld [vmem:[%s1] sm:$0xff]
  %v128 = vld [vmem:[%s1 + $0x8] sm:$0xff]
  %v129 = vld [vmem:[%s1 + $0x10] sm:$0xff]
  %v130 = vld [vmem:[%s1 + $0x18] sm:$0xff]
  %v131 = vld [vmem:[%s1 + $0x20] sm:$0xff]
  %v132 = vld [vmem:[%s1 + $0x28] sm:$0xff]
  %v133 = vld [vmem:[%s1 + $0x30] sm:$0xff]
  %v134 = vld [vmem:[%s1 + $0x38] sm:$0xff]
  %v135 = vld [vmem:[%s1 + $0x40] sm:$0xff]
  %v136 = vld [vmem:[%s1 + $0x48] sm:$0xff]
  %v137 = vld [vmem:[%s1 + $0x50] sm:$0xff]
  %v138 = vld [vmem:[%s1 + $0x58] sm:$0xff]
  %v139 = vld [vmem:[%s1 + $0x60] sm:$0xff]
  %v140 = vld [vmem:[%s1 + $0x68] sm:$0xff]
  %v141 = vld [vmem:[%s1 + $0x70] sm:$0xff]
  %v142 = vld [vmem:[%s1 + $0x78] sm:$0xff]
  %v143 = vld [vmem:[%s1 + $0x80] sm:$0xff]
  %v144 = vld [vmem:[%s1 + $0x88] sm:$0xff]
  %v145 = vld [vmem:[%s1 + $0x90] sm:$0xff]
  %v146 = vld [vmem:[%s1 + $0x98] sm:$0xff]
  %v147 = vld [vmem:[%s1 + $0xa0] sm:$0xff]
  %v148 = vld [vmem:[%s1 + $0xa8] sm:$0xff]
  %v149 = vld [vmem:[%s1 + $0xb0] sm:$0xff]
  %v150 = vld [vmem:[%s1 + $0xb8] sm:$0xff]
  %v151 = vld [vmem:[%s1 + $0xc0] sm:$0xff]
  %v152 = vld [vmem:[%s1 + $0xc8] sm:$0xff]
  %v153 = vld [vmem:[%s1 + $0xd0] sm:$0xff]
  %v154 = vld [vmem:[%s1 + $0xd8] sm:$0xff]
  %v155 = vld [vmem:[%s1 + $0xe0] sm:$0xff]
  %v156 = vld [vmem:[%s1 + $0xe8] sm:$0xff]
  %v157 = vld [vmem:[%s1 + $0xf0] sm:$0xff]
  %v158 = vld [vmem:[%s1 + $0xf8] sm:$0xff]
  %v171 = vunpack.c.l.b16 %v115
  %v172 = vunpack.c.l.b16 %v116
  %v173 = vunpack.c.l.b16 %v117
  %v174 = vunpack.c.l.b16 %v118
  %v175 = vunpack.c.l.b16 %v119
  %v176 = vunpack.c.l.b16 %v120
  %v177 = vunpack.c.l.b16 %v121
  %v178 = vunpack.c.l.b16 %v122
  %v179 = vunpack.c.l.b16 %v123
  %v180 = vunpack.c.l.b16 %v124
  %v181 = vunpack.c.l.b16 %v125
  %v182 = vunpack.c.l.b16 %v126
  %v183 = vpack.c.b16 %v172, %v171
  %v184 = vpack.c.b16 %v174, %v173
  %v185 = vpack.c.b16 %v176, %v175
  %v186 = vpack.c.b16 %v178, %v177
  %v187 = vpack.c.b16 %v180, %v179
  %v188 = vpack.c.b16 %v182, %v181
  %v227 = vunpack.c.l.b16 %v127
  %v228 = vunpack.c.h.b16 %v127
  %v229 = vunpack.c.l.b16 %v128
  %v230 = vunpack.c.h.b16 %v128
  %v231 = vunpack.c.l.b16 %v129
  %v232 = vunpack.c.h.b16 %v129
  %v233 = vunpack.c.l.b16 %v130
  %v234 = vunpack.c.h.b16 %v130
  %v235 = vunpack.c.l.b16 %v131
  %v236 = vunpack.c.h.b16 %v131
  %v237 = vunpack.c.l.b16 %v132
  %v238 = vunpack.c.h.b16 %v132
  %v239 = vunpack.c.l.b16 %v133
  %v240 = vunpack.c.h.b16 %v133
  %v241 = vunpack.c.l.b16 %v134
  %v242 = vunpack.c.h.b16 %v134
  %v243 = vunpack.c.l.b16 %v135
  %v244 = vunpack.c.h.b16 %v135
  %v245 = vunpack.c.l.b16 %v136
  %v246 = vunpack.c.h.b16 %v136
  %v247 = vunpack.c.l.b16 %v137
  %v248 = vunpack.c.h.b16 %v137
  %v249 = vunpack.c.l.b16 %v138
  %v250 = vunpack.c.h.b16 %v138
  %v251 = vunpack.c.l.b16 %v139
  %v252 = vunpack.c.h.b16 %v139
  %v253 = vunpack.c.l.b16 %v140
  %v254 = vunpack.c.h.b16 %v140
  %v255 = vunpack.c.l.b16 %v141
  %v256 = vunpack.c.h.b16 %v141
  %v257 = vunpack.c.l.b16 %v142
  %v258 = vunpack.c.h.b16 %v142
  %v259 = vunpack.c.l.b16 %v143
  %v260 = vunpack.c.h.b16 %v143
  %v261 = vunpack.c.l.b16 %v144
  %v262 = vunpack.c.h.b16 %v144
  %v263 = vunpack.c.l.b16 %v145
  %v264 = vunpack.c.h.b16 %v145
  %v265 = vunpack.c.l.b16 %v146
  %v266 = vunpack.c.h.b16 %v146
  %v267 = vunpack.c.l.b16 %v147
  %v268 = vunpack.c.h.b16 %v147
  %v269 = vunpack.c.l.b16 %v148
  %v270 = vunpack.c.h.b16 %v148
  %v271 = vunpack.c.l.b16 %v149
  %v272 = vunpack.c.h.b16 %v149
  %v273 = vunpack.c.l.b16 %v150
  %v274 = vunpack.c.h.b16 %v150
  %v275 = vunpack.c.l.b16 %v151
  %v276 = vunpack.c.h.b16 %v151
  %v277 = vunpack.c.l.b16 %v152
  %v278 = vunpack.c.h.b16 %v152
  %v279 = vunpack.c.l.b16 %v153
  %v280 = vunpack.c.h.b16 %v153
  %v281 = vunpack.c.l.b16 %v154
  %v282 = vunpack.c.h.b16 %v154
  %v283 = vunpack.c.l.b16 %v155
  %v284 = vunpack.c.h.b16 %v155
  %v285 = vunpack.c.l.b16 %v156
  %v286 = vunpack.c.h.b16 %v156
  %v287 = vunpack.c.l.b16 %v157
  %v288 = vunpack.c.h.b16 %v157
  %v289 = vunpack.c.l.b16 %v158
  %v290 = vunpack.c.h.b16 %v158
  %v291 = vpack.c.b16 %v231, %v227
  %v292 = vpack.c.b16 %v232, %v228
  %v293 = vpack.c.b16 %v233, %v229
  %v294 = vpack.c.b16 %v234, %v230
  %v295 = vpack.c.b16 %v239, %v235
  %v296 = vpack.c.b16 %v240, %v236
  %v297 = vpack.c.b16 %v241, %v237
  %v298 = vpack.c.b16 %v242, %v238
  %v299 = vpack.c.b16 %v247, %v243
  %v300 = vpack.c.b16 %v248, %v244
  %v301 = vpack.c.b16 %v249, %v245
  %v302 = vpack.c.b16 %v250, %v246
  %v303 = vpack.c.b16 %v255, %v251
  %v304 = vpack.c.b16 %v256, %v252
  %v305 = vpack.c.b16 %v257, %v253
  %v306 = vpack.c.b16 %v258, %v254
  %v307 = vpack.c.b16 %v263, %v259
  %v308 = vpack.c.b16 %v264, %v260
  %v309 = vpack.c.b16 %v265, %v261
  %v310 = vpack.c.b16 %v266, %v262
  %v311 = vpack.c.b16 %v271, %v267
  %v312 = vpack.c.b16 %v272, %v268
  %v313 = vpack.c.b16 %v273, %v269
  %v314 = vpack.c.b16 %v274, %v270
  %v315 = vpack.c.b16 %v279, %v275
  %v316 = vpack.c.b16 %v280, %v276
  %v317 = vpack.c.b16 %v281, %v277
  %v318 = vpack.c.b16 %v282, %v278
  %v319 = vpack.c.b16 %v287, %v283
  %v320 = vpack.c.b16 %v288, %v284
  %v321 = vpack.c.b16 %v289, %v285
  %v322 = vpack.c.b16 %v290, %v286
  %355 = vmatprep.subr.bf16.mxu0 %v292
  %356 = vmatpush1.bf16.msra.mxu0 %v291
  %357 = vmatprep.subr.bf16.mxu0 %v296
  %358 = vmatpush1.bf16.msra.mxu0 %v295
  %359 = vmatprep.subr.bf16.mxu0 %v300
  %360 = vmatpush1.bf16.msra.mxu0 %v299
  %361 = vmatprep.subr.bf16.mxu0 %v304
  %362 = vmatpush1.bf16.msra.mxu0 %v303
  %363 = vmatprep.subr.bf16.mxu0 %v308
  %364 = vmatpush1.bf16.msra.mxu0 %v307
  %365 = vmatprep.subr.bf16.mxu0 %v312
  %366 = vmatpush1.bf16.msra.mxu0 %v311
  %367 = vmatprep.subr.bf16.mxu0 %v316
  %368 = vmatpush1.bf16.msra.mxu0 %v315
  %369 = vmatprep.subr.bf16.mxu0 %v320
  %370 = vmatpush1.bf16.msra.mxu0 %v319
  %371 = vmatprep.subr.bf16.mxu0 0
  %372 = vmatpush1.bf16.msra.mxu0 0
  %373 = vmatprep.subr.bf16.mxu0 0
  %374 = vmatpush1.bf16.msra.mxu0 0
  %375 = vmatprep.subr.bf16.mxu0 0
  %376 = vmatpush1.bf16.msra.mxu0 0
  %377 = vmatprep.subr.bf16.mxu0 0
  %378 = vmatpush1.bf16.msra.mxu0 0
  %379 = vmatprep.subr.bf16.mxu0 0
  %380 = vmatpush1.bf16.msra.mxu0 0
  %381 = vmatprep.subr.bf16.mxu0 0
  %382 = vmatpush1.bf16.msra.mxu0 0
  %383 = vmatprep.subr.bf16.mxu0 0
  %384 = vmatpush1.bf16.msra.mxu0 0
  %385 = vmatprep.subr.bf16.mxu0 0
  %386 = vmatpush1.bf16.msra.mxu0 0
  %387 = vmatprep.mubr.bf16.mxu0 0
  %388 = vmatmul.mubr.bf16.gmra.mrb[0].mxu0 %v183
  %v389 = vpop.f32.mrb[0].mxu0
  %v390 = vadd.f32 0.0, %v389
  %v391 = vpop.f32.mrb[0].mxu0
  %v392 = vadd.f32 0.0, %v391
  %v393 = vpop.f32.mrb[0].mxu0
  %v394 = vadd.f32 0.0, %v393
  %v395 = vpop.f32.mrb[0].mxu0
  %v396 = vadd.f32 0.0, %v395
  %397 = vmatprep.mubr.bf16.mxu0 0
  %398 = vmatmul.mubr.bf16.gmra.mrb[0].mxu0 %v184
  %v399 = vpop.f32.mrb[0].mxu0
  %v400 = vadd.f32 0.0, %v399
  %v401 = vpop.f32.mrb[0].mxu0
  %v402 = vadd.f32 0.0, %v401
  %v403 = vpop.f32.mrb[0].mxu0
  %v404 = vadd.f32 0.0, %v403
  %v405 = vpop.f32.mrb[0].mxu0
  %v406 = vadd.f32 0.0, %v405
  %407 = vmatprep.mubr.bf16.mxu0 0
  %408 = vmatmul.mubr.bf16.gmra.mrb[0].mxu0 %v185
  %v409 = vpop.f32.mrb[0].mxu0
  %v410 = vadd.f32 0.0, %v409
  %v411 = vpop.f32.mrb[0].mxu0
  %v412 = vadd.f32 0.0, %v411
  %v413 = vpop.f32.mrb[0].mxu0
  %v414 = vadd.f32 0.0, %v413
  %v415 = vpop.f32.mrb[0].mxu0
  %v416 = vadd.f32 0.0, %v415
  %417 = vmatprep.mubr.bf16.mxu0 0
  %418 = vmatmul.mubr.bf16.gmra.mrb[0].mxu0 %v186
  %v419 = vpop.f32.mrb[0].mxu0
  %v420 = vadd.f32 0.0, %v419
  %v421 = vpop.f32.mrb[0].mxu0
  %v422 = vadd.f32 0.0, %v421
  %v423 = vpop.f32.mrb[0].mxu0
  %v424 = vadd.f32 0.0, %v423
  %v425 = vpop.f32.mrb[0].mxu0
  %v426 = vadd.f32 0.0, %v425
  %427 = vmatprep.mubr.bf16.mxu0 0
  %428 = vmatmul.mubr.bf16.gmra.mrb[0].mxu0 %v187
  %v429 = vpop.f32.mrb[0].mxu0
  %v430 = vadd.f32 0.0, %v429
  %v431 = vpop.f32.mrb[0].mxu0
  %v432 = vadd.f32 0.0, %v431
  %v433 = vpop.f32.mrb[0].mxu0
  %v434 = vadd.f32 0.0, %v433
  %v435 = vpop.f32.mrb[0].mxu0
  %v436 = vadd.f32 0.0, %v435
  %437 = vmatprep.mubr.bf16.mxu0 0
  %438 = vmatmul.mubr.bf16.gmra.mrb[0].mxu0 %v188
  %v439 = vpop.f32.mrb[0].mxu0
  %v440 = vadd.f32 0.0, %v439
  %v441 = vpop.f32.mrb[0].mxu0
  %v442 = vadd.f32 0.0, %v441
  %v443 = vpop.f32.mrb[0].mxu0
  %v444 = vadd.f32 0.0, %v443
  %v445 = vpop.f32.mrb[0].mxu0
  %v446 = vadd.f32 0.0, %v445
  %447 = vdwg.mxu0
  %448 = vmatprep.subr.bf16.mxu0 %v294
  %449 = vmatpush1.bf16.msra.mxu0 %v293
  %450 = vmatprep.subr.bf16.mxu0 %v298
  %451 = vmatpush1.bf16.msra.mxu0 %v297
  %452 = vmatprep.subr.bf16.mxu0 %v302
  %453 = vmatpush1.bf16.msra.mxu0 %v301
  %454 = vmatprep.subr.bf16.mxu0 %v306
  %455 = vmatpush1.bf16.msra.mxu0 %v305
  %456 = vmatprep.subr.bf16.mxu0 %v310
  %457 = vmatpush1.bf16.msra.mxu0 %v309
  %458 = vmatprep.subr.bf16.mxu0 %v314
  %459 = vmatpush1.bf16.msra.mxu0 %v313
  %460 = vmatprep.subr.bf16.mxu0 %v318
  %461 = vmatpush1.bf16.msra.mxu0 %v317
  %462 = vmatprep.subr.bf16.mxu0 %v322
  %463 = vmatpush1.bf16.msra.mxu0 %v321
  %464 = vmatprep.subr.bf16.mxu0 0
  %465 = vmatpush1.bf16.msra.mxu0 0
  %466 = vmatprep.subr.bf16.mxu0 0
  %467 = vmatpush1.bf16.msra.mxu0 0
  %468 = vmatprep.subr.bf16.mxu0 0
  %469 = vmatpush1.bf16.msra.mxu0 0
  %470 = vmatprep.subr.bf16.mxu0 0
  %471 = vmatpush1.bf16.msra.mxu0 0
  %472 = vmatprep.subr.bf16.mxu0 0
  %473 = vmatpush1.bf16.msra.mxu0 0
  %474 = vmatprep.subr.bf16.mxu0 0
  %475 = vmatpush1.bf16.msra.mxu0 0
  %476 = vmatprep.subr.bf16.mxu0 0
  %477 = vmatpush1.bf16.msra.mxu0 0
  %478 = vmatprep.subr.bf16.mxu0 0
  %479 = vmatpush1.bf16.msra.mxu0 0
  %480 = vmatprep.mubr.bf16.mxu0 0
  %481 = vmatmul.mubr.bf16.gmra.mrb[0].mxu0 %v183
  %v482 = vpop.f32.mrb[0].mxu0
  %v483 = vadd.f32 0.0, %v482
  %v484 = vpop.f32.mrb[0].mxu0
  %v485 = vadd.f32 0.0, %v484
  %v486 = vpop.f32.mrb[0].mxu0
  %v487 = vadd.f32 0.0, %v486
  %v488 = vpop.f32.mrb[0].mxu0
  %v489 = vadd.f32 0.0, %v488
  %490 = vmatprep.mubr.bf16.mxu0 0
  %491 = vmatmul.mubr.bf16.gmra.mrb[0].mxu0 %v184
  %v492 = vpop.f32.mrb[0].mxu0
  %v493 = vadd.f32 0.0, %v492
  %v494 = vpop.f32.mrb[0].mxu0
  %v495 = vadd.f32 0.0, %v494
  %v496 = vpop.f32.mrb[0].mxu0
  %v497 = vadd.f32 0.0, %v496
  %v498 = vpop.f32.mrb[0].mxu0
  %v499 = vadd.f32 0.0, %v498
  %500 = vmatprep.mubr.bf16.mxu0 0
  %501 = vmatmul.mubr.bf16.gmra.mrb[0].mxu0 %v185
  %v502 = vpop.f32.mrb[0].mxu0
  %v503 = vadd.f32 0.0, %v502
  %v504 = vpop.f32.mrb[0].mxu0
  %v505 = vadd.f32 0.0, %v504
  %v506 = vpop.f32.mrb[0].mxu0
  %v507 = vadd.f32 0.0, %v506
  %v508 = vpop.f32.mrb[0].mxu0
  %v509 = vadd.f32 0.0, %v508
  %510 = vmatprep.mubr.bf16.mxu0 0
  %511 = vmatmul.mubr.bf16.gmra.mrb[0].mxu0 %v186
  %v512 = vpop.f32.mrb[0].mxu0
  %v513 = vadd.f32 0.0, %v512
  %v514 = vpop.f32.mrb[0].mxu0
  %v515 = vadd.f32 0.0, %v514
  %v516 = vpop.f32.mrb[0].mxu0
  %v517 = vadd.f32 0.0, %v516
  %v518 = vpop.f32.mrb[0].mxu0
  %v519 = vadd.f32 0.0, %v518
  %520 = vmatprep.mubr.bf16.mxu0 0
  %521 = vmatmul.mubr.bf16.gmra.mrb[0].mxu0 %v187
  %v522 = vpop.f32.mrb[0].mxu0
  %v523 = vadd.f32 0.0, %v522
  %v524 = vpop.f32.mrb[0].mxu0
  %v525 = vadd.f32 0.0, %v524
  %v526 = vpop.f32.mrb[0].mxu0
  %v527 = vadd.f32 0.0, %v526
  %v528 = vpop.f32.mrb[0].mxu0
  %v529 = vadd.f32 0.0, %v528
  %530 = vmatprep.mubr.bf16.mxu0 0
  %531 = vmatmul.mubr.bf16.gmra.mrb[0].mxu0 %v188
  %v532 = vpop.f32.mrb[0].mxu0
  %v533 = vadd.f32 0.0, %v532
  %v534 = vpop.f32.mrb[0].mxu0
  %v535 = vadd.f32 0.0, %v534
  %v536 = vpop.f32.mrb[0].mxu0
  %v537 = vadd.f32 0.0, %v536
  %v538 = vpop.f32.mrb[0].mxu0
  %v539 = vadd.f32 0.0, %v538
  %540 = vdwg.mxu0
  %v541 = vadd.f32 %v67, %v390
  %v542 = vadd.f32 %v68, %v392
  %v543 = vadd.f32 %v69, %v483
  %v544 = vadd.f32 %v70, %v485
  %v545 = vadd.f32 %v71, %v394
  %v546 = vadd.f32 %v72, %v396
  %v547 = vadd.f32 %v73, %v487
  %v548 = vadd.f32 %v74, %v489
  %v549 = vadd.f32 %v75, %v400
  %v550 = vadd.f32 %v76, %v402
  %v551 = vadd.f32 %v77, %v493
  %v552 = vadd.f32 %v78, %v495
  %v553 = vadd.f32 %v79, %v404
  %v554 = vadd.f32 %v80, %v406
  %v555 = vadd.f32 %v81, %v497
  %v556 = vadd.f32 %v82, %v499
  %v557 = vadd.f32 %v83, %v410
  %v558 = vadd.f32 %v84, %v412
  %v559 = vadd.f32 %v85, %v503
  %v560 = vadd.f32 %v86, %v505
  %v561 = vadd.f32 %v87, %v414
  %v562 = vadd.f32 %v88, %v416
  %v563 = vadd.f32 %v89, %v507
  %v564 = vadd.f32 %v90, %v509
  %v565 = vadd.f32 %v91, %v420
  %v566 = vadd.f32 %v92, %v422
  %v567 = vadd.f32 %v93, %v513
  %v568 = vadd.f32 %v94, %v515
  %v569 = vadd.f32 %v95, %v424
  %v570 = vadd.f32 %v96, %v426
  %v571 = vadd.f32 %v97, %v517
  %v572 = vadd.f32 %v98, %v519
  %v573 = vadd.f32 %v99, %v430
  %v574 = vadd.f32 %v100, %v432
  %v575 = vadd.f32 %v101, %v523
  %v576 = vadd.f32 %v102, %v525
  %v577 = vadd.f32 %v103, %v434
  %v578 = vadd.f32 %v104, %v436
  %v579 = vadd.f32 %v105, %v527
  %v580 = vadd.f32 %v106, %v529
  %v581 = vadd.f32 %v107, %v440
  %v582 = vadd.f32 %v108, %v442
  %v583 = vadd.f32 %v109, %v533
  %v584 = vadd.f32 %v110, %v535
  %v585 = vadd.f32 %v111, %v444
  %v586 = vadd.f32 %v112, %v446
  %v587 = vadd.f32 %v113, %v537
  %v588 = vadd.f32 %v114, %v539
  %589 = vst [vmem:[#allocation2] sm:$0xff] %v541
  %590 = vst [vmem:[#allocation2 + $0x8] sm:$0xff] %v542
  %591 = vst [vmem:[#allocation2 + $0x10] sm:$0xff] %v543
  %592 = vst [vmem:[#allocation2 + $0x18] sm:$0xff] %v544
  %593 = vst [vmem:[#allocation2 + $0x20] sm:$0xff] %v545
  %594 = vst [vmem:[#allocation2 + $0x28] sm:$0xff] %v546
  %595 = vst [vmem:[#allocation2 + $0x30] sm:$0xff] %v547
  %596 = vst [vmem:[#allocation2 + $0x38] sm:$0xff] %v548
  %597 = vst [vmem:[#allocation2 + $0x40] sm:$0xff] %v549
  %598 = vst [vmem:[#allocation2 + $0x48] sm:$0xff] %v550
  %599 = vst [vmem:[#allocation2 + $0x50] sm:$0xff] %v551
  %600 = vst [vmem:[#allocation2 + $0x58] sm:$0xff] %v552
  %601 = vst [vmem:[#allocation2 + $0x60] sm:$0xff] %v553
  %602 = vst [vmem:[#allocation2 + $0x68] sm:$0xff] %v554
  %603 = vst [vmem:[#allocation2 + $0x70] sm:$0xff] %v555
  %604 = vst [vmem:[#allocation2 + $0x78] sm:$0xff] %v556
  %605 = vst [vmem:[#allocation2 + $0x80] sm:$0xff] %v557
  %606 = vst [vmem:[#allocation2 + $0x88] sm:$0xff] %v558
  %607 = vst [vmem:[#allocation2 + $0x90] sm:$0xff] %v559
  %608 = vst [vmem:[#allocation2 + $0x98] sm:$0xff] %v560
  %609 = vst [vmem:[#allocation2 + $0xa0] sm:$0xff] %v561
  %610 = vst [vmem:[#allocation2 + $0xa8] sm:$0xff] %v562
  %611 = vst [vmem:[#allocation2 + $0xb0] sm:$0xff] %v563
  %612 = vst [vmem:[#allocation2 + $0xb8] sm:$0xff] %v564
  %613 = vst [vmem:[#allocation2 + $0xc0] sm:$0xff] %v565
  %614 = vst [vmem:[#allocation2 + $0xc8] sm:$0xff] %v566
  %615 = vst [vmem:[#allocation2 + $0xd0] sm:$0xff] %v567
  %616 = vst [vmem:[#allocation2 + $0xd8] sm:$0xff] %v568
  %617 = vst [vmem:[#allocation2 + $0xe0] sm:$0xff] %v569
  %618 = vst [vmem:[#allocation2 + $0xe8] sm:$0xff] %v570
  %619 = vst [vmem:[#allocation2 + $0xf0] sm:$0xff] %v571
  %620 = vst [vmem:[#allocation2 + $0xf8] sm:$0xff] %v572
  %621 = vst [vmem:[#allocation2 + $0x100] sm:$0xff] %v573
  %622 = vst [vmem:[#allocation2 + $0x108] sm:$0xff] %v574
  %623 = vst [vmem:[#allocation2 + $0x110] sm:$0xff] %v575
  %624 = vst [vmem:[#allocation2 + $0x118] sm:$0xff] %v576
  %625 = vst [vmem:[#allocation2 + $0x120] sm:$0xff] %v577
  %626 = vst [vmem:[#allocation2 + $0x128] sm:$0xff] %v578
  %627 = vst [vmem:[#allocation2 + $0x130] sm:$0xff] %v579
  %628 = vst [vmem:[#allocation2 + $0x138] sm:$0xff] %v580
  %629 = vst [vmem:[#allocation2 + $0x140] sm:$0xff] %v581
  %630 = vst [vmem:[#allocation2 + $0x148] sm:$0xff] %v582
  %631 = vst [vmem:[#allocation2 + $0x150] sm:$0xff] %v583
  %632 = vst [vmem:[#allocation2 + $0x158] sm:$0xff] %v584
  %633 = vst [vmem:[#allocation2 + $0x160] sm:$0xff] %v585
  %634 = vst [vmem:[#allocation2 + $0x168] sm:$0xff] %v586
  %635 = vst [vmem:[#allocation2 + $0x170] sm:$0xff] %v587
  %636 = vst [vmem:[#allocation2 + $0x178] sm:$0xff] %v588
  // Predicated region
  $region18: #{cnn_to_rnn_forward.9} parent=0 // pred_check
    %p637 = pneg %p15
  $region19: #{cnn_to_rnn_forward.9} parent=0 // pred_check_branch
    %639 = sbr.rel (%p637) target = $region21
  $region20: #{cnn_to_rnn_forward.9} parent=0 // pred_region
    %v640 = vld [vmem:[#allocation2] sm:$0xff]
    %v641 = vld [vmem:[#allocation2 + $0x8] sm:$0xff]
    %v642 = vld [vmem:[#allocation2 + $0x10] sm:$0xff]
    %v643 = vld [vmem:[#allocation2 + $0x18] sm:$0xff]
    %v644 = vld [vmem:[#allocation2 + $0x20] sm:$0xff]
    %v645 = vld [vmem:[#allocation2 + $0x28] sm:$0xff]
    %v646 = vld [vmem:[#allocation2 + $0x30] sm:$0xff]
    %v647 = vld [vmem:[#allocation2 + $0x38] sm:$0xff]
    %v648 = vld [vmem:[#allocation2 + $0x40] sm:$0xff]
    %v649 = vld [vmem:[#allocation2 + $0x48] sm:$0xff]
    %v650 = vld [vmem:[#allocation2 + $0x50] sm:$0xff]
    %v651 = vld [vmem:[#allocation2 + $0x58] sm:$0xff]
    %v652 = vld [vmem:[#allocation2 + $0x60] sm:$0xff]
    %v653 = vld [vmem:[#allocation2 + $0x68] sm:$0xff]
    %v654 = vld [vmem:[#allocation2 + $0x70] sm:$0xff]
    %v655 = vld [vmem:[#allocation2 + $0x78] sm:$0xff]
    %v656 = vld [vmem:[#allocation2 + $0x80] sm:$0xff]
    %v657 = vld [vmem:[#allocation2 + $0x88] sm:$0xff]
    %v658 = vld [vmem:[#allocation2 + $0x90] sm:$0xff]
    %v659 = vld [vmem:[#allocation2 + $0x98] sm:$0xff]
    %v660 = vld [vmem:[#allocation2 + $0xa0] sm:$0xff]
    %v661 = vld [vmem:[#allocation2 + $0xa8] sm:$0xff]
    %v662 = vld [vmem:[#allocation2 + $0xb0] sm:$0xff]
    %v663 = vld [vmem:[#allocation2 + $0xb8] sm:$0xff]
    %v664 = vld [vmem:[#allocation2 + $0xc0] sm:$0xff]
    %v665 = vld [vmem:[#allocation2 + $0xc8] sm:$0xff]
    %v666 = vld [vmem:[#allocation2 + $0xd0] sm:$0xff]
    %v667 = vld [vmem:[#allocation2 + $0xd8] sm:$0xff]
    %v668 = vld [vmem:[#allocation2 + $0xe0] sm:$0xff]
    %v669 = vld [vmem:[#allocation2 + $0xe8] sm:$0xff]
    %v670 = vld [vmem:[#allocation2 + $0xf0] sm:$0xff]
    %v671 = vld [vmem:[#allocation2 + $0xf8] sm:$0xff]
    %v672 = vld [vmem:[#allocation2 + $0x100] sm:$0xff]
    %v673 = vld [vmem:[#allocation2 + $0x108] sm:$0xff]
    %v674 = vld [vmem:[#allocation2 + $0x110] sm:$0xff]
    %v675 = vld [vmem:[#allocation2 + $0x118] sm:$0xff]
    %v676 = vld [vmem:[#allocation2 + $0x120] sm:$0xff]
    %v677 = vld [vmem:[#allocation2 + $0x128] sm:$0xff]
    %v678 = vld [vmem:[#allocation2 + $0x130] sm:$0xff]
    %v679 = vld [vmem:[#allocation2 + $0x138] sm:$0xff]
    %v680 = vld [vmem:[#allocation2 + $0x140] sm:$0xff]
    %v681 = vld [vmem:[#allocation2 + $0x148] sm:$0xff]
    %v682 = vld [vmem:[#allocation2 + $0x150] sm:$0xff]
    %v683 = vld [vmem:[#allocation2 + $0x158] sm:$0xff]
    %v684 = vld [vmem:[#allocation2 + $0x160] sm:$0xff]
    %v685 = vld [vmem:[#allocation2 + $0x168] sm:$0xff]
    %v686 = vld [vmem:[#allocation2 + $0x170] sm:$0xff]
    %v687 = vld [vmem:[#allocation2 + $0x178] sm:$0xff]
    %v688 = vld [vmem:[%s2] sm:$0xf]
    %v690 = vlaneseq
    %v691 = vshrl.u32 %v690, 7
    %v692 = vsub.s32 0, %v691
    %v693 = vrot.slane %v688, %v692
    %v694 = vlaneseq
    %v695 = vshrl.u32 %v694, 7
    %v696 = vsub.s32 1, %v695
    %v697 = vrot.slane %v688, %v696
    %v698 = vlaneseq
    %v699 = vshrl.u32 %v698, 7
    %v700 = vsub.s32 2, %v699
    %v701 = vrot.slane %v688, %v700
    %v702 = vlaneseq
    %v703 = vshrl.u32 %v702, 7
    %v704 = vsub.s32 3, %v703
    %v705 = vrot.slane %v688, %v704
    %v710 = vadd.f32 %v640, %v693
    %v711 = vadd.f32 %v641, %v697
    %v712 = vadd.f32 %v642, %v701
    %v713 = vadd.f32 %v643, %v705
    %v714 = vadd.f32 %v644, %v693
    %v715 = vadd.f32 %v645, %v697
    %v716 = vadd.f32 %v646, %v701
    %v717 = vadd.f32 %v647, %v705
    %v718 = vadd.f32 %v648, %v693
    %v719 = vadd.f32 %v649, %v697
    %v720 = vadd.f32 %v650, %v701
    %v721 = vadd.f32 %v651, %v705
    %v722 = vadd.f32 %v652, %v693
    %v723 = vadd.f32 %v653, %v697
    %v724 = vadd.f32 %v654, %v701
    %v725 = vadd.f32 %v655, %v705
    %v726 = vadd.f32 %v656, %v693
    %v727 = vadd.f32 %v657, %v697
    %v728 = vadd.f32 %v658, %v701
    %v729 = vadd.f32 %v659, %v705
    %v730 = vadd.f32 %v660, %v693
    %v731 = vadd.f32 %v661, %v697
    %v732 = vadd.f32 %v662, %v701
    %v733 = vadd.f32 %v663, %v705
    %v734 = vadd.f32 %v664, %v693
    %v735 = vadd.f32 %v665, %v697
    %v736 = vadd.f32 %v666, %v701
    %v737 = vadd.f32 %v667, %v705
    %v738 = vadd.f32 %v668, %v693
    %v739 = vadd.f32 %v669, %v697
    %v740 = vadd.f32 %v670, %v701
    %v741 = vadd.f32 %v671, %v705
    %v742 = vadd.f32 %v672, %v693
    %v743 = vadd.f32 %v673, %v697
    %v744 = vadd.f32 %v674, %v701
    %v745 = vadd.f32 %v675, %v705
    %v746 = vadd.f32 %v676, %v693
    %v747 = vadd.f32 %v677, %v697
    %v748 = vadd.f32 %v678, %v701
    %v749 = vadd.f32 %v679, %v705
    %v750 = vadd.f32 %v680, %v693
    %v751 = vadd.f32 %v681, %v697
    %v752 = vadd.f32 %v682, %v701
    %v753 = vadd.f32 %v683, %v705
    %v754 = vadd.f32 %v684, %v693
    %v755 = vadd.f32 %v685, %v697
    %v756 = vadd.f32 %v686, %v701
    %v757 = vadd.f32 %v687, %v705
    %758 = vst [vmem:[%s3] sm:$0xff] %v710
    %759 = vst [vmem:[%s3 + $0x8] sm:$0xff] %v711
    %760 = vst [vmem:[%s3 + $0x10] sm:$0xff] %v712
    %761 = vst [vmem:[%s3 + $0x18] sm:$0xff] %v713
    %762 = vst [vmem:[%s3 + $0x20] sm:$0xff] %v714
    %763 = vst [vmem:[%s3 + $0x28] sm:$0xff] %v715
    %764 = vst [vmem:[%s3 + $0x30] sm:$0xff] %v716
    %765 = vst [vmem:[%s3 + $0x38] sm:$0xff] %v717
    %766 = vst [vmem:[%s3 + $0x40] sm:$0xff] %v718
    %767 = vst [vmem:[%s3 + $0x48] sm:$0xff] %v719
    %768 = vst [vmem:[%s3 + $0x50] sm:$0xff] %v720
    %769 = vst [vmem:[%s3 + $0x58] sm:$0xff] %v721
    %770 = vst [vmem:[%s3 + $0x60] sm:$0xff] %v722
    %771 = vst [vmem:[%s3 + $0x68] sm:$0xff] %v723
    %772 = vst [vmem:[%s3 + $0x70] sm:$0xff] %v724
    %773 = vst [vmem:[%s3 + $0x78] sm:$0xff] %v725
    %774 = vst [vmem:[%s3 + $0x80] sm:$0xff] %v726
    %775 = vst [vmem:[%s3 + $0x88] sm:$0xff] %v727
    %776 = vst [vmem:[%s3 + $0x90] sm:$0xff] %v728
    %777 = vst [vmem:[%s3 + $0x98] sm:$0xff] %v729
    %778 = vst [vmem:[%s3 + $0xa0] sm:$0xff] %v730
    %779 = vst [vmem:[%s3 + $0xa8] sm:$0xff] %v731
    %780 = vst [vmem:[%s3 + $0xb0] sm:$0xff] %v732
    %781 = vst [vmem:[%s3 + $0xb8] sm:$0xff] %v733
    %782 = vst [vmem:[%s3 + $0xc0] sm:$0xff] %v734
    %783 = vst [vmem:[%s3 + $0xc8] sm:$0xff] %v735
    %784 = vst [vmem:[%s3 + $0xd0] sm:$0xff] %v736
    %785 = vst [vmem:[%s3 + $0xd8] sm:$0xff] %v737
    %786 = vst [vmem:[%s3 + $0xe0] sm:$0xff] %v738
    %787 = vst [vmem:[%s3 + $0xe8] sm:$0xff] %v739
    %788 = vst [vmem:[%s3 + $0xf0] sm:$0xff] %v740
    %789 = vst [vmem:[%s3 + $0xf8] sm:$0xff] %v741
    %790 = vst [vmem:[%s3 + $0x100] sm:$0xff] %v742
    %791 = vst [vmem:[%s3 + $0x108] sm:$0xff] %v743
    %792 = vst [vmem:[%s3 + $0x110] sm:$0xff] %v744
    %793 = vst [vmem:[%s3 + $0x118] sm:$0xff] %v745
    %794 = vst [vmem:[%s3 + $0x120] sm:$0xff] %v746
    %795 = vst [vmem:[%s3 + $0x128] sm:$0xff] %v747
    %796 = vst [vmem:[%s3 + $0x130] sm:$0xff] %v748
    %797 = vst [vmem:[%s3 + $0x138] sm:$0xff] %v749
    %798 = vst [vmem:[%s3 + $0x140] sm:$0xff] %v750
    %799 = vst [vmem:[%s3 + $0x148] sm:$0xff] %v751
    %800 = vst [vmem:[%s3 + $0x150] sm:$0xff] %v752
    %801 = vst [vmem:[%s3 + $0x158] sm:$0xff] %v753
    %802 = vst [vmem:[%s3 + $0x160] sm:$0xff] %v754
    %803 = vst [vmem:[%s3 + $0x168] sm:$0xff] %v755
    %804 = vst [vmem:[%s3 + $0x170] sm:$0xff] %v756
    %805 = vst [vmem:[%s3 + $0x178] sm:$0xff] %v757
  $region21: #{cnn_to_rnn_forward.9} parent=0 // pred_fallthru
    _
  // Predicated region
  $region22: #{cnn_to_rnn_forward.9} parent=0 // pred_check
    _
  $region23: #{cnn_to_rnn_forward.9} parent=0 // pred_check_branch
    %807 = sbr.rel (0) target = $region25
  $region24: #{cnn_to_rnn_forward.9} parent=0 // pred_region
    _
  $region25: #{cnn_to_rnn_forward.9} parent=0 // pred_fallthru
    _
  // Predicated region
  $region26: #{cnn_to_rnn_forward.9} parent=0 // pred_check
    _
  $region27: #{cnn_to_rnn_forward.9} parent=0 // pred_check_branch
    %809 = sbr.rel (0) target = $region29
  $region28: #{cnn_to_rnn_forward.9} parent=0 // pred_region
    _
  $region29: #{cnn_to_rnn_forward.9} parent=0 // pred_fallthru
    _

// kernel: cnn_to_rnn_forward.13
$region0: #{cnn_to_rnn_forward.13}
  #allocation0 [shape = 'u32[]', space=smem, size = 0x4, offset = 0x4, fixed_abs, tag = 'smem constant byte address 0x4 - core index']
  #allocation1 [shape = 'u32[144,128]{1,0:T(1,128)}', space=vmem, size = 0x12000, scoped, tag = 'internal scratch']
  #allocation2 [shape = 'f32[96,128]{1,0:T(8,128)}', space=vmem, size = 0xc000, scoped, tag = 'scratch operand']
  %s0 = inlined_call_operand.vmem [shape: bf16[96,128], index: 0, kind: input, shape index: {}]
  %s1 = inlined_call_operand.vmem [shape: bf16[128,128], index: 1, kind: input, shape index: {}]
  %s2 = inlined_call_operand.vmem [shape: f32[1,128], index: 2, kind: input, shape index: {}]
  %s3 = inlined_call_operand.vmem [shape: f32[96,128], index: 3, kind: output, shape index: {}]
  %s4 = sld [smem:[#allocation0]]
  $region30: #{cnn_to_rnn_forward.13} parent=0
    _
  %s6 = ssub.s32 1, %s4
  %s7 = scalar_select 0, %s6, %s4
  // Predicated region
  $region2: #{cnn_to_rnn_forward.13} parent=0 // pred_check
    _
  $region3: #{cnn_to_rnn_forward.13} parent=0 // pred_check_branch
    %9 = sbr.rel (0) target = $region5
  $region4: #{cnn_to_rnn_forward.13} parent=0 // pred_region
    _
  $region5: #{cnn_to_rnn_forward.13} parent=0 // pred_fallthru
    _
  // Predicated region
  $region6: #{cnn_to_rnn_forward.13} parent=0 // pred_check
    _
  $region7: #{cnn_to_rnn_forward.13} parent=0 // pred_check_branch
    %11 = sbr.rel (0) target = $region9
  $region8: #{cnn_to_rnn_forward.13} parent=0 // pred_region
    _
  $region9: #{cnn_to_rnn_forward.13} parent=0 // pred_fallthru
    _
  // Predicated region
  $region10: #{cnn_to_rnn_forward.13} parent=0 // pred_check
    _
  $region11: #{cnn_to_rnn_forward.13} parent=0 // pred_check_branch
    %13 = sbr.rel (0) target = $region13
  $region12: #{cnn_to_rnn_forward.13} parent=0 // pred_region
    _
  $region13: #{cnn_to_rnn_forward.13} parent=0 // pred_fallthru
    _
  %p15 = scmp.eq.s32.totalorder 0, 0
  // Predicated region
  $region14: #{cnn_to_rnn_forward.13} parent=0 // pred_check
    %p16 = pneg %p15
  $region15: #{cnn_to_rnn_forward.13} parent=0 // pred_check_branch
    %18 = sbr.rel (%p16) target = $region17
  $region16: #{cnn_to_rnn_forward.13} parent=0 // pred_region
    %19 = vst [vmem:[#allocation2] sm:$0xff] 0.0
    %20 = vst [vmem:[#allocation2 + $0x8] sm:$0xff] 0.0
    %21 = vst [vmem:[#allocation2 + $0x10] sm:$0xff] 0.0
    %22 = vst [vmem:[#allocation2 + $0x18] sm:$0xff] 0.0
    %23 = vst [vmem:[#allocation2 + $0x20] sm:$0xff] 0.0
    %24 = vst [vmem:[#allocation2 + $0x28] sm:$0xff] 0.0
    %25 = vst [vmem:[#allocation2 + $0x30] sm:$0xff] 0.0
    %26 = vst [vmem:[#allocation2 + $0x38] sm:$0xff] 0.0
    %27 = vst [vmem:[#allocation2 + $0x40] sm:$0xff] 0.0
    %28 = vst [vmem:[#allocation2 + $0x48] sm:$0xff] 0.0
    %29 = vst [vmem:[#allocation2 + $0x50] sm:$0xff] 0.0
    %30 = vst [vmem:[#allocation2 + $0x58] sm:$0xff] 0.0
  $region17: #{cnn_to_rnn_forward.13} parent=0 // pred_fallthru
    _
  %v31 = vld [vmem:[#allocation2] sm:$0xff]
  %v32 = vld [vmem:[#allocation2 + $0x8] sm:$0xff]
  %v33 = vld [vmem:[#allocation2 + $0x10] sm:$0xff]
  %v34 = vld [vmem:[#allocation2 + $0x18] sm:$0xff]
  %v35 = vld [vmem:[#allocation2 + $0x20] sm:$0xff]
  %v36 = vld [vmem:[#allocation2 + $0x28] sm:$0xff]
  %v37 = vld [vmem:[#allocation2 + $0x30] sm:$0xff]
  %v38 = vld [vmem:[#allocation2 + $0x38] sm:$0xff]
  %v39 = vld [vmem:[#allocation2 + $0x40] sm:$0xff]
  %v40 = vld [vmem:[#allocation2 + $0x48] sm:$0xff]
  %v41 = vld [vmem:[#allocation2 + $0x50] sm:$0xff]
  %v42 = vld [vmem:[#allocation2 + $0x58] sm:$0xff]
  %v43 = vld [vmem:[%s0] sm:$0xf]
  %v44 = vld [vmem:[%s0 + $0x4] sm:$0xf]
  %v45 = vld [vmem:[%s0 + $0x8] sm:$0xf]
  %v46 = vld [vmem:[%s0 + $0xc] sm:$0xf]
  %v47 = vld [vmem:[%s0 + $0x10] sm:$0xf]
  %v48 = vld [vmem:[%s0 + $0x14] sm:$0xf]
  %v49 = vld [vmem:[%s0 + $0x18] sm:$0xf]
  %v50 = vld [vmem:[%s0 + $0x1c] sm:$0xf]
  %v51 = vld [vmem:[%s0 + $0x20] sm:$0xf]
  %v52 = vld [vmem:[%s0 + $0x24] sm:$0xf]
  %v53 = vld [vmem:[%s0 + $0x28] sm:$0xf]
  %v54 = vld [vmem:[%s0 + $0x2c] sm:$0xf]
  %v55 = vld [vmem:[%s1] sm:$0xf]
  %v56 = vld [vmem:[%s1 + $0x4] sm:$0xf]
  %v57 = vld [vmem:[%s1 + $0x8] sm:$0xf]
  %v58 = vld [vmem:[%s1 + $0xc] sm:$0xf]
  %v59 = vld [vmem:[%s1 + $0x10] sm:$0xf]
  %v60 = vld [vmem:[%s1 + $0x14] sm:$0xf]
  %v61 = vld [vmem:[%s1 + $0x18] sm:$0xf]
  %v62 = vld [vmem:[%s1 + $0x1c] sm:$0xf]
  %v63 = vld [vmem:[%s1 + $0x20] sm:$0xf]
  %v64 = vld [vmem:[%s1 + $0x24] sm:$0xf]
  %v65 = vld [vmem:[%s1 + $0x28] sm:$0xf]
  %v66 = vld [vmem:[%s1 + $0x2c] sm:$0xf]
  %v67 = vld [vmem:[%s1 + $0x30] sm:$0xf]
  %v68 = vld [vmem:[%s1 + $0x34] sm:$0xf]
  %v69 = vld [vmem:[%s1 + $0x38] sm:$0xf]
  %v70 = vld [vmem:[%s1 + $0x3c] sm:$0xf]
  %v83 = vunpack.c.l.b16 %v43
  %v84 = vunpack.c.l.b16 %v44
  %v85 = vunpack.c.l.b16 %v45
  %v86 = vunpack.c.l.b16 %v46
  %v87 = vunpack.c.l.b16 %v47
  %v88 = vunpack.c.l.b16 %v48
  %v89 = vunpack.c.l.b16 %v49
  %v90 = vunpack.c.l.b16 %v50
  %v91 = vunpack.c.l.b16 %v51
  %v92 = vunpack.c.l.b16 %v52
  %v93 = vunpack.c.l.b16 %v53
  %v94 = vunpack.c.l.b16 %v54
  %v95 = vpack.c.b16 %v84, %v83
  %v96 = vpack.c.b16 %v86, %v85
  %v97 = vpack.c.b16 %v88, %v87
  %v98 = vpack.c.b16 %v90, %v89
  %v99 = vpack.c.b16 %v92, %v91
  %v100 = vpack.c.b16 %v94, %v93
  %v123 = vunpack.c.l.b16 %v55
  %v124 = vunpack.c.l.b16 %v56
  %v125 = vunpack.c.l.b16 %v57
  %v126 = vunpack.c.l.b16 %v58
  %v127 = vunpack.c.l.b16 %v59
  %v128 = vunpack.c.l.b16 %v60
  %v129 = vunpack.c.l.b16 %v61
  %v130 = vunpack.c.l.b16 %v62
  %v131 = vunpack.c.l.b16 %v63
  %v132 = vunpack.c.l.b16 %v64
  %v133 = vunpack.c.l.b16 %v65
  %v134 = vunpack.c.l.b16 %v66
  %v135 = vunpack.c.l.b16 %v67
  %v136 = vunpack.c.l.b16 %v68
  %v137 = vunpack.c.l.b16 %v69
  %v138 = vunpack.c.l.b16 %v70
  %v139 = vpack.c.b16 %v124, %v123
  %v140 = vpack.c.b16 %v126, %v125
  %v141 = vpack.c.b16 %v128, %v127
  %v142 = vpack.c.b16 %v130, %v129
  %v143 = vpack.c.b16 %v132, %v131
  %v144 = vpack.c.b16 %v134, %v133
  %v145 = vpack.c.b16 %v136, %v135
  %v146 = vpack.c.b16 %v138, %v137
  %155 = vmatprep.subr.bf16.mxu0 0
  %156 = vmatpush1.bf16.msra.mxu0 %v139
  %157 = vmatprep.subr.bf16.mxu0 0
  %158 = vmatpush1.bf16.msra.mxu0 %v140
  %159 = vmatprep.subr.bf16.mxu0 0
  %160 = vmatpush1.bf16.msra.mxu0 %v141
  %161 = vmatprep.subr.bf16.mxu0 0
  %162 = vmatpush1.bf16.msra.mxu0 %v142
  %163 = vmatprep.subr.bf16.mxu0 0
  %164 = vmatpush1.bf16.msra.mxu0 %v143
  %165 = vmatprep.subr.bf16.mxu0 0
  %166 = vmatpush1.bf16.msra.mxu0 %v144
  %167 = vmatprep.subr.bf16.mxu0 0
  %168 = vmatpush1.bf16.msra.mxu0 %v145
  %169 = vmatprep.subr.bf16.mxu0 0
  %170 = vmatpush1.bf16.msra.mxu0 %v146
  %171 = vmatprep.subr.bf16.mxu0 0
  %172 = vmatpush1.bf16.msra.mxu0 0
  %173 = vmatprep.subr.bf16.mxu0 0
  %174 = vmatpush1.bf16.msra.mxu0 0
  %175 = vmatprep.subr.bf16.mxu0 0
  %176 = vmatpush1.bf16.msra.mxu0 0
  %177 = vmatprep.subr.bf16.mxu0 0
  %178 = vmatpush1.bf16.msra.mxu0 0
  %179 = vmatprep.subr.bf16.mxu0 0
  %180 = vmatpush1.bf16.msra.mxu0 0
  %181 = vmatprep.subr.bf16.mxu0 0
  %182 = vmatpush1.bf16.msra.mxu0 0
  %183 = vmatprep.subr.bf16.mxu0 0
  %184 = vmatpush1.bf16.msra.mxu0 0
  %185 = vmatprep.subr.bf16.mxu0 0
  %186 = vmatpush1.bf16.msra.mxu0 0
  %187 = vmatprep.mubr.bf16.mxu0 0
  %188 = vmatmul.mubr.bf16.gmra.mrb[0].mxu0 %v95
  %v189 = vpop.f32.mrb[0].mxu0
  %v190 = vadd.f32 0.0, %v189
  %v191 = vpop.f32.mrb[0].mxu0
  %v192 = vpop.f32.mrb[0].mxu0
  %v193 = vadd.f32 0.0, %v192
  %v194 = vpop.f32.mrb[0].mxu0
  %195 = vmatprep.mubr.bf16.mxu0 0
  %196 = vmatmul.mubr.bf16.gmra.mrb[0].mxu0 %v96
  %v197 = vpop.f32.mrb[0].mxu0
  %v198 = vadd.f32 0.0, %v197
  %v199 = vpop.f32.mrb[0].mxu0
  %v200 = vpop.f32.mrb[0].mxu0
  %v201 = vadd.f32 0.0, %v200
  %v202 = vpop.f32.mrb[0].mxu0
  %203 = vmatprep.mubr.bf16.mxu0 0
  %204 = vmatmul.mubr.bf16.gmra.mrb[0].mxu0 %v97
  %v205 = vpop.f32.mrb[0].mxu0
  %v206 = vadd.f32 0.0, %v205
  %v207 = vpop.f32.mrb[0].mxu0
  %v208 = vpop.f32.mrb[0].mxu0
  %v209 = vadd.f32 0.0, %v208
  %v210 = vpop.f32.mrb[0].mxu0
  %211 = vmatprep.mubr.bf16.mxu0 0
  %212 = vmatmul.mubr.bf16.gmra.mrb[0].mxu0 %v98
  %v213 = vpop.f32.mrb[0].mxu0
  %v214 = vadd.f32 0.0, %v213
  %v215 = vpop.f32.mrb[0].mxu0
  %v216 = vpop.f32.mrb[0].mxu0
  %v217 = vadd.f32 0.0, %v216
  %v218 = vpop.f32.mrb[0].mxu0
  %219 = vmatprep.mubr.bf16.mxu0 0
  %220 = vmatmul.mubr.bf16.gmra.mrb[0].mxu0 %v99
  %v221 = vpop.f32.mrb[0].mxu0
  %v222 = vadd.f32 0.0, %v221
  %v223 = vpop.f32.mrb[0].mxu0
  %v224 = vpop.f32.mrb[0].mxu0
  %v225 = vadd.f32 0.0, %v224
  %v226 = vpop.f32.mrb[0].mxu0
  %227 = vmatprep.mubr.bf16.mxu0 0
  %228 = vmatmul.mubr.bf16.gmra.mrb[0].mxu0 %v100
  %v229 = vpop.f32.mrb[0].mxu0
  %v230 = vadd.f32 0.0, %v229
  %v231 = vpop.f32.mrb[0].mxu0
  %v232 = vpop.f32.mrb[0].mxu0
  %v233 = vadd.f32 0.0, %v232
  %v234 = vpop.f32.mrb[0].mxu0
  %235 = vdwg.mxu0
  %v236 = vadd.f32 %v31, %v190
  %v237 = vadd.f32 %v32, %v193
  %v238 = vadd.f32 %v33, %v198
  %v239 = vadd.f32 %v34, %v201
  %v240 = vadd.f32 %v35, %v206
  %v241 = vadd.f32 %v36, %v209
  %v242 = vadd.f32 %v37, %v214
  %v243 = vadd.f32 %v38, %v217
  %v244 = vadd.f32 %v39, %v222
  %v245 = vadd.f32 %v40, %v225
  %v246 = vadd.f32 %v41, %v230
  %v247 = vadd.f32 %v42, %v233
  %248 = vst [vmem:[#allocation2] sm:$0xff] %v236
  %249 = vst [vmem:[#allocation2 + $0x8] sm:$0xff] %v237
  %250 = vst [vmem:[#allocation2 + $0x10] sm:$0xff] %v238
  %251 = vst [vmem:[#allocation2 + $0x18] sm:$0xff] %v239
  %252 = vst [vmem:[#allocation2 + $0x20] sm:$0xff] %v240
  %253 = vst [vmem:[#allocation2 + $0x28] sm:$0xff] %v241
  %254 = vst [vmem:[#allocation2 + $0x30] sm:$0xff] %v242
  %255 = vst [vmem:[#allocation2 + $0x38] sm:$0xff] %v243
  %256 = vst [vmem:[#allocation2 + $0x40] sm:$0xff] %v244
  %257 = vst [vmem:[#allocation2 + $0x48] sm:$0xff] %v245
  %258 = vst [vmem:[#allocation2 + $0x50] sm:$0xff] %v246
  %259 = vst [vmem:[#allocation2 + $0x58] sm:$0xff] %v247
  // Predicated region
  $region18: #{cnn_to_rnn_forward.13} parent=0 // pred_check
    %p260 = pneg %p15
  $region19: #{cnn_to_rnn_forward.13} parent=0 // pred_check_branch
    %262 = sbr.rel (%p260) target = $region21
  $region20: #{cnn_to_rnn_forward.13} parent=0 // pred_region
    %v263 = vld [vmem:[#allocation2] sm:$0xff]
    %v264 = vld [vmem:[#allocation2 + $0x8] sm:$0xff]
    %v265 = vld [vmem:[#allocation2 + $0x10] sm:$0xff]
    %v266 = vld [vmem:[#allocation2 + $0x18] sm:$0xff]
    %v267 = vld [vmem:[#allocation2 + $0x20] sm:$0xff]
    %v268 = vld [vmem:[#allocation2 + $0x28] sm:$0xff]
    %v269 = vld [vmem:[#allocation2 + $0x30] sm:$0xff]
    %v270 = vld [vmem:[#allocation2 + $0x38] sm:$0xff]
    %v271 = vld [vmem:[#allocation2 + $0x40] sm:$0xff]
    %v272 = vld [vmem:[#allocation2 + $0x48] sm:$0xff]
    %v273 = vld [vmem:[#allocation2 + $0x50] sm:$0xff]
    %v274 = vld [vmem:[#allocation2 + $0x58] sm:$0xff]
    %v275 = vld [vmem:[%s2] sm:$0x1]
    %v277 = vlaneseq
    %v278 = vshrl.u32 %v277, 7
    %v279 = vsub.s32 0, %v278
    %v280 = vrot.slane %v275, %v279
    %v282 = vadd.f32 %v263, %v280
    %v283 = vadd.f32 %v264, %v280
    %v284 = vadd.f32 %v265, %v280
    %v285 = vadd.f32 %v266, %v280
    %v286 = vadd.f32 %v267, %v280
    %v287 = vadd.f32 %v268, %v280
    %v288 = vadd.f32 %v269, %v280
    %v289 = vadd.f32 %v270, %v280
    %v290 = vadd.f32 %v271, %v280
    %v291 = vadd.f32 %v272, %v280
    %v292 = vadd.f32 %v273, %v280
    %v293 = vadd.f32 %v274, %v280
    %294 = vst [vmem:[%s3] sm:$0xff] %v282
    %295 = vst [vmem:[%s3 + $0x8] sm:$0xff] %v283
    %296 = vst [vmem:[%s3 + $0x10] sm:$0xff] %v284
    %297 = vst [vmem:[%s3 + $0x18] sm:$0xff] %v285
    %298 = vst [vmem:[%s3 + $0x20] sm:$0xff] %v286
    %299 = vst [vmem:[%s3 + $0x28] sm:$0xff] %v287
    %300 = vst [vmem:[%s3 + $0x30] sm:$0xff] %v288
    %301 = vst [vmem:[%s3 + $0x38] sm:$0xff] %v289
    %302 = vst [vmem:[%s3 + $0x40] sm:$0xff] %v290
    %303 = vst [vmem:[%s3 + $0x48] sm:$0xff] %v291
    %304 = vst [vmem:[%s3 + $0x50] sm:$0xff] %v292
    %305 = vst [vmem:[%s3 + $0x58] sm:$0xff] %v293
  $region21: #{cnn_to_rnn_forward.13} parent=0 // pred_fallthru
    _
  // Predicated region
  $region22: #{cnn_to_rnn_forward.13} parent=0 // pred_check
    _
  $region23: #{cnn_to_rnn_forward.13} parent=0 // pred_check_branch
    %307 = sbr.rel (0) target = $region25
  $region24: #{cnn_to_rnn_forward.13} parent=0 // pred_region
    _
  $region25: #{cnn_to_rnn_forward.13} parent=0 // pred_fallthru
    _
  // Predicated region
  $region26: #{cnn_to_rnn_forward.13} parent=0 // pred_check
    _
  $region27: #{cnn_to_rnn_forward.13} parent=0 // pred_check_branch
    %309 = sbr.rel (0) target = $region29
  $region28: #{cnn_to_rnn_forward.13} parent=0 // pred_region
    _
  $region29: #{cnn_to_rnn_forward.13} parent=0 // pred_fallthru
    _

</llo_original>
